<compile_context>
chip_gen: v7x
topology: tpu7x:2x2x1
jax: 0.10.0
libtpu: 0.0.40
codegen_flags: <defaults>
</compile_context>

<pallas_src>
import functools
import math

import jax
import jax.numpy as jnp
from jax.experimental import pallas as pl
from jax.experimental.pallas import tpu as pltpu

PAD_ID = 0
NEG_INF = -1e9
LN_EPS = 1e-5
# Safe scoped-VMEM cap on every listed generation (v5e default is only 16 MiB).
VMEM_LIMIT = 32 * 1024 * 1024


def _round_up(x, m):
    return (x + m - 1) // m * m


def _to_bf16(x):
    return x if x.dtype == jnp.bfloat16 else x.astype(jnp.bfloat16)


# -----------------------------------------------------------------------------
# Tiled, pipelined linear:  y = act(x @ w + b)   (bf16 operands, f32 accumulate)
# -----------------------------------------------------------------------------
def _linear_kernel(x_ref, w_ref, b_ref, o_ref, acc_ref, *, activation):
    @pl.when(pl.program_id(2) == 0)
    def _():
        acc_ref[...] = jnp.zeros_like(acc_ref)

    acc_ref[...] += jnp.dot(x_ref[...], w_ref[...],
                            preferred_element_type=jnp.float32)

    @pl.when(pl.program_id(2) == pl.num_programs(2) - 1)
    def _():
        y = acc_ref[...] + b_ref[...].astype(jnp.float32)
        if activation == "relu":
            y = jnp.maximum(y, 0.0)
        o_ref[...] = y.astype(o_ref.dtype)


def linear(x2d, w, b, activation=None, out_dtype=jnp.bfloat16,
           tm=512, tn=512, tk=512):
    """(M,K) @ (K,N) + (N,) -> (M,N)."""
    M, K = x2d.shape
    N = w.shape[1]
    x2d = _to_bf16(x2d)
    w = _to_bf16(w)                        # no-op: weights pre-cast at init
    b2d = b.astype(jnp.float32).reshape(1, N)

    # Full extent when small (full-dim exemption), otherwise 8/128-aligned
    # tiles.  Model dims are chosen / pre-padded at init so the pads below do
    # not trigger for weights in steady state.
    tm_ = M if M <= tm else tm
    tk_ = K if K <= tk else tk
    tn_ = N if N <= tn else tn
    Mp, Kp, Np = _round_up(M, tm_), _round_up(K, tk_), _round_up(N, tn_)
    if (Mp, Kp) != (M, K):
        x2d = jnp.pad(x2d, ((0, Mp - M), (0, Kp - K)))
    if (Kp, Np) != (K, N):
        w = jnp.pad(w, ((0, Kp - K), (0, Np - N)))
    if Np != N:
        b2d = jnp.pad(b2d, ((0, 0), (0, Np - N)))

    out = pl.pallas_call(
        functools.partial(_linear_kernel, activation=activation),
        out_shape=jax.ShapeDtypeStruct((Mp, Np), out_dtype),
        grid=(Mp // tm_, Np // tn_, Kp // tk_),
        in_specs=[
            pl.BlockSpec((tm_, tk_), lambda i, j, k: (i, k)),
            pl.BlockSpec((tk_, tn_), lambda i, j, k: (k, j)),
            pl.BlockSpec((1, tn_), lambda i, j, k: (0, j)),
        ],
        out_specs=pl.BlockSpec((tm_, tn_), lambda i, j, k: (i, j)),
        scratch_shapes=[pltpu.VMEM((tm_, tn_), jnp.float32)],
        compiler_params=pltpu.CompilerParams(
            dimension_semantics=("parallel", "parallel", "arbitrary"),
            vmem_limit_bytes=VMEM_LIMIT),
    )(x2d, w, b2d)

    if (Mp, Np) != (M, N):
        out = out[:M, :N]
    return out


# -----------------------------------------------------------------------------
# Fused projection + residual-add + LayerNorm:  LN(res + x @ w + b)
# (N = model dim lives in a single lane tile so the full row is present at the
#  K-axis finalize; LN math is VPU/XLU filler under the matmul.)
# -----------------------------------------------------------------------------
def _linear_addln_kernel(x_ref, w_ref, b_ref, r_ref, g_ref, bt_ref,
                         o_ref, acc_ref, *, eps):
    @pl.when(pl.program_id(1) == 0)
    def _():
        acc_ref[...] = jnp.zeros_like(acc_ref)

    acc_ref[...] += jnp.dot(x_ref[...], w_ref[...],
                            preferred_element_type=jnp.float32)

    @pl.when(pl.program_id(1) == pl.num_programs(1) - 1)
    def _():
        y = (acc_ref[...] + b_ref[...].astype(jnp.float32)
             + r_ref[...].astype(jnp.float32))
        mean = jnp.mean(y, axis=-1, keepdims=True)
        var = jnp.mean((y - mean) * (y - mean), axis=-1, keepdims=True)
        yn = (y - mean) * jax.lax.rsqrt(var + eps)
        o_ref[...] = (yn * g_ref[...] + bt_ref[...]).astype(o_ref.dtype)


def linear_add_ln(x2d, w, b, res2d, gamma, beta, eps=LN_EPS,
                  out_dtype=jnp.bfloat16, tm=512, tk=512):
    M, K = x2d.shape
    N = w.shape[1]
    assert N <= 2048, "full-row LN fusion requires N in one lane tile"
    x2d = _to_bf16(x2d)
    w = _to_bf16(w)

    tm_ = M if M <= tm else tm
    tk_ = K if K <= tk else tk
    Mp, Kp = _round_up(M, tm_), _round_up(K, tk_)
    if (Mp, Kp) != (M, K):
        x2d = jnp.pad(x2d, ((0, Mp - M), (0, Kp - K)))
    if Kp != K:
        w = jnp.pad(w, ((0, Kp - K), (0, 0)))
    if Mp != M:
        res2d = jnp.pad(res2d, ((0, Mp - M), (0, 0)))

    out = pl.pallas_call(
        functools.partial(_linear_addln_kernel, eps=eps),
        out_shape=jax.ShapeDtypeStruct((Mp, N), out_dtype),
        grid=(Mp // tm_, Kp // tk_),
        in_specs=[
            pl.BlockSpec((tm_, tk_), lambda i, k: (i, k)),
            pl.BlockSpec((tk_, N), lambda i, k: (k, 0)),
            pl.BlockSpec((1, N), lambda i, k: (0, 0)),
            pl.BlockSpec((tm_, N), lambda i, k: (i, 0)),
            pl.BlockSpec((1, N), lambda i, k: (0, 0)),
            pl.BlockSpec((1, N), lambda i, k: (0, 0)),
        ],
        out_specs=pl.BlockSpec((tm_, N), lambda i, k: (i, 0)),
        scratch_shapes=[pltpu.VMEM((tm_, N), jnp.float32)],
        compiler_params=pltpu.CompilerParams(
            dimension_semantics=("parallel", "arbitrary"),
            vmem_limit_bytes=VMEM_LIMIT),
    )(x2d, w, b.astype(jnp.float32).reshape(1, N), res2d,
      gamma.astype(jnp.float32).reshape(1, N),
      beta.astype(jnp.float32).reshape(1, N))

    return out[:M] if Mp != M else out


# -----------------------------------------------------------------------------
# Attention: 2-D (batch, head) parallel grid; each step works on one head's
# contiguous (S, dh) blocks (layout (B, H, S, dh)); mask built in-kernel.
# -----------------------------------------------------------------------------
def _mha_kernel(q_ref, k_ref, v_ref, km_ref, o_ref, *, scale, causal):
    q = q_ref[0, 0]                                 # (Sq, dh) bf16
    k = k_ref[0, 0]                                 # (Sk, dh) bf16
    v = v_ref[0, 0]                                 # (Sk, dh) bf16
    s = jax.lax.dot_general(q, k, (((1,), (1,)), ((), ())),
                            preferred_element_type=jnp.float32) * scale
    allowed = km_ref[0] > 0.0                       # (1, Sk) -> bcast over Sq
    if causal:
        row = jax.lax.broadcasted_iota(jnp.int32, s.shape, 0)
        col = jax.lax.broadcasted_iota(jnp.int32, s.shape, 1)
        allowed = allowed & (col <= row)
    s = jnp.where(allowed, s, NEG_INF)              # masked_fill(mask==0,-1e9)
    s = s - jnp.max(s, axis=-1, keepdims=True)
    p = jnp.exp(s)
    p = p * pl.reciprocal(jnp.sum(p, axis=-1, keepdims=True), approx=True)
    o_ref[0, 0] = jnp.dot(p.astype(v.dtype), v,
                          preferred_element_type=jnp.float32
                          ).astype(o_ref.dtype)


def mha_attention(q, k, v, key_mask, causal):
    """q: (B,H,Sq,dh), k/v: (B,H,Sk,dh) bf16, key_mask: (B,1,Sk) f32."""
    B, H, Sq, dh = q.shape
    Sk = k.shape[2]
    scale = 1.0 / math.sqrt(dh)
    return pl.pallas_call(
        functools.partial(_mha_kernel, scale=scale, causal=causal),
        out_shape=jax.ShapeDtypeStruct((B, H, Sq, dh), jnp.bfloat16),
        grid=(B, H),
        in_specs=[
            pl.BlockSpec((1, 1, Sq, dh), lambda b, h: (b, h, 0, 0)),
            pl.BlockSpec((1, 1, Sk, dh), lambda b, h: (b, h, 0, 0)),
            pl.BlockSpec((1, 1, Sk, dh), lambda b, h: (b, h, 0, 0)),
            pl.BlockSpec((1, 1, Sk), lambda b, h: (b, 0, 0)),
        ],
        out_specs=pl.BlockSpec((1, 1, Sq, dh), lambda b, h: (b, h, 0, 0)),
        compiler_params=pltpu.CompilerParams(
            dimension_semantics=("parallel", "parallel"),
            vmem_limit_bytes=VMEM_LIMIT),
    )(q, k, v, key_mask)


# -----------------------------------------------------------------------------
# Model glue (plain JAX: reshapes, embedding gather, parameter plumbing)
# -----------------------------------------------------------------------------
def self_mha_block(pa, pln, x, key_mask, num_heads, causal):
    """LN(x + OutProj(MHA(x)))  — out-proj fused with residual+LN."""
    B, S, D = x.shape
    dh = D // num_heads
    qkv = linear(x.reshape(B * S, D), pa["wqkv"], pa["bqkv"],
                 out_dtype=jnp.bfloat16)
    qkv = qkv.reshape(B, S, 3, num_heads, dh).transpose(2, 0, 3, 1, 4)
    o = mha_attention(qkv[0], qkv[1], qkv[2], key_mask, causal)   # (B,H,S,dh)
    o2d = o.transpose(0, 2, 1, 3).reshape(B * S, D)
    y = linear_add_ln(o2d, pa["wo"], pa["bo"], x.reshape(B * S, D),
                      pln["g"], pln["b"])
    return y.reshape(B, S, D)


def cross_mha_block(pa, pln, x_q, x_kv, key_mask, num_heads):
    B, Sq, D = x_q.shape
    Sk = x_kv.shape[1]
    dh = D // num_heads
    q = linear(x_q.reshape(B * Sq, D), pa["wq"], pa["bq"],
               out_dtype=jnp.bfloat16)
    q = q.reshape(B, Sq, num_heads, dh).transpose(0, 2, 1, 3)
    kv = linear(x_kv.reshape(B * Sk, D), pa["wkv"], pa["bkv"],
                out_dtype=jnp.bfloat16)
    kv = kv.reshape(B, Sk, 2, num_heads, dh).transpose(2, 0, 3, 1, 4)
    o = mha_attention(q, kv[0], kv[1], key_mask, causal=False)
    o2d = o.transpose(0, 2, 1, 3).reshape(B * Sq, D)
    y = linear_add_ln(o2d, pa["wo"], pa["bo"], x_q.reshape(B * Sq, D),
                      pln["g"], pln["b"])
    return y.reshape(B, Sq, D)


def ff_block(pf, pln, x):
    """LN(x + W2(relu(W1 x)))  — second matmul fused with residual+LN."""
    B, S, D = x.shape
    h = linear(x.reshape(B * S, D), pf["w1"], pf["b1"], activation="relu",
               out_dtype=jnp.bfloat16)
    y = linear_add_ln(h, pf["w2"], pf["b2"], x.reshape(B * S, D),
                      pln["g"], pln["b"])
    return y.reshape(B, S, D)


def encoder_layer(p, x, src_key_mask, num_heads):
    x = self_mha_block(p["attn"], p["ln1"], x, src_key_mask, num_heads,
                       causal=False)
    x = ff_block(p["ff"], p["ln2"], x)
    return x


def decoder_layer(p, x, enc, src_key_mask, tgt_key_mask, num_heads):
    x = self_mha_block(p["self_attn"], p["ln1"], x, tgt_key_mask, num_heads,
                       causal=True)
    x = cross_mha_block(p["cross_attn"], p["ln2"], x, enc, src_key_mask,
                        num_heads)
    x = ff_block(p["ff"], p["ln3"], x)
    return x


def make_positional_encoding(max_seq_length, context_dim):
    max_seq_length += 400
    position = jnp.arange(max_seq_length, dtype=jnp.float32)[:, None]
    div_term = jnp.exp(jnp.arange(0, context_dim, 2, dtype=jnp.float32)
                       * (-math.log(10000.0) / context_dim))
    pe = jnp.zeros((max_seq_length, context_dim), jnp.float32)
    pe = pe.at[:, 0::2].set(jnp.sin(position * div_term))
    pe = pe.at[:, 1::2].set(jnp.cos(position * div_term))
    return pe


def transformer_forward(params, source, target, num_heads, tgt_vocab):
    B, S_src = source.shape
    _, S_tgt = target.shape

    # Key masks only, shape (B, 1, S); the (Sq, Sk) masks (incl. causal) are
    # built inside the attention kernel.
    src_key_mask = (source != PAD_ID).astype(jnp.float32).reshape(B, 1, S_src)
    tgt_key_mask = (target != PAD_ID).astype(jnp.float32).reshape(B, 1, S_tgt)

    pe = params["pe"]
    src_emb = jnp.take(params["enc_emb"], source, axis=0) + pe[:S_src][None]
    tgt_emb = jnp.take(params["dec_emb"], target, axis=0) + pe[:S_tgt][None]
    # dropout: identity (eval mode)

    enc_out = src_emb
    for lp in params["encoders"]:
        enc_out = encoder_layer(lp, enc_out, src_key_mask, num_heads)

    dec_out = tgt_emb
    for lp in params["decoders"]:
        dec_out = decoder_layer(lp, dec_out, enc_out, src_key_mask,
                                tgt_key_mask, num_heads)

    D = dec_out.shape[-1]
    # fc_w is lane-padded to a 128 multiple at init -> lane-dense store;
    # slice the padding off once at the very end.
    logits = linear(dec_out.reshape(B * S_tgt, D), params["fc_w"],
                    params["fc_b"], out_dtype=jnp.float32)
    return logits.reshape(B, S_tgt, -1)[:, :, :tgt_vocab]


# -----------------------------------------------------------------------------
# Deterministic parameter init.  Weights stored pre-cast in bf16 (no per-call
# cast/pad); logits weight lane-padded to 128-multiple; biases/LN in f32.
# -----------------------------------------------------------------------------
def init_params(key, src_vocab, tgt_vocab, D, num_layers, d_ff, max_seq_length):
    def nxt():
        nonlocal key
        key, sub = jax.random.split(key)
        return sub

    def wmat(shape):
        return (jax.random.normal(nxt(), shape, jnp.float32) * 0.02
                ).astype(jnp.bfloat16)

    def zeros(n):
        return jnp.zeros((n,), jnp.float32)

    def self_attn_p():
        return {"wqkv": wmat((D, 3 * D)), "bqkv": zeros(3 * D),
                "wo": wmat((D, D)), "bo": zeros(D)}

    def cross_attn_p():
        return {"wq": wmat((D, D)), "bq": zeros(D),
                "wkv": wmat((D, 2 * D)), "bkv": zeros(2 * D),
                "wo": wmat((D, D)), "bo": zeros(D)}

    def ff_p():
        return {"w1": wmat((D, d_ff)), "b1": zeros(d_ff),
                "w2": wmat((d_ff, D)), "b2": zeros(D)}

    def ln_p():
        return {"g": jnp.ones((D,), jnp.float32), "b": zeros(D)}

    params = {
        "enc_emb": jax.random.normal(nxt(), (src_vocab, D), jnp.float32) * 0.02,
        "dec_emb": jax.random.normal(nxt(), (tgt_vocab, D), jnp.float32) * 0.02,
        "pe": make_positional_encoding(max_seq_length, D),
        "encoders": [],
        "decoders": [],
    }
    for _ in range(num_layers):
        params["encoders"].append(
            {"attn": self_attn_p(), "ff": ff_p(), "ln1": ln_p(), "ln2": ln_p()})
    for _ in range(num_layers):
        params["decoders"].append(
            {"self_attn": self_attn_p(), "cross_attn": cross_attn_p(),
             "ff": ff_p(), "ln1": ln_p(), "ln2": ln_p(), "ln3": ln_p()})

    tgt_vocab_padded = _round_up(tgt_vocab, 128)     # lane-dense logits store
    fc_w = wmat((D, tgt_vocab))
    fc_b = zeros(tgt_vocab)
    params["fc_w"] = jnp.pad(fc_w, ((0, 0), (0, tgt_vocab_padded - tgt_vocab)))
    params["fc_b"] = jnp.pad(fc_b, ((0, tgt_vocab_padded - tgt_vocab),))
    return params


# -----------------------------------------------------------------------------
if __name__ == "__main__":
    SRC_VOCAB, TGT_VOCAB = 50, 60
    D, HEADS, LAYERS, CF = 32, 4, 2, 4
    MAX_SEQ = 16
    B, S_SRC, S_TGT = 2, 8, 8
    D_FF = D * CF

    key = jax.random.PRNGKey(0)
    key, k_src, k_tgt, k_param = jax.random.split(key, 4)

    source = jax.random.randint(k_src, (B, S_SRC), 1, SRC_VOCAB, dtype=jnp.int32)
    target = jax.random.randint(k_tgt, (B, S_TGT), 1, TGT_VOCAB, dtype=jnp.int32)
    # Put a couple of pad tokens in to exercise the masks.
    source = source.at[0, -2:].set(PAD_ID)
    target = target.at[1, -1:].set(PAD_ID)

    params = init_params(k_param, SRC_VOCAB, TGT_VOCAB, D, LAYERS, D_FF, MAX_SEQ)

    fwd = jax.jit(functools.partial(transformer_forward, num_heads=HEADS,
                                    tgt_vocab=TGT_VOCAB))
    out = fwd(params, source, target)
    out = jax.block_until_ready(out)

    assert out.shape == (B, S_TGT, TGT_VOCAB), out.shape
    assert bool(jnp.all(jnp.isfinite(out.astype(jnp.float32))))
    print("KERNEL_OK")
</pallas_src>

<mosaic_0001>
module attributes {stable_mosaic.version = 11 : i64} {
  func.func @_linear_kernel(%arg0: i32, %arg1: i32, %arg2: i32, %arg3: memref<16x32xbf16, #tpu.memory_space<vmem>>, %arg4: memref<32x96xbf16, #tpu.memory_space<vmem>>, %arg5: memref<1x96xf32, #tpu.memory_space<vmem>>, %arg6: memref<16x96xbf16, #tpu.memory_space<vmem>>, %arg7: memref<16x96xf32, #tpu.memory_space<vmem>>) attributes {dimension_semantics = [#tpu.dimension_semantics<parallel>, #tpu.dimension_semantics<parallel>, #tpu.dimension_semantics<arbitrary>], iteration_bounds = array<i64: 1, 1, 1>, scalar_prefetch = 0 : i64, scratch_operands = 1 : i64, tpu.core_type = #tpu.core_type<tc>, window_params = [{transform_indices = @transform_0, window_bounds = array<i64: 16, 32>}, {transform_indices = @transform_1, window_bounds = array<i64: 32, 96>}, {transform_indices = @transform_2, window_bounds = array<i64: 1, 96>}, {transform_indices = @transform_3, window_bounds = array<i64: 16, 96>}]} {
    %c0_i32 = arith.constant 0 : i32
    %0 = arith.cmpi eq, %arg2, %c0_i32 : i32
    %1 = arith.extui %0 : i1 to i32
    %c0_i32_0 = arith.constant 0 : i32
    %2 = arith.cmpi ne, %1, %c0_i32_0 : i32
    scf.if %2 {
      %cst_10 = arith.constant 0.000000e+00 : f32
      %12 = vector.broadcast %cst_10 : f32 to vector<16x96xf32>
      %c0_11 = arith.constant 0 : index
      %c0_12 = arith.constant 0 : index
      %13 = vector.load %arg7[%c0_11, %c0_12] : memref<16x96xf32, #tpu.memory_space<vmem>>, vector<16x96xf32>
      tpu.vector_store %arg7[%c0_11, %c0_12], %12 {strides = array<i32>} : memref<16x96xf32, #tpu.memory_space<vmem>>, vector<16x96xf32>,
    } else {
    }
    %c0 = arith.constant 0 : index
    %c0_1 = arith.constant 0 : index
    %3 = vector.load %arg7[%c0, %c0_1] : memref<16x96xf32, #tpu.memory_space<vmem>>, vector<16x96xf32>
    %c0_2 = arith.constant 0 : index
    %c0_3 = arith.constant 0 : index
    %4 = vector.load %arg3[%c0_2, %c0_3] : memref<16x32xbf16, #tpu.memory_space<vmem>>, vector<16x32xbf16>
    %c0_4 = arith.constant 0 : index
    %c0_5 = arith.constant 0 : index
    %5 = vector.load %arg4[%c0_4, %c0_5] : memref<32x96xbf16, #tpu.memory_space<vmem>>, vector<32x96xbf16>
    %cst = arith.constant dense<0.000000e+00> : vector<16x96xf32>
    %6 = tpu.matmul %4, %5, %cst {dimension_numbers = #tpu.dot_dimension_numbers<[1], [0], [0], [1], [0, 0, 1, 1], [], []>} : vector<16x32xbf16>, vector<32x96xbf16>, vector<16x96xf32> -> vector<16x96xf32>
    %7 = arith.addf %3, %6 : vector<16x96xf32>
    %c0_6 = arith.constant 0 : index
    %c0_7 = arith.constant 0 : index
    %8 = vector.load %arg7[%c0_6, %c0_7] : memref<16x96xf32, #tpu.memory_space<vmem>>, vector<16x96xf32>
    tpu.vector_store %arg7[%c0_6, %c0_7], %7 {strides = array<i32>} : memref<16x96xf32, #tpu.memory_space<vmem>>, vector<16x96xf32>,
    %c0_i32_8 = arith.constant 0 : i32
    %9 = arith.cmpi eq, %arg2, %c0_i32_8 : i32
    %10 = arith.extui %9 : i1 to i32
    %c0_i32_9 = arith.constant 0 : i32
    %11 = arith.cmpi ne, %10, %c0_i32_9 : i32
    scf.if %11 {
      %c0_10 = arith.constant 0 : index
      %c0_11 = arith.constant 0 : index
      %12 = vector.load %arg7[%c0_10, %c0_11] : memref<16x96xf32, #tpu.memory_space<vmem>>, vector<16x96xf32>
      %c0_12 = arith.constant 0 : index
      %c0_13 = arith.constant 0 : index
      %13 = vector.load %arg5[%c0_12, %c0_13] : memref<1x96xf32, #tpu.memory_space<vmem>>, vector<1x96xf32>
      %14 = vector.broadcast %13 : vector<1x96xf32> to vector<16x96xf32>
      %15 = arith.addf %12, %14 : vector<16x96xf32>
      %16 = arith.truncf %15 : vector<16x96xf32> to vector<16x96xbf16>
      %c0_14 = arith.constant 0 : index
      %c0_15 = arith.constant 0 : index
      %17 = vector.load %arg6[%c0_14, %c0_15] : memref<16x96xbf16, #tpu.memory_space<vmem>>, vector<16x96xbf16>
      tpu.vector_store %arg6[%c0_14, %c0_15], %16 {strides = array<i32>} : memref<16x96xbf16, #tpu.memory_space<vmem>>, vector<16x96xbf16>,
    } else {
    }
    return
  }
  func.func @transform_0(%arg0: i32, %arg1: i32, %arg2: i32) -> (i32, i32) {
    %c0_i32 = arith.constant 0 : i32
    return %arg0, %arg2 : i32, i32
  }
  func.func @transform_1(%arg0: i32, %arg1: i32, %arg2: i32) -> (i32, i32) {
    %c0_i32 = arith.constant 0 : i32
    return %arg2, %arg1 : i32, i32
  }
  func.func @transform_2(%arg0: i32, %arg1: i32, %arg2: i32) -> (i32, i32) {
    %c0_i32 = arith.constant 0 : i32
    %c0_i32_0 = arith.constant 0 : i32
    return %c0_i32, %arg1 : i32, i32
  }
  func.func @transform_3(%arg0: i32, %arg1: i32, %arg2: i32) -> (i32, i32) {
    %c0_i32 = arith.constant 0 : i32
    return %arg0, %arg1 : i32, i32
  }
}

module attributes {stable_mosaic.version = 11 : i64} {
  func.func @_mha_kernel(%arg0: i32, %arg1: i32, %arg2: memref<1x1x8x8xbf16, #tpu.memory_space<vmem>>, %arg3: memref<1x1x8x8xbf16, #tpu.memory_space<vmem>>, %arg4: memref<1x1x8x8xbf16, #tpu.memory_space<vmem>>, %arg5: memref<1x1x8xf32, #tpu.memory_space<vmem>>, %arg6: memref<1x1x8x8xbf16, #tpu.memory_space<vmem>>) attributes {dimension_semantics = [#tpu.dimension_semantics<parallel>, #tpu.dimension_semantics<parallel>], iteration_bounds = array<i64: 2, 4>, scalar_prefetch = 0 : i64, scratch_operands = 0 : i64, tpu.core_type = #tpu.core_type<tc>, window_params = [{transform_indices = @transform_0, window_bounds = array<i64: 1, 1, 8, 8>}, {transform_indices = @transform_1, window_bounds = array<i64: 1, 1, 8, 8>}, {transform_indices = @transform_2, window_bounds = array<i64: 1, 1, 8, 8>}, {transform_indices = @transform_3, window_bounds = array<i64: 1, 1, 8>}, {transform_indices = @transform_4, window_bounds = array<i64: 1, 1, 8, 8>}]} {
    %c0 = arith.constant 0 : index
    %c0_0 = arith.constant 0 : index
    %c0_1 = arith.constant 0 : index
    %c0_2 = arith.constant 0 : index
    %0 = vector.load %arg2[%c0, %c0_0, %c0_1, %c0_2] : memref<1x1x8x8xbf16, #tpu.memory_space<vmem>>, vector<1x1x8x8xbf16>
    %1 = vector.shape_cast %0 : vector<1x1x8x8xbf16> to vector<8x8xbf16>
    %c0_3 = arith.constant 0 : index
    %c0_4 = arith.constant 0 : index
    %c0_5 = arith.constant 0 : index
    %c0_6 = arith.constant 0 : index
    %2 = vector.load %arg3[%c0_3, %c0_4, %c0_5, %c0_6] : memref<1x1x8x8xbf16, #tpu.memory_space<vmem>>, vector<1x1x8x8xbf16>
    %3 = vector.shape_cast %2 : vector<1x1x8x8xbf16> to vector<8x8xbf16>
    %c0_7 = arith.constant 0 : index
    %c0_8 = arith.constant 0 : index
    %c0_9 = arith.constant 0 : index
    %c0_10 = arith.constant 0 : index
    %4 = vector.load %arg4[%c0_7, %c0_8, %c0_9, %c0_10] : memref<1x1x8x8xbf16, #tpu.memory_space<vmem>>, vector<1x1x8x8xbf16>
    %5 = vector.shape_cast %4 : vector<1x1x8x8xbf16> to vector<8x8xbf16>
    %cst = arith.constant dense<0.000000e+00> : vector<8x8xf32>
    %6 = tpu.matmul %1, %3, %cst {dimension_numbers = #tpu.dot_dimension_numbers<[1], [1], [0], [0], [0, 0, 1, 0], [], []>} : vector<8x8xbf16>, vector<8x8xbf16>, vector<8x8xf32> -> vector<8x8xf32>
    %cst_11 = arith.constant 0.353553385 : f32
    %7 = vector.broadcast %cst_11 : f32 to vector<8x8xf32>
    %8 = arith.mulf %6, %7 : vector<8x8xf32>
    %c0_12 = arith.constant 0 : index
    %c0_13 = arith.constant 0 : index
    %c0_14 = arith.constant 0 : index
    %9 = vector.load %arg5[%c0_12, %c0_13, %c0_14] : memref<1x1x8xf32, #tpu.memory_space<vmem>>, vector<1x1x8xf32>
    %10 = vector.shape_cast %9 : vector<1x1x8xf32> to vector<1x8xf32>
    %cst_15 = arith.constant 0.000000e+00 : f32
    %11 = vector.broadcast %cst_15 : f32 to vector<1x8xf32>
    %12 = arith.cmpf ogt, %10, %11 : vector<1x8xf32>
    %13 = tpu.iota {dimensions = array<i32: 0>} : vector<8x8xi32>
    %14 = tpu.iota {dimensions = array<i32: 1>} : vector<8x8xi32>
    %15 = arith.cmpi sle, %14, %13 : vector<8x8xi32>
    %16 = vector.broadcast %12 : vector<1x8xi1> to vector<8x8xi1>
    %17 = arith.andi %16, %15 : vector<8x8xi1>
    %cst_16 = arith.constant -1.000000e+09 : f32
    %18 = vector.broadcast %cst_16 : f32 to vector<8x8xf32>
    %19 = arith.select %17, %8, %18 : vector<8x8xi1>, vector<8x8xf32>
    %cst_17 = arith.constant dense<0xFF800000> : vector<8xf32>
    %20 = vector.multi_reduction <maximumf>, %19, %cst_17 [1] : vector<8x8xf32> to vector<8xf32>
    %21 = vector.shape_cast %20 : vector<8xf32> to vector<8x1xf32>
    %22 = vector.broadcast %21 : vector<8x1xf32> to vector<8x8xf32>
    %23 = arith.subf %19, %22 : vector<8x8xf32>
    %24 = math.exp %23 : vector<8x8xf32>
    %cst_18 = arith.constant dense<0.000000e+00> : vector<8xf32>
    %25 = vector.multi_reduction <add>, %24, %cst_18 [1] : vector<8x8xf32> to vector<8xf32>
    %26 = vector.shape_cast %25 : vector<8xf32> to vector<8x1xf32>
    %27 = tpu.reciprocal %26 {approx = true} : vector<8x1xf32> -> vector<8x1xf32>
    %28 = vector.broadcast %27 : vector<8x1xf32> to vector<8x8xf32>
    %29 = arith.mulf %24, %28 : vector<8x8xf32>
    %30 = arith.truncf %29 : vector<8x8xf32> to vector<8x8xbf16>
    %cst_19 = arith.constant dense<0.000000e+00> : vector<8x8xf32>
    %31 = tpu.matmul %30, %5, %cst_19 {dimension_numbers = #tpu.dot_dimension_numbers<[1], [0], [0], [1], [0, 0, 1, 1], [], []>} : vector<8x8xbf16>, vector<8x8xbf16>, vector<8x8xf32> -> vector<8x8xf32>
    %32 = arith.truncf %31 : vector<8x8xf32> to vector<8x8xbf16>
    %c0_20 = arith.constant 0 : index
    %c0_21 = arith.constant 0 : index
    %c0_22 = arith.constant 0 : index
    %c0_23 = arith.constant 0 : index
    %33 = vector.load %arg6[%c0_20, %c0_21, %c0_22, %c0_23] : memref<1x1x8x8xbf16, #tpu.memory_space<vmem>>, vector<1x1x8x8xbf16>
    %34 = vector.shape_cast %33 : vector<1x1x8x8xbf16> to vector<8x8xbf16>
    %35 = vector.shape_cast %32 : vector<8x8xbf16> to vector<1x1x8x8xbf16>
    tpu.vector_store %arg6[%c0_20, %c0_21, %c0_22, %c0_23], %35 {strides = array<i32>} : memref<1x1x8x8xbf16, #tpu.memory_space<vmem>>, vector<1x1x8x8xbf16>,
    return
  }
  func.func @transform_0(%arg0: i32, %arg1: i32) -> (i32, i32, i32, i32) {
    %c0_i32 = arith.constant 0 : i32
    %c0_i32_0 = arith.constant 0 : i32
    %c0_i32_1 = arith.constant 0 : i32
    return %arg0, %arg1, %c0_i32, %c0_i32_0 : i32, i32, i32, i32
  }
  func.func @transform_1(%arg0: i32, %arg1: i32) -> (i32, i32, i32, i32) {
    %c0_i32 = arith.constant 0 : i32
    %c0_i32_0 = arith.constant 0 : i32
    %c0_i32_1 = arith.constant 0 : i32
    return %arg0, %arg1, %c0_i32, %c0_i32_0 : i32, i32, i32, i32
  }
  func.func @transform_2(%arg0: i32, %arg1: i32) -> (i32, i32, i32, i32) {
    %c0_i32 = arith.constant 0 : i32
    %c0_i32_0 = arith.constant 0 : i32
    %c0_i32_1 = arith.constant 0 : i32
    return %arg0, %arg1, %c0_i32, %c0_i32_0 : i32, i32, i32, i32
  }
  func.func @transform_3(%arg0: i32, %arg1: i32) -> (i32, i32, i32) {
    %c0_i32 = arith.constant 0 : i32
    %c0_i32_0 = arith.constant 0 : i32
    %c0_i32_1 = arith.constant 0 : i32
    return %arg0, %c0_i32, %c0_i32_0 : i32, i32, i32
  }
  func.func @transform_4(%arg0: i32, %arg1: i32) -> (i32, i32, i32, i32) {
    %c0_i32 = arith.constant 0 : i32
    %c0_i32_0 = arith.constant 0 : i32
    %c0_i32_1 = arith.constant 0 : i32
    return %arg0, %arg1, %c0_i32, %c0_i32_0 : i32, i32, i32, i32
  }
}

module attributes {stable_mosaic.version = 11 : i64} {
  func.func @_linear_addln_kernel(%arg0: i32, %arg1: i32, %arg2: memref<16x32xbf16, #tpu.memory_space<vmem>>, %arg3: memref<32x32xbf16, #tpu.memory_space<vmem>>, %arg4: memref<1x32xf32, #tpu.memory_space<vmem>>, %arg5: memref<16x32xf32, #tpu.memory_space<vmem>>, %arg6: memref<1x32xf32, #tpu.memory_space<vmem>>, %arg7: memref<1x32xf32, #tpu.memory_space<vmem>>, %arg8: memref<16x32xbf16, #tpu.memory_space<vmem>>, %arg9: memref<16x32xf32, #tpu.memory_space<vmem>>) attributes {dimension_semantics = [#tpu.dimension_semantics<parallel>, #tpu.dimension_semantics<arbitrary>], iteration_bounds = array<i64: 1, 1>, scalar_prefetch = 0 : i64, scratch_operands = 1 : i64, tpu.core_type = #tpu.core_type<tc>, window_params = [{transform_indices = @transform_0, window_bounds = array<i64: 16, 32>}, {transform_indices = @transform_1, window_bounds = array<i64: 32, 32>}, {pipeline_mode = #tpu.pipeline_mode<synchronous>, transform_indices = @transform_2, window_bounds = array<i64: 1, 32>}, {transform_indices = @transform_3, window_bounds = array<i64: 16, 32>}, {pipeline_mode = #tpu.pipeline_mode<synchronous>, transform_indices = @transform_4, window_bounds = array<i64: 1, 32>}, {pipeline_mode = #tpu.pipeline_mode<synchronous>, transform_indices = @transform_5, window_bounds = array<i64: 1, 32>}, {transform_indices = @transform_6, window_bounds = array<i64: 16, 32>}]} {
    %c0_i32 = arith.constant 0 : i32
    %0 = arith.cmpi eq, %arg1, %c0_i32 : i32
    %1 = arith.extui %0 : i1 to i32
    %c0_i32_0 = arith.constant 0 : i32
    %2 = arith.cmpi ne, %1, %c0_i32_0 : i32
    scf.if %2 {
      %cst_10 = arith.constant 0.000000e+00 : f32
      %12 = vector.broadcast %cst_10 : f32 to vector<16x32xf32>
      %c0_11 = arith.constant 0 : index
      %c0_12 = arith.constant 0 : index
      %13 = vector.load %arg9[%c0_11, %c0_12] : memref<16x32xf32, #tpu.memory_space<vmem>>, vector<16x32xf32>
      tpu.vector_store %arg9[%c0_11, %c0_12], %12 {strides = array<i32>} : memref<16x32xf32, #tpu.memory_space<vmem>>, vector<16x32xf32>,
    } else {
    }
    %c0 = arith.constant 0 : index
    %c0_1 = arith.constant 0 : index
    %3 = vector.load %arg9[%c0, %c0_1] : memref<16x32xf32, #tpu.memory_space<vmem>>, vector<16x32xf32>
    %c0_2 = arith.constant 0 : index
    %c0_3 = arith.constant 0 : index
    %4 = vector.load %arg2[%c0_2, %c0_3] : memref<16x32xbf16, #tpu.memory_space<vmem>>, vector<16x32xbf16>
    %c0_4 = arith.constant 0 : index
    %c0_5 = arith.constant 0 : index
    %5 = vector.load %arg3[%c0_4, %c0_5] : memref<32x32xbf16, #tpu.memory_space<vmem>>, vector<32x32xbf16>
    %cst = arith.constant dense<0.000000e+00> : vector<16x32xf32>
    %6 = tpu.matmul %4, %5, %cst {dimension_numbers = #tpu.dot_dimension_numbers<[1], [0], [0], [1], [0, 0, 1, 1], [], []>} : vector<16x32xbf16>, vector<32x32xbf16>, vector<16x32xf32> -> vector<16x32xf32>
    %7 = arith.addf %3, %6 : vector<16x32xf32>
    %c0_6 = arith.constant 0 : index
    %c0_7 = arith.constant 0 : index
    %8 = vector.load %arg9[%c0_6, %c0_7] : memref<16x32xf32, #tpu.memory_space<vmem>>, vector<16x32xf32>
    tpu.vector_store %arg9[%c0_6, %c0_7], %7 {strides = array<i32>} : memref<16x32xf32, #tpu.memory_space<vmem>>, vector<16x32xf32>,
    %c0_i32_8 = arith.constant 0 : i32
    %9 = arith.cmpi eq, %arg1, %c0_i32_8 : i32
    %10 = arith.extui %9 : i1 to i32
    %c0_i32_9 = arith.constant 0 : i32
    %11 = arith.cmpi ne, %10, %c0_i32_9 : i32
    scf.if %11 {
      %c0_10 = arith.constant 0 : index
      %c0_11 = arith.constant 0 : index
      %12 = vector.load %arg9[%c0_10, %c0_11] : memref<16x32xf32, #tpu.memory_space<vmem>>, vector<16x32xf32>
      %c0_12 = arith.constant 0 : index
      %c0_13 = arith.constant 0 : index
      %13 = vector.load %arg4[%c0_12, %c0_13] : memref<1x32xf32, #tpu.memory_space<vmem>>, vector<1x32xf32>
      %14 = vector.broadcast %13 : vector<1x32xf32> to vector<16x32xf32>
      %15 = arith.addf %12, %14 : vector<16x32xf32>
      %c0_14 = arith.constant 0 : index
      %c0_15 = arith.constant 0 : index
      %16 = vector.load %arg5[%c0_14, %c0_15] : memref<16x32xf32, #tpu.memory_space<vmem>>, vector<16x32xf32>
      %17 = arith.addf %15, %16 : vector<16x32xf32>
      %cst_16 = arith.constant dense<0.000000e+00> : vector<16xf32>
      %18 = vector.multi_reduction <add>, %17, %cst_16 [1] : vector<16x32xf32> to vector<16xf32>
      %19 = vector.shape_cast %18 : vector<16xf32> to vector<16x1xf32>
      %cst_17 = arith.constant 3.200000e+01 : f32
      %20 = vector.broadcast %cst_17 : f32 to vector<16x1xf32>
      %21 = arith.divf %19, %20 : vector<16x1xf32>
      %22 = vector.broadcast %21 : vector<16x1xf32> to vector<16x32xf32>
      %23 = arith.subf %17, %22 : vector<16x32xf32>
      %24 = vector.broadcast %21 : vector<16x1xf32> to vector<16x32xf32>
      %25 = arith.subf %17, %24 : vector<16x32xf32>
      %26 = arith.mulf %23, %25 : vector<16x32xf32>
      %cst_18 = arith.constant dense<0.000000e+00> : vector<16xf32>
      %27 = vector.multi_reduction <add>, %26, %cst_18 [1] : vector<16x32xf32> to vector<16xf32>
      %28 = vector.shape_cast %27 : vector<16xf32> to vector<16x1xf32>
      %cst_19 = arith.constant 3.200000e+01 : f32
      %29 = vector.broadcast %cst_19 : f32 to vector<16x1xf32>
      %30 = arith.divf %28, %29 : vector<16x1xf32>
      %31 = vector.broadcast %21 : vector<16x1xf32> to vector<16x32xf32>
      %32 = arith.subf %17, %31 : vector<16x32xf32>
      %cst_20 = arith.constant 9.99999974E-6 : f32
      %33 = vector.broadcast %cst_20 : f32 to vector<16x1xf32>
      %34 = arith.addf %30, %33 : vector<16x1xf32>
      %35 = math.rsqrt %34 : vector<16x1xf32>
      %36 = vector.broadcast %35 : vector<16x1xf32> to vector<16x32xf32>
      %37 = arith.mulf %32, %36 : vector<16x32xf32>
      %c0_21 = arith.constant 0 : index
      %c0_22 = arith.constant 0 : index
      %38 = vector.load %arg6[%c0_21, %c0_22] : memref<1x32xf32, #tpu.memory_space<vmem>>, vector<1x32xf32>
      %39 = vector.broadcast %38 : vector<1x32xf32> to vector<16x32xf32>
      %40 = arith.mulf %37, %39 : vector<16x32xf32>
      %c0_23 = arith.constant 0 : index
      %c0_24 = arith.constant 0 : index
      %41 = vector.load %arg7[%c0_23, %c0_24] : memref<1x32xf32, #tpu.memory_space<vmem>>, vector<1x32xf32>
      %42 = vector.broadcast %41 : vector<1x32xf32> to vector<16x32xf32>
      %43 = arith.addf %40, %42 : vector<16x32xf32>
      %44 = arith.truncf %43 : vector<16x32xf32> to vector<16x32xbf16>
      %c0_25 = arith.constant 0 : index
      %c0_26 = arith.constant 0 : index
      %45 = vector.load %arg8[%c0_25, %c0_26] : memref<16x32xbf16, #tpu.memory_space<vmem>>, vector<16x32xbf16>
      tpu.vector_store %arg8[%c0_25, %c0_26], %44 {strides = array<i32>} : memref<16x32xbf16, #tpu.memory_space<vmem>>, vector<16x32xbf16>,
    } else {
    }
    return
  }
  func.func @transform_0(%arg0: i32, %arg1: i32) -> (i32, i32) {
    %c0_i32 = arith.constant 0 : i32
    return %arg0, %arg1 : i32, i32
  }
  func.func @transform_1(%arg0: i32, %arg1: i32) -> (i32, i32) {
    %c0_i32 = arith.constant 0 : i32
    %c0_i32_0 = arith.constant 0 : i32
    return %arg1, %c0_i32 : i32, i32
  }
  func.func @transform_2(%arg0: i32, %arg1: i32) -> (i32, i32) {
    %c0_i32 = arith.constant 0 : i32
    %c0_i32_0 = arith.constant 0 : i32
    %c0_i32_1 = arith.constant 0 : i32
    return %c0_i32, %c0_i32_0 : i32, i32
  }
  func.func @transform_3(%arg0: i32, %arg1: i32) -> (i32, i32) {
    %c0_i32 = arith.constant 0 : i32
    %c0_i32_0 = arith.constant 0 : i32
    return %arg0, %c0_i32 : i32, i32
  }
  func.func @transform_4(%arg0: i32, %arg1: i32) -> (i32, i32) {
    %c0_i32 = arith.constant 0 : i32
    %c0_i32_0 = arith.constant 0 : i32
    %c0_i32_1 = arith.constant 0 : i32
    return %c0_i32, %c0_i32_0 : i32, i32
  }
  func.func @transform_5(%arg0: i32, %arg1: i32) -> (i32, i32) {
    %c0_i32 = arith.constant 0 : i32
    %c0_i32_0 = arith.constant 0 : i32
    %c0_i32_1 = arith.constant 0 : i32
    return %c0_i32, %c0_i32_0 : i32, i32
  }
  func.func @transform_6(%arg0: i32, %arg1: i32) -> (i32, i32) {
    %c0_i32 = arith.constant 0 : i32
    %c0_i32_0 = arith.constant 0 : i32
    return %arg0, %c0_i32 : i32, i32
  }
}

module attributes {stable_mosaic.version = 11 : i64} {
  func.func @_linear_kernel(%arg0: i32, %arg1: i32, %arg2: i32, %arg3: memref<16x32xbf16, #tpu.memory_space<vmem>>, %arg4: memref<32x32xbf16, #tpu.memory_space<vmem>>, %arg5: memref<1x32xf32, #tpu.memory_space<vmem>>, %arg6: memref<16x32xbf16, #tpu.memory_space<vmem>>, %arg7: memref<16x32xf32, #tpu.memory_space<vmem>>) attributes {dimension_semantics = [#tpu.dimension_semantics<parallel>, #tpu.dimension_semantics<parallel>, #tpu.dimension_semantics<arbitrary>], iteration_bounds = array<i64: 1, 1, 1>, scalar_prefetch = 0 : i64, scratch_operands = 1 : i64, tpu.core_type = #tpu.core_type<tc>, window_params = [{transform_indices = @transform_0, window_bounds = array<i64: 16, 32>}, {transform_indices = @transform_1, window_bounds = array<i64: 32, 32>}, {transform_indices = @transform_2, window_bounds = array<i64: 1, 32>}, {transform_indices = @transform_3, window_bounds = array<i64: 16, 32>}]} {
    %c0_i32 = arith.constant 0 : i32
    %0 = arith.cmpi eq, %arg2, %c0_i32 : i32
    %1 = arith.extui %0 : i1 to i32
    %c0_i32_0 = arith.constant 0 : i32
    %2 = arith.cmpi ne, %1, %c0_i32_0 : i32
    scf.if %2 {
      %cst_10 = arith.constant 0.000000e+00 : f32
      %12 = vector.broadcast %cst_10 : f32 to vector<16x32xf32>
      %c0_11 = arith.constant 0 : index
      %c0_12 = arith.constant 0 : index
      %13 = vector.load %arg7[%c0_11, %c0_12] : memref<16x32xf32, #tpu.memory_space<vmem>>, vector<16x32xf32>
      tpu.vector_store %arg7[%c0_11, %c0_12], %12 {strides = array<i32>} : memref<16x32xf32, #tpu.memory_space<vmem>>, vector<16x32xf32>,
    } else {
    }
    %c0 = arith.constant 0 : index
    %c0_1 = arith.constant 0 : index
    %3 = vector.load %arg7[%c0, %c0_1] : memref<16x32xf32, #tpu.memory_space<vmem>>, vector<16x32xf32>
    %c0_2 = arith.constant 0 : index
    %c0_3 = arith.constant 0 : index
    %4 = vector.load %arg3[%c0_2, %c0_3] : memref<16x32xbf16, #tpu.memory_space<vmem>>, vector<16x32xbf16>
    %c0_4 = arith.constant 0 : index
    %c0_5 = arith.constant 0 : index
    %5 = vector.load %arg4[%c0_4, %c0_5] : memref<32x32xbf16, #tpu.memory_space<vmem>>, vector<32x32xbf16>
    %cst = arith.constant dense<0.000000e+00> : vector<16x32xf32>
    %6 = tpu.matmul %4, %5, %cst {dimension_numbers = #tpu.dot_dimension_numbers<[1], [0], [0], [1], [0, 0, 1, 1], [], []>} : vector<16x32xbf16>, vector<32x32xbf16>, vector<16x32xf32> -> vector<16x32xf32>
    %7 = arith.addf %3, %6 : vector<16x32xf32>
    %c0_6 = arith.constant 0 : index
    %c0_7 = arith.constant 0 : index
    %8 = vector.load %arg7[%c0_6, %c0_7] : memref<16x32xf32, #tpu.memory_space<vmem>>, vector<16x32xf32>
    tpu.vector_store %arg7[%c0_6, %c0_7], %7 {strides = array<i32>} : memref<16x32xf32, #tpu.memory_space<vmem>>, vector<16x32xf32>,
    %c0_i32_8 = arith.constant 0 : i32
    %9 = arith.cmpi eq, %arg2, %c0_i32_8 : i32
    %10 = arith.extui %9 : i1 to i32
    %c0_i32_9 = arith.constant 0 : i32
    %11 = arith.cmpi ne, %10, %c0_i32_9 : i32
    scf.if %11 {
      %c0_10 = arith.constant 0 : index
      %c0_11 = arith.constant 0 : index
      %12 = vector.load %arg7[%c0_10, %c0_11] : memref<16x32xf32, #tpu.memory_space<vmem>>, vector<16x32xf32>
      %c0_12 = arith.constant 0 : index
      %c0_13 = arith.constant 0 : index
      %13 = vector.load %arg5[%c0_12, %c0_13] : memref<1x32xf32, #tpu.memory_space<vmem>>, vector<1x32xf32>
      %14 = vector.broadcast %13 : vector<1x32xf32> to vector<16x32xf32>
      %15 = arith.addf %12, %14 : vector<16x32xf32>
      %16 = arith.truncf %15 : vector<16x32xf32> to vector<16x32xbf16>
      %c0_14 = arith.constant 0 : index
      %c0_15 = arith.constant 0 : index
      %17 = vector.load %arg6[%c0_14, %c0_15] : memref<16x32xbf16, #tpu.memory_space<vmem>>, vector<16x32xbf16>
      tpu.vector_store %arg6[%c0_14, %c0_15], %16 {strides = array<i32>} : memref<16x32xbf16, #tpu.memory_space<vmem>>, vector<16x32xbf16>,
    } else {
    }
    return
  }
  func.func @transform_0(%arg0: i32, %arg1: i32, %arg2: i32) -> (i32, i32) {
    %c0_i32 = arith.constant 0 : i32
    return %arg0, %arg2 : i32, i32
  }
  func.func @transform_1(%arg0: i32, %arg1: i32, %arg2: i32) -> (i32, i32) {
    %c0_i32 = arith.constant 0 : i32
    return %arg2, %arg1 : i32, i32
  }
  func.func @transform_2(%arg0: i32, %arg1: i32, %arg2: i32) -> (i32, i32) {
    %c0_i32 = arith.constant 0 : i32
    %c0_i32_0 = arith.constant 0 : i32
    return %c0_i32, %arg1 : i32, i32
  }
  func.func @transform_3(%arg0: i32, %arg1: i32, %arg2: i32) -> (i32, i32) {
    %c0_i32 = arith.constant 0 : i32
    return %arg0, %arg1 : i32, i32
  }
}

module attributes {stable_mosaic.version = 11 : i64} {
  func.func @_linear_kernel(%arg0: i32, %arg1: i32, %arg2: i32, %arg3: memref<16x32xbf16, #tpu.memory_space<vmem>>, %arg4: memref<32x128xbf16, #tpu.memory_space<vmem>>, %arg5: memref<1x128xf32, #tpu.memory_space<vmem>>, %arg6: memref<16x128xbf16, #tpu.memory_space<vmem>>, %arg7: memref<16x128xf32, #tpu.memory_space<vmem>>) attributes {dimension_semantics = [#tpu.dimension_semantics<parallel>, #tpu.dimension_semantics<parallel>, #tpu.dimension_semantics<arbitrary>], iteration_bounds = array<i64: 1, 1, 1>, scalar_prefetch = 0 : i64, scratch_operands = 1 : i64, tpu.core_type = #tpu.core_type<tc>, window_params = [{transform_indices = @transform_0, window_bounds = array<i64: 16, 32>}, {transform_indices = @transform_1, window_bounds = array<i64: 32, 128>}, {transform_indices = @transform_2, window_bounds = array<i64: 1, 128>}, {transform_indices = @transform_3, window_bounds = array<i64: 16, 128>}]} {
    %c0_i32 = arith.constant 0 : i32
    %0 = arith.cmpi eq, %arg2, %c0_i32 : i32
    %1 = arith.extui %0 : i1 to i32
    %c0_i32_0 = arith.constant 0 : i32
    %2 = arith.cmpi ne, %1, %c0_i32_0 : i32
    scf.if %2 {
      %cst_10 = arith.constant 0.000000e+00 : f32
      %12 = vector.broadcast %cst_10 : f32 to vector<16x128xf32>
      %c0_11 = arith.constant 0 : index
      %c0_12 = arith.constant 0 : index
      %13 = vector.load %arg7[%c0_11, %c0_12] : memref<16x128xf32, #tpu.memory_space<vmem>>, vector<16x128xf32>
      tpu.vector_store %arg7[%c0_11, %c0_12], %12 {strides = array<i32>} : memref<16x128xf32, #tpu.memory_space<vmem>>, vector<16x128xf32>,
    } else {
    }
    %c0 = arith.constant 0 : index
    %c0_1 = arith.constant 0 : index
    %3 = vector.load %arg7[%c0, %c0_1] : memref<16x128xf32, #tpu.memory_space<vmem>>, vector<16x128xf32>
    %c0_2 = arith.constant 0 : index
    %c0_3 = arith.constant 0 : index
    %4 = vector.load %arg3[%c0_2, %c0_3] : memref<16x32xbf16, #tpu.memory_space<vmem>>, vector<16x32xbf16>
    %c0_4 = arith.constant 0 : index
    %c0_5 = arith.constant 0 : index
    %5 = vector.load %arg4[%c0_4, %c0_5] : memref<32x128xbf16, #tpu.memory_space<vmem>>, vector<32x128xbf16>
    %cst = arith.constant dense<0.000000e+00> : vector<16x128xf32>
    %6 = tpu.matmul %4, %5, %cst {dimension_numbers = #tpu.dot_dimension_numbers<[1], [0], [0], [1], [0, 0, 1, 1], [], []>} : vector<16x32xbf16>, vector<32x128xbf16>, vector<16x128xf32> -> vector<16x128xf32>
    %7 = arith.addf %3, %6 : vector<16x128xf32>
    %c0_6 = arith.constant 0 : index
    %c0_7 = arith.constant 0 : index
    %8 = vector.load %arg7[%c0_6, %c0_7] : memref<16x128xf32, #tpu.memory_space<vmem>>, vector<16x128xf32>
    tpu.vector_store %arg7[%c0_6, %c0_7], %7 {strides = array<i32>} : memref<16x128xf32, #tpu.memory_space<vmem>>, vector<16x128xf32>,
    %c0_i32_8 = arith.constant 0 : i32
    %9 = arith.cmpi eq, %arg2, %c0_i32_8 : i32
    %10 = arith.extui %9 : i1 to i32
    %c0_i32_9 = arith.constant 0 : i32
    %11 = arith.cmpi ne, %10, %c0_i32_9 : i32
    scf.if %11 {
      %c0_10 = arith.constant 0 : index
      %c0_11 = arith.constant 0 : index
      %12 = vector.load %arg7[%c0_10, %c0_11] : memref<16x128xf32, #tpu.memory_space<vmem>>, vector<16x128xf32>
      %c0_12 = arith.constant 0 : index
      %c0_13 = arith.constant 0 : index
      %13 = vector.load %arg5[%c0_12, %c0_13] : memref<1x128xf32, #tpu.memory_space<vmem>>, vector<1x128xf32>
      %14 = vector.broadcast %13 : vector<1x128xf32> to vector<16x128xf32>
      %15 = arith.addf %12, %14 : vector<16x128xf32>
      %cst_14 = arith.constant 0.000000e+00 : f32
      %16 = vector.broadcast %cst_14 : f32 to vector<16x128xf32>
      %17 = arith.maximumf %15, %16 : vector<16x128xf32>
      %18 = arith.truncf %17 : vector<16x128xf32> to vector<16x128xbf16>
      %c0_15 = arith.constant 0 : index
      %c0_16 = arith.constant 0 : index
      %19 = vector.load %arg6[%c0_15, %c0_16] : memref<16x128xbf16, #tpu.memory_space<vmem>>, vector<16x128xbf16>
      tpu.vector_store %arg6[%c0_15, %c0_16], %18 {strides = array<i32>} : memref<16x128xbf16, #tpu.memory_space<vmem>>, vector<16x128xbf16>,
    } else {
    }
    return
  }
  func.func @transform_0(%arg0: i32, %arg1: i32, %arg2: i32) -> (i32, i32) {
    %c0_i32 = arith.constant 0 : i32
    return %arg0, %arg2 : i32, i32
  }
  func.func @transform_1(%arg0: i32, %arg1: i32, %arg2: i32) -> (i32, i32) {
    %c0_i32 = arith.constant 0 : i32
    return %arg2, %arg1 : i32, i32
  }
  func.func @transform_2(%arg0: i32, %arg1: i32, %arg2: i32) -> (i32, i32) {
    %c0_i32 = arith.constant 0 : i32
    %c0_i32_0 = arith.constant 0 : i32
    return %c0_i32, %arg1 : i32, i32
  }
  func.func @transform_3(%arg0: i32, %arg1: i32, %arg2: i32) -> (i32, i32) {
    %c0_i32 = arith.constant 0 : i32
    return %arg0, %arg1 : i32, i32
  }
}

module attributes {stable_mosaic.version = 11 : i64} {
  func.func @_mha_kernel(%arg0: i32, %arg1: i32, %arg2: memref<1x1x8x8xbf16, #tpu.memory_space<vmem>>, %arg3: memref<1x1x8x8xbf16, #tpu.memory_space<vmem>>, %arg4: memref<1x1x8x8xbf16, #tpu.memory_space<vmem>>, %arg5: memref<1x1x8xf32, #tpu.memory_space<vmem>>, %arg6: memref<1x1x8x8xbf16, #tpu.memory_space<vmem>>) attributes {dimension_semantics = [#tpu.dimension_semantics<parallel>, #tpu.dimension_semantics<parallel>], iteration_bounds = array<i64: 2, 4>, scalar_prefetch = 0 : i64, scratch_operands = 0 : i64, tpu.core_type = #tpu.core_type<tc>, window_params = [{transform_indices = @transform_0, window_bounds = array<i64: 1, 1, 8, 8>}, {transform_indices = @transform_1, window_bounds = array<i64: 1, 1, 8, 8>}, {transform_indices = @transform_2, window_bounds = array<i64: 1, 1, 8, 8>}, {transform_indices = @transform_3, window_bounds = array<i64: 1, 1, 8>}, {transform_indices = @transform_4, window_bounds = array<i64: 1, 1, 8, 8>}]} {
    %c0 = arith.constant 0 : index
    %c0_0 = arith.constant 0 : index
    %c0_1 = arith.constant 0 : index
    %c0_2 = arith.constant 0 : index
    %0 = vector.load %arg2[%c0, %c0_0, %c0_1, %c0_2] : memref<1x1x8x8xbf16, #tpu.memory_space<vmem>>, vector<1x1x8x8xbf16>
    %1 = vector.shape_cast %0 : vector<1x1x8x8xbf16> to vector<8x8xbf16>
    %c0_3 = arith.constant 0 : index
    %c0_4 = arith.constant 0 : index
    %c0_5 = arith.constant 0 : index
    %c0_6 = arith.constant 0 : index
    %2 = vector.load %arg3[%c0_3, %c0_4, %c0_5, %c0_6] : memref<1x1x8x8xbf16, #tpu.memory_space<vmem>>, vector<1x1x8x8xbf16>
    %3 = vector.shape_cast %2 : vector<1x1x8x8xbf16> to vector<8x8xbf16>
    %c0_7 = arith.constant 0 : index
    %c0_8 = arith.constant 0 : index
    %c0_9 = arith.constant 0 : index
    %c0_10 = arith.constant 0 : index
    %4 = vector.load %arg4[%c0_7, %c0_8, %c0_9, %c0_10] : memref<1x1x8x8xbf16, #tpu.memory_space<vmem>>, vector<1x1x8x8xbf16>
    %5 = vector.shape_cast %4 : vector<1x1x8x8xbf16> to vector<8x8xbf16>
    %cst = arith.constant dense<0.000000e+00> : vector<8x8xf32>
    %6 = tpu.matmul %1, %3, %cst {dimension_numbers = #tpu.dot_dimension_numbers<[1], [1], [0], [0], [0, 0, 1, 0], [], []>} : vector<8x8xbf16>, vector<8x8xbf16>, vector<8x8xf32> -> vector<8x8xf32>
    %cst_11 = arith.constant 0.353553385 : f32
    %7 = vector.broadcast %cst_11 : f32 to vector<8x8xf32>
    %8 = arith.mulf %6, %7 : vector<8x8xf32>
    %c0_12 = arith.constant 0 : index
    %c0_13 = arith.constant 0 : index
    %c0_14 = arith.constant 0 : index
    %9 = vector.load %arg5[%c0_12, %c0_13, %c0_14] : memref<1x1x8xf32, #tpu.memory_space<vmem>>, vector<1x1x8xf32>
    %10 = vector.shape_cast %9 : vector<1x1x8xf32> to vector<1x8xf32>
    %cst_15 = arith.constant 0.000000e+00 : f32
    %11 = vector.broadcast %cst_15 : f32 to vector<1x8xf32>
    %12 = arith.cmpf ogt, %10, %11 : vector<1x8xf32>
    %cst_16 = arith.constant -1.000000e+09 : f32
    %13 = vector.shape_cast %12 : vector<1x8xi1> to vector<1x8xi1>
    %14 = vector.broadcast %13 : vector<1x8xi1> to vector<8x8xi1>
    %15 = vector.broadcast %cst_16 : f32 to vector<8x8xf32>
    %16 = arith.select %14, %8, %15 : vector<8x8xi1>, vector<8x8xf32>
    %cst_17 = arith.constant dense<0xFF800000> : vector<8xf32>
    %17 = vector.multi_reduction <maximumf>, %16, %cst_17 [1] : vector<8x8xf32> to vector<8xf32>
    %18 = vector.shape_cast %17 : vector<8xf32> to vector<8x1xf32>
    %19 = vector.broadcast %18 : vector<8x1xf32> to vector<8x8xf32>
    %20 = arith.subf %16, %19 : vector<8x8xf32>
    %21 = math.exp %20 : vector<8x8xf32>
    %cst_18 = arith.constant dense<0.000000e+00> : vector<8xf32>
    %22 = vector.multi_reduction <add>, %21, %cst_18 [1] : vector<8x8xf32> to vector<8xf32>
    %23 = vector.shape_cast %22 : vector<8xf32> to vector<8x1xf32>
    %24 = tpu.reciprocal %23 {approx = true} : vector<8x1xf32> -> vector<8x1xf32>
    %25 = vector.broadcast %24 : vector<8x1xf32> to vector<8x8xf32>
    %26 = arith.mulf %21, %25 : vector<8x8xf32>
    %27 = arith.truncf %26 : vector<8x8xf32> to vector<8x8xbf16>
    %cst_19 = arith.constant dense<0.000000e+00> : vector<8x8xf32>
    %28 = tpu.matmul %27, %5, %cst_19 {dimension_numbers = #tpu.dot_dimension_numbers<[1], [0], [0], [1], [0, 0, 1, 1], [], []>} : vector<8x8xbf16>, vector<8x8xbf16>, vector<8x8xf32> -> vector<8x8xf32>
    %29 = arith.truncf %28 : vector<8x8xf32> to vector<8x8xbf16>
    %c0_20 = arith.constant 0 : index
    %c0_21 = arith.constant 0 : index
    %c0_22 = arith.constant 0 : index
    %c0_23 = arith.constant 0 : index
    %30 = vector.load %arg6[%c0_20, %c0_21, %c0_22, %c0_23] : memref<1x1x8x8xbf16, #tpu.memory_space<vmem>>, vector<1x1x8x8xbf16>
    %31 = vector.shape_cast %30 : vector<1x1x8x8xbf16> to vector<8x8xbf16>
    %32 = vector.shape_cast %29 : vector<8x8xbf16> to vector<1x1x8x8xbf16>
    tpu.vector_store %arg6[%c0_20, %c0_21, %c0_22, %c0_23], %32 {strides = array<i32>} : memref<1x1x8x8xbf16, #tpu.memory_space<vmem>>, vector<1x1x8x8xbf16>,
    return
  }
  func.func @transform_0(%arg0: i32, %arg1: i32) -> (i32, i32, i32, i32) {
    %c0_i32 = arith.constant 0 : i32
    %c0_i32_0 = arith.constant 0 : i32
    %c0_i32_1 = arith.constant 0 : i32
    return %arg0, %arg1, %c0_i32, %c0_i32_0 : i32, i32, i32, i32
  }
  func.func @transform_1(%arg0: i32, %arg1: i32) -> (i32, i32, i32, i32) {
    %c0_i32 = arith.constant 0 : i32
    %c0_i32_0 = arith.constant 0 : i32
    %c0_i32_1 = arith.constant 0 : i32
    return %arg0, %arg1, %c0_i32, %c0_i32_0 : i32, i32, i32, i32
  }
  func.func @transform_2(%arg0: i32, %arg1: i32) -> (i32, i32, i32, i32) {
    %c0_i32 = arith.constant 0 : i32
    %c0_i32_0 = arith.constant 0 : i32
    %c0_i32_1 = arith.constant 0 : i32
    return %arg0, %arg1, %c0_i32, %c0_i32_0 : i32, i32, i32, i32
  }
  func.func @transform_3(%arg0: i32, %arg1: i32) -> (i32, i32, i32) {
    %c0_i32 = arith.constant 0 : i32
    %c0_i32_0 = arith.constant 0 : i32
    %c0_i32_1 = arith.constant 0 : i32
    return %arg0, %c0_i32, %c0_i32_0 : i32, i32, i32
  }
  func.func @transform_4(%arg0: i32, %arg1: i32) -> (i32, i32, i32, i32) {
    %c0_i32 = arith.constant 0 : i32
    %c0_i32_0 = arith.constant 0 : i32
    %c0_i32_1 = arith.constant 0 : i32
    return %arg0, %arg1, %c0_i32, %c0_i32_0 : i32, i32, i32, i32
  }
}

module attributes {stable_mosaic.version = 11 : i64} {
  func.func @_linear_addln_kernel(%arg0: i32, %arg1: i32, %arg2: memref<16x128xbf16, #tpu.memory_space<vmem>>, %arg3: memref<128x32xbf16, #tpu.memory_space<vmem>>, %arg4: memref<1x32xf32, #tpu.memory_space<vmem>>, %arg5: memref<16x32xbf16, #tpu.memory_space<vmem>>, %arg6: memref<1x32xf32, #tpu.memory_space<vmem>>, %arg7: memref<1x32xf32, #tpu.memory_space<vmem>>, %arg8: memref<16x32xbf16, #tpu.memory_space<vmem>>, %arg9: memref<16x32xf32, #tpu.memory_space<vmem>>) attributes {dimension_semantics = [#tpu.dimension_semantics<parallel>, #tpu.dimension_semantics<arbitrary>], iteration_bounds = array<i64: 1, 1>, scalar_prefetch = 0 : i64, scratch_operands = 1 : i64, tpu.core_type = #tpu.core_type<tc>, window_params = [{transform_indices = @transform_0, window_bounds = array<i64: 16, 128>}, {transform_indices = @transform_1, window_bounds = array<i64: 128, 32>}, {pipeline_mode = #tpu.pipeline_mode<synchronous>, transform_indices = @transform_2, window_bounds = array<i64: 1, 32>}, {transform_indices = @transform_3, window_bounds = array<i64: 16, 32>}, {pipeline_mode = #tpu.pipeline_mode<synchronous>, transform_indices = @transform_4, window_bounds = array<i64: 1, 32>}, {pipeline_mode = #tpu.pipeline_mode<synchronous>, transform_indices = @transform_5, window_bounds = array<i64: 1, 32>}, {transform_indices = @transform_6, window_bounds = array<i64: 16, 32>}]} {
    %c0_i32 = arith.constant 0 : i32
    %0 = arith.cmpi eq, %arg1, %c0_i32 : i32
    %1 = arith.extui %0 : i1 to i32
    %c0_i32_0 = arith.constant 0 : i32
    %2 = arith.cmpi ne, %1, %c0_i32_0 : i32
    scf.if %2 {
      %cst_10 = arith.constant 0.000000e+00 : f32
      %12 = vector.broadcast %cst_10 : f32 to vector<16x32xf32>
      %c0_11 = arith.constant 0 : index
      %c0_12 = arith.constant 0 : index
      %13 = vector.load %arg9[%c0_11, %c0_12] : memref<16x32xf32, #tpu.memory_space<vmem>>, vector<16x32xf32>
      tpu.vector_store %arg9[%c0_11, %c0_12], %12 {strides = array<i32>} : memref<16x32xf32, #tpu.memory_space<vmem>>, vector<16x32xf32>,
    } else {
    }
    %c0 = arith.constant 0 : index
    %c0_1 = arith.constant 0 : index
    %3 = vector.load %arg9[%c0, %c0_1] : memref<16x32xf32, #tpu.memory_space<vmem>>, vector<16x32xf32>
    %c0_2 = arith.constant 0 : index
    %c0_3 = arith.constant 0 : index
    %4 = vector.load %arg2[%c0_2, %c0_3] : memref<16x128xbf16, #tpu.memory_space<vmem>>, vector<16x128xbf16>
    %c0_4 = arith.constant 0 : index
    %c0_5 = arith.constant 0 : index
    %5 = vector.load %arg3[%c0_4, %c0_5] : memref<128x32xbf16, #tpu.memory_space<vmem>>, vector<128x32xbf16>
    %cst = arith.constant dense<0.000000e+00> : vector<16x32xf32>
    %6 = tpu.matmul %4, %5, %cst {dimension_numbers = #tpu.dot_dimension_numbers<[1], [0], [0], [1], [0, 0, 1, 1], [], []>} : vector<16x128xbf16>, vector<128x32xbf16>, vector<16x32xf32> -> vector<16x32xf32>
    %7 = arith.addf %3, %6 : vector<16x32xf32>
    %c0_6 = arith.constant 0 : index
    %c0_7 = arith.constant 0 : index
    %8 = vector.load %arg9[%c0_6, %c0_7] : memref<16x32xf32, #tpu.memory_space<vmem>>, vector<16x32xf32>
    tpu.vector_store %arg9[%c0_6, %c0_7], %7 {strides = array<i32>} : memref<16x32xf32, #tpu.memory_space<vmem>>, vector<16x32xf32>,
    %c0_i32_8 = arith.constant 0 : i32
    %9 = arith.cmpi eq, %arg1, %c0_i32_8 : i32
    %10 = arith.extui %9 : i1 to i32
    %c0_i32_9 = arith.constant 0 : i32
    %11 = arith.cmpi ne, %10, %c0_i32_9 : i32
    scf.if %11 {
      %c0_10 = arith.constant 0 : index
      %c0_11 = arith.constant 0 : index
      %12 = vector.load %arg9[%c0_10, %c0_11] : memref<16x32xf32, #tpu.memory_space<vmem>>, vector<16x32xf32>
      %c0_12 = arith.constant 0 : index
      %c0_13 = arith.constant 0 : index
      %13 = vector.load %arg4[%c0_12, %c0_13] : memref<1x32xf32, #tpu.memory_space<vmem>>, vector<1x32xf32>
      %14 = vector.broadcast %13 : vector<1x32xf32> to vector<16x32xf32>
      %15 = arith.addf %12, %14 : vector<16x32xf32>
      %c0_14 = arith.constant 0 : index
      %c0_15 = arith.constant 0 : index
      %16 = vector.load %arg5[%c0_14, %c0_15] : memref<16x32xbf16, #tpu.memory_space<vmem>>, vector<16x32xbf16>
      %17 = arith.extf %16 : vector<16x32xbf16> to vector<16x32xf32>
      %18 = arith.addf %15, %17 : vector<16x32xf32>
      %cst_16 = arith.constant dense<0.000000e+00> : vector<16xf32>
      %19 = vector.multi_reduction <add>, %18, %cst_16 [1] : vector<16x32xf32> to vector<16xf32>
      %20 = vector.shape_cast %19 : vector<16xf32> to vector<16x1xf32>
      %cst_17 = arith.constant 3.200000e+01 : f32
      %21 = vector.broadcast %cst_17 : f32 to vector<16x1xf32>
      %22 = arith.divf %20, %21 : vector<16x1xf32>
      %23 = vector.broadcast %22 : vector<16x1xf32> to vector<16x32xf32>
      %24 = arith.subf %18, %23 : vector<16x32xf32>
      %25 = vector.broadcast %22 : vector<16x1xf32> to vector<16x32xf32>
      %26 = arith.subf %18, %25 : vector<16x32xf32>
      %27 = arith.mulf %24, %26 : vector<16x32xf32>
      %cst_18 = arith.constant dense<0.000000e+00> : vector<16xf32>
      %28 = vector.multi_reduction <add>, %27, %cst_18 [1] : vector<16x32xf32> to vector<16xf32>
      %29 = vector.shape_cast %28 : vector<16xf32> to vector<16x1xf32>
      %cst_19 = arith.constant 3.200000e+01 : f32
      %30 = vector.broadcast %cst_19 : f32 to vector<16x1xf32>
      %31 = arith.divf %29, %30 : vector<16x1xf32>
      %32 = vector.broadcast %22 : vector<16x1xf32> to vector<16x32xf32>
      %33 = arith.subf %18, %32 : vector<16x32xf32>
      %cst_20 = arith.constant 9.99999974E-6 : f32
      %34 = vector.broadcast %cst_20 : f32 to vector<16x1xf32>
      %35 = arith.addf %31, %34 : vector<16x1xf32>
      %36 = math.rsqrt %35 : vector<16x1xf32>
      %37 = vector.broadcast %36 : vector<16x1xf32> to vector<16x32xf32>
      %38 = arith.mulf %33, %37 : vector<16x32xf32>
      %c0_21 = arith.constant 0 : index
      %c0_22 = arith.constant 0 : index
      %39 = vector.load %arg6[%c0_21, %c0_22] : memref<1x32xf32, #tpu.memory_space<vmem>>, vector<1x32xf32>
      %40 = vector.broadcast %39 : vector<1x32xf32> to vector<16x32xf32>
      %41 = arith.mulf %38, %40 : vector<16x32xf32>
      %c0_23 = arith.constant 0 : index
      %c0_24 = arith.constant 0 : index
      %42 = vector.load %arg7[%c0_23, %c0_24] : memref<1x32xf32, #tpu.memory_space<vmem>>, vector<1x32xf32>
      %43 = vector.broadcast %42 : vector<1x32xf32> to vector<16x32xf32>
      %44 = arith.addf %41, %43 : vector<16x32xf32>
      %45 = arith.truncf %44 : vector<16x32xf32> to vector<16x32xbf16>
      %c0_25 = arith.constant 0 : index
      %c0_26 = arith.constant 0 : index
      %46 = vector.load %arg8[%c0_25, %c0_26] : memref<16x32xbf16, #tpu.memory_space<vmem>>, vector<16x32xbf16>
      tpu.vector_store %arg8[%c0_25, %c0_26], %45 {strides = array<i32>} : memref<16x32xbf16, #tpu.memory_space<vmem>>, vector<16x32xbf16>,
    } else {
    }
    return
  }
  func.func @transform_0(%arg0: i32, %arg1: i32) -> (i32, i32) {
    %c0_i32 = arith.constant 0 : i32
    return %arg0, %arg1 : i32, i32
  }
  func.func @transform_1(%arg0: i32, %arg1: i32) -> (i32, i32) {
    %c0_i32 = arith.constant 0 : i32
    %c0_i32_0 = arith.constant 0 : i32
    return %arg1, %c0_i32 : i32, i32
  }
  func.func @transform_2(%arg0: i32, %arg1: i32) -> (i32, i32) {
    %c0_i32 = arith.constant 0 : i32
    %c0_i32_0 = arith.constant 0 : i32
    %c0_i32_1 = arith.constant 0 : i32
    return %c0_i32, %c0_i32_0 : i32, i32
  }
  func.func @transform_3(%arg0: i32, %arg1: i32) -> (i32, i32) {
    %c0_i32 = arith.constant 0 : i32
    %c0_i32_0 = arith.constant 0 : i32
    return %arg0, %c0_i32 : i32, i32
  }
  func.func @transform_4(%arg0: i32, %arg1: i32) -> (i32, i32) {
    %c0_i32 = arith.constant 0 : i32
    %c0_i32_0 = arith.constant 0 : i32
    %c0_i32_1 = arith.constant 0 : i32
    return %c0_i32, %c0_i32_0 : i32, i32
  }
  func.func @transform_5(%arg0: i32, %arg1: i32) -> (i32, i32) {
    %c0_i32 = arith.constant 0 : i32
    %c0_i32_0 = arith.constant 0 : i32
    %c0_i32_1 = arith.constant 0 : i32
    return %c0_i32, %c0_i32_0 : i32, i32
  }
  func.func @transform_6(%arg0: i32, %arg1: i32) -> (i32, i32) {
    %c0_i32 = arith.constant 0 : i32
    %c0_i32_0 = arith.constant 0 : i32
    return %arg0, %c0_i32 : i32, i32
  }
}

module attributes {stable_mosaic.version = 11 : i64} {
  func.func @_linear_addln_kernel(%arg0: i32, %arg1: i32, %arg2: memref<16x32xbf16, #tpu.memory_space<vmem>>, %arg3: memref<32x32xbf16, #tpu.memory_space<vmem>>, %arg4: memref<1x32xf32, #tpu.memory_space<vmem>>, %arg5: memref<16x32xbf16, #tpu.memory_space<vmem>>, %arg6: memref<1x32xf32, #tpu.memory_space<vmem>>, %arg7: memref<1x32xf32, #tpu.memory_space<vmem>>, %arg8: memref<16x32xbf16, #tpu.memory_space<vmem>>, %arg9: memref<16x32xf32, #tpu.memory_space<vmem>>) attributes {dimension_semantics = [#tpu.dimension_semantics<parallel>, #tpu.dimension_semantics<arbitrary>], iteration_bounds = array<i64: 1, 1>, scalar_prefetch = 0 : i64, scratch_operands = 1 : i64, tpu.core_type = #tpu.core_type<tc>, window_params = [{transform_indices = @transform_0, window_bounds = array<i64: 16, 32>}, {transform_indices = @transform_1, window_bounds = array<i64: 32, 32>}, {pipeline_mode = #tpu.pipeline_mode<synchronous>, transform_indices = @transform_2, window_bounds = array<i64: 1, 32>}, {transform_indices = @transform_3, window_bounds = array<i64: 16, 32>}, {pipeline_mode = #tpu.pipeline_mode<synchronous>, transform_indices = @transform_4, window_bounds = array<i64: 1, 32>}, {pipeline_mode = #tpu.pipeline_mode<synchronous>, transform_indices = @transform_5, window_bounds = array<i64: 1, 32>}, {transform_indices = @transform_6, window_bounds = array<i64: 16, 32>}]} {
    %c0_i32 = arith.constant 0 : i32
    %0 = arith.cmpi eq, %arg1, %c0_i32 : i32
    %1 = arith.extui %0 : i1 to i32
    %c0_i32_0 = arith.constant 0 : i32
    %2 = arith.cmpi ne, %1, %c0_i32_0 : i32
    scf.if %2 {
      %cst_10 = arith.constant 0.000000e+00 : f32
      %12 = vector.broadcast %cst_10 : f32 to vector<16x32xf32>
      %c0_11 = arith.constant 0 : index
      %c0_12 = arith.constant 0 : index
      %13 = vector.load %arg9[%c0_11, %c0_12] : memref<16x32xf32, #tpu.memory_space<vmem>>, vector<16x32xf32>
      tpu.vector_store %arg9[%c0_11, %c0_12], %12 {strides = array<i32>} : memref<16x32xf32, #tpu.memory_space<vmem>>, vector<16x32xf32>,
    } else {
    }
    %c0 = arith.constant 0 : index
    %c0_1 = arith.constant 0 : index
    %3 = vector.load %arg9[%c0, %c0_1] : memref<16x32xf32, #tpu.memory_space<vmem>>, vector<16x32xf32>
    %c0_2 = arith.constant 0 : index
    %c0_3 = arith.constant 0 : index
    %4 = vector.load %arg2[%c0_2, %c0_3] : memref<16x32xbf16, #tpu.memory_space<vmem>>, vector<16x32xbf16>
    %c0_4 = arith.constant 0 : index
    %c0_5 = arith.constant 0 : index
    %5 = vector.load %arg3[%c0_4, %c0_5] : memref<32x32xbf16, #tpu.memory_space<vmem>>, vector<32x32xbf16>
    %cst = arith.constant dense<0.000000e+00> : vector<16x32xf32>
    %6 = tpu.matmul %4, %5, %cst {dimension_numbers = #tpu.dot_dimension_numbers<[1], [0], [0], [1], [0, 0, 1, 1], [], []>} : vector<16x32xbf16>, vector<32x32xbf16>, vector<16x32xf32> -> vector<16x32xf32>
    %7 = arith.addf %3, %6 : vector<16x32xf32>
    %c0_6 = arith.constant 0 : index
    %c0_7 = arith.constant 0 : index
    %8 = vector.load %arg9[%c0_6, %c0_7] : memref<16x32xf32, #tpu.memory_space<vmem>>, vector<16x32xf32>
    tpu.vector_store %arg9[%c0_6, %c0_7], %7 {strides = array<i32>} : memref<16x32xf32, #tpu.memory_space<vmem>>, vector<16x32xf32>,
    %c0_i32_8 = arith.constant 0 : i32
    %9 = arith.cmpi eq, %arg1, %c0_i32_8 : i32
    %10 = arith.extui %9 : i1 to i32
    %c0_i32_9 = arith.constant 0 : i32
    %11 = arith.cmpi ne, %10, %c0_i32_9 : i32
    scf.if %11 {
      %c0_10 = arith.constant 0 : index
      %c0_11 = arith.constant 0 : index
      %12 = vector.load %arg9[%c0_10, %c0_11] : memref<16x32xf32, #tpu.memory_space<vmem>>, vector<16x32xf32>
      %c0_12 = arith.constant 0 : index
      %c0_13 = arith.constant 0 : index
      %13 = vector.load %arg4[%c0_12, %c0_13] : memref<1x32xf32, #tpu.memory_space<vmem>>, vector<1x32xf32>
      %14 = vector.broadcast %13 : vector<1x32xf32> to vector<16x32xf32>
      %15 = arith.addf %12, %14 : vector<16x32xf32>
      %c0_14 = arith.constant 0 : index
      %c0_15 = arith.constant 0 : index
      %16 = vector.load %arg5[%c0_14, %c0_15] : memref<16x32xbf16, #tpu.memory_space<vmem>>, vector<16x32xbf16>
      %17 = arith.extf %16 : vector<16x32xbf16> to vector<16x32xf32>
      %18 = arith.addf %15, %17 : vector<16x32xf32>
      %cst_16 = arith.constant dense<0.000000e+00> : vector<16xf32>
      %19 = vector.multi_reduction <add>, %18, %cst_16 [1] : vector<16x32xf32> to vector<16xf32>
      %20 = vector.shape_cast %19 : vector<16xf32> to vector<16x1xf32>
      %cst_17 = arith.constant 3.200000e+01 : f32
      %21 = vector.broadcast %cst_17 : f32 to vector<16x1xf32>
      %22 = arith.divf %20, %21 : vector<16x1xf32>
      %23 = vector.broadcast %22 : vector<16x1xf32> to vector<16x32xf32>
      %24 = arith.subf %18, %23 : vector<16x32xf32>
      %25 = vector.broadcast %22 : vector<16x1xf32> to vector<16x32xf32>
      %26 = arith.subf %18, %25 : vector<16x32xf32>
      %27 = arith.mulf %24, %26 : vector<16x32xf32>
      %cst_18 = arith.constant dense<0.000000e+00> : vector<16xf32>
      %28 = vector.multi_reduction <add>, %27, %cst_18 [1] : vector<16x32xf32> to vector<16xf32>
      %29 = vector.shape_cast %28 : vector<16xf32> to vector<16x1xf32>
      %cst_19 = arith.constant 3.200000e+01 : f32
      %30 = vector.broadcast %cst_19 : f32 to vector<16x1xf32>
      %31 = arith.divf %29, %30 : vector<16x1xf32>
      %32 = vector.broadcast %22 : vector<16x1xf32> to vector<16x32xf32>
      %33 = arith.subf %18, %32 : vector<16x32xf32>
      %cst_20 = arith.constant 9.99999974E-6 : f32
      %34 = vector.broadcast %cst_20 : f32 to vector<16x1xf32>
      %35 = arith.addf %31, %34 : vector<16x1xf32>
      %36 = math.rsqrt %35 : vector<16x1xf32>
      %37 = vector.broadcast %36 : vector<16x1xf32> to vector<16x32xf32>
      %38 = arith.mulf %33, %37 : vector<16x32xf32>
      %c0_21 = arith.constant 0 : index
      %c0_22 = arith.constant 0 : index
      %39 = vector.load %arg6[%c0_21, %c0_22] : memref<1x32xf32, #tpu.memory_space<vmem>>, vector<1x32xf32>
      %40 = vector.broadcast %39 : vector<1x32xf32> to vector<16x32xf32>
      %41 = arith.mulf %38, %40 : vector<16x32xf32>
      %c0_23 = arith.constant 0 : index
      %c0_24 = arith.constant 0 : index
      %42 = vector.load %arg7[%c0_23, %c0_24] : memref<1x32xf32, #tpu.memory_space<vmem>>, vector<1x32xf32>
      %43 = vector.broadcast %42 : vector<1x32xf32> to vector<16x32xf32>
      %44 = arith.addf %41, %43 : vector<16x32xf32>
      %45 = arith.truncf %44 : vector<16x32xf32> to vector<16x32xbf16>
      %c0_25 = arith.constant 0 : index
      %c0_26 = arith.constant 0 : index
      %46 = vector.load %arg8[%c0_25, %c0_26] : memref<16x32xbf16, #tpu.memory_space<vmem>>, vector<16x32xbf16>
      tpu.vector_store %arg8[%c0_25, %c0_26], %45 {strides = array<i32>} : memref<16x32xbf16, #tpu.memory_space<vmem>>, vector<16x32xbf16>,
    } else {
    }
    return
  }
  func.func @transform_0(%arg0: i32, %arg1: i32) -> (i32, i32) {
    %c0_i32 = arith.constant 0 : i32
    return %arg0, %arg1 : i32, i32
  }
  func.func @transform_1(%arg0: i32, %arg1: i32) -> (i32, i32) {
    %c0_i32 = arith.constant 0 : i32
    %c0_i32_0 = arith.constant 0 : i32
    return %arg1, %c0_i32 : i32, i32
  }
  func.func @transform_2(%arg0: i32, %arg1: i32) -> (i32, i32) {
    %c0_i32 = arith.constant 0 : i32
    %c0_i32_0 = arith.constant 0 : i32
    %c0_i32_1 = arith.constant 0 : i32
    return %c0_i32, %c0_i32_0 : i32, i32
  }
  func.func @transform_3(%arg0: i32, %arg1: i32) -> (i32, i32) {
    %c0_i32 = arith.constant 0 : i32
    %c0_i32_0 = arith.constant 0 : i32
    return %arg0, %c0_i32 : i32, i32
  }
  func.func @transform_4(%arg0: i32, %arg1: i32) -> (i32, i32) {
    %c0_i32 = arith.constant 0 : i32
    %c0_i32_0 = arith.constant 0 : i32
    %c0_i32_1 = arith.constant 0 : i32
    return %c0_i32, %c0_i32_0 : i32, i32
  }
  func.func @transform_5(%arg0: i32, %arg1: i32) -> (i32, i32) {
    %c0_i32 = arith.constant 0 : i32
    %c0_i32_0 = arith.constant 0 : i32
    %c0_i32_1 = arith.constant 0 : i32
    return %c0_i32, %c0_i32_0 : i32, i32
  }
  func.func @transform_6(%arg0: i32, %arg1: i32) -> (i32, i32) {
    %c0_i32 = arith.constant 0 : i32
    %c0_i32_0 = arith.constant 0 : i32
    return %arg0, %c0_i32 : i32, i32
  }
}

module attributes {stable_mosaic.version = 11 : i64} {
  func.func @_linear_kernel(%arg0: i32, %arg1: i32, %arg2: i32, %arg3: memref<16x32xbf16, #tpu.memory_space<vmem>>, %arg4: memref<32x64xbf16, #tpu.memory_space<vmem>>, %arg5: memref<1x64xf32, #tpu.memory_space<vmem>>, %arg6: memref<16x64xbf16, #tpu.memory_space<vmem>>, %arg7: memref<16x64xf32, #tpu.memory_space<vmem>>) attributes {dimension_semantics = [#tpu.dimension_semantics<parallel>, #tpu.dimension_semantics<parallel>, #tpu.dimension_semantics<arbitrary>], iteration_bounds = array<i64: 1, 1, 1>, scalar_prefetch = 0 : i64, scratch_operands = 1 : i64, tpu.core_type = #tpu.core_type<tc>, window_params = [{transform_indices = @transform_0, window_bounds = array<i64: 16, 32>}, {transform_indices = @transform_1, window_bounds = array<i64: 32, 64>}, {transform_indices = @transform_2, window_bounds = array<i64: 1, 64>}, {transform_indices = @transform_3, window_bounds = array<i64: 16, 64>}]} {
    %c0_i32 = arith.constant 0 : i32
    %0 = arith.cmpi eq, %arg2, %c0_i32 : i32
    %1 = arith.extui %0 : i1 to i32
    %c0_i32_0 = arith.constant 0 : i32
    %2 = arith.cmpi ne, %1, %c0_i32_0 : i32
    scf.if %2 {
      %cst_10 = arith.constant 0.000000e+00 : f32
      %12 = vector.broadcast %cst_10 : f32 to vector<16x64xf32>
      %c0_11 = arith.constant 0 : index
      %c0_12 = arith.constant 0 : index
      %13 = vector.load %arg7[%c0_11, %c0_12] : memref<16x64xf32, #tpu.memory_space<vmem>>, vector<16x64xf32>
      tpu.vector_store %arg7[%c0_11, %c0_12], %12 {strides = array<i32>} : memref<16x64xf32, #tpu.memory_space<vmem>>, vector<16x64xf32>,
    } else {
    }
    %c0 = arith.constant 0 : index
    %c0_1 = arith.constant 0 : index
    %3 = vector.load %arg7[%c0, %c0_1] : memref<16x64xf32, #tpu.memory_space<vmem>>, vector<16x64xf32>
    %c0_2 = arith.constant 0 : index
    %c0_3 = arith.constant 0 : index
    %4 = vector.load %arg3[%c0_2, %c0_3] : memref<16x32xbf16, #tpu.memory_space<vmem>>, vector<16x32xbf16>
    %c0_4 = arith.constant 0 : index
    %c0_5 = arith.constant 0 : index
    %5 = vector.load %arg4[%c0_4, %c0_5] : memref<32x64xbf16, #tpu.memory_space<vmem>>, vector<32x64xbf16>
    %cst = arith.constant dense<0.000000e+00> : vector<16x64xf32>
    %6 = tpu.matmul %4, %5, %cst {dimension_numbers = #tpu.dot_dimension_numbers<[1], [0], [0], [1], [0, 0, 1, 1], [], []>} : vector<16x32xbf16>, vector<32x64xbf16>, vector<16x64xf32> -> vector<16x64xf32>
    %7 = arith.addf %3, %6 : vector<16x64xf32>
    %c0_6 = arith.constant 0 : index
    %c0_7 = arith.constant 0 : index
    %8 = vector.load %arg7[%c0_6, %c0_7] : memref<16x64xf32, #tpu.memory_space<vmem>>, vector<16x64xf32>
    tpu.vector_store %arg7[%c0_6, %c0_7], %7 {strides = array<i32>} : memref<16x64xf32, #tpu.memory_space<vmem>>, vector<16x64xf32>,
    %c0_i32_8 = arith.constant 0 : i32
    %9 = arith.cmpi eq, %arg2, %c0_i32_8 : i32
    %10 = arith.extui %9 : i1 to i32
    %c0_i32_9 = arith.constant 0 : i32
    %11 = arith.cmpi ne, %10, %c0_i32_9 : i32
    scf.if %11 {
      %c0_10 = arith.constant 0 : index
      %c0_11 = arith.constant 0 : index
      %12 = vector.load %arg7[%c0_10, %c0_11] : memref<16x64xf32, #tpu.memory_space<vmem>>, vector<16x64xf32>
      %c0_12 = arith.constant 0 : index
      %c0_13 = arith.constant 0 : index
      %13 = vector.load %arg5[%c0_12, %c0_13] : memref<1x64xf32, #tpu.memory_space<vmem>>, vector<1x64xf32>
      %14 = vector.broadcast %13 : vector<1x64xf32> to vector<16x64xf32>
      %15 = arith.addf %12, %14 : vector<16x64xf32>
      %16 = arith.truncf %15 : vector<16x64xf32> to vector<16x64xbf16>
      %c0_14 = arith.constant 0 : index
      %c0_15 = arith.constant 0 : index
      %17 = vector.load %arg6[%c0_14, %c0_15] : memref<16x64xbf16, #tpu.memory_space<vmem>>, vector<16x64xbf16>
      tpu.vector_store %arg6[%c0_14, %c0_15], %16 {strides = array<i32>} : memref<16x64xbf16, #tpu.memory_space<vmem>>, vector<16x64xbf16>,
    } else {
    }
    return
  }
  func.func @transform_0(%arg0: i32, %arg1: i32, %arg2: i32) -> (i32, i32) {
    %c0_i32 = arith.constant 0 : i32
    return %arg0, %arg2 : i32, i32
  }
  func.func @transform_1(%arg0: i32, %arg1: i32, %arg2: i32) -> (i32, i32) {
    %c0_i32 = arith.constant 0 : i32
    return %arg2, %arg1 : i32, i32
  }
  func.func @transform_2(%arg0: i32, %arg1: i32, %arg2: i32) -> (i32, i32) {
    %c0_i32 = arith.constant 0 : i32
    %c0_i32_0 = arith.constant 0 : i32
    return %c0_i32, %arg1 : i32, i32
  }
  func.func @transform_3(%arg0: i32, %arg1: i32, %arg2: i32) -> (i32, i32) {
    %c0_i32 = arith.constant 0 : i32
    return %arg0, %arg1 : i32, i32
  }
}

module attributes {stable_mosaic.version = 11 : i64} {
  func.func @_linear_kernel(%arg0: i32, %arg1: i32, %arg2: i32, %arg3: memref<16x32xbf16, #tpu.memory_space<vmem>>, %arg4: memref<32x128xbf16, #tpu.memory_space<vmem>>, %arg5: memref<1x128xf32, #tpu.memory_space<vmem>>, %arg6: memref<16x128xf32, #tpu.memory_space<vmem>>, %arg7: memref<16x128xf32, #tpu.memory_space<vmem>>) attributes {dimension_semantics = [#tpu.dimension_semantics<parallel>, #tpu.dimension_semantics<parallel>, #tpu.dimension_semantics<arbitrary>], iteration_bounds = array<i64: 1, 1, 1>, scalar_prefetch = 0 : i64, scratch_operands = 1 : i64, tpu.core_type = #tpu.core_type<tc>, window_params = [{transform_indices = @transform_0, window_bounds = array<i64: 16, 32>}, {transform_indices = @transform_1, window_bounds = array<i64: 32, 128>}, {transform_indices = @transform_2, window_bounds = array<i64: 1, 128>}, {transform_indices = @transform_3, window_bounds = array<i64: 16, 128>}]} {
    %c0_i32 = arith.constant 0 : i32
    %0 = arith.cmpi eq, %arg2, %c0_i32 : i32
    %1 = arith.extui %0 : i1 to i32
    %c0_i32_0 = arith.constant 0 : i32
    %2 = arith.cmpi ne, %1, %c0_i32_0 : i32
    scf.if %2 {
      %cst_10 = arith.constant 0.000000e+00 : f32
      %12 = vector.broadcast %cst_10 : f32 to vector<16x128xf32>
      %c0_11 = arith.constant 0 : index
      %c0_12 = arith.constant 0 : index
      %13 = vector.load %arg7[%c0_11, %c0_12] : memref<16x128xf32, #tpu.memory_space<vmem>>, vector<16x128xf32>
      tpu.vector_store %arg7[%c0_11, %c0_12], %12 {strides = array<i32>} : memref<16x128xf32, #tpu.memory_space<vmem>>, vector<16x128xf32>,
    } else {
    }
    %c0 = arith.constant 0 : index
    %c0_1 = arith.constant 0 : index
    %3 = vector.load %arg7[%c0, %c0_1] : memref<16x128xf32, #tpu.memory_space<vmem>>, vector<16x128xf32>
    %c0_2 = arith.constant 0 : index
    %c0_3 = arith.constant 0 : index
    %4 = vector.load %arg3[%c0_2, %c0_3] : memref<16x32xbf16, #tpu.memory_space<vmem>>, vector<16x32xbf16>
    %c0_4 = arith.constant 0 : index
    %c0_5 = arith.constant 0 : index
    %5 = vector.load %arg4[%c0_4, %c0_5] : memref<32x128xbf16, #tpu.memory_space<vmem>>, vector<32x128xbf16>
    %cst = arith.constant dense<0.000000e+00> : vector<16x128xf32>
    %6 = tpu.matmul %4, %5, %cst {dimension_numbers = #tpu.dot_dimension_numbers<[1], [0], [0], [1], [0, 0, 1, 1], [], []>} : vector<16x32xbf16>, vector<32x128xbf16>, vector<16x128xf32> -> vector<16x128xf32>
    %7 = arith.addf %3, %6 : vector<16x128xf32>
    %c0_6 = arith.constant 0 : index
    %c0_7 = arith.constant 0 : index
    %8 = vector.load %arg7[%c0_6, %c0_7] : memref<16x128xf32, #tpu.memory_space<vmem>>, vector<16x128xf32>
    tpu.vector_store %arg7[%c0_6, %c0_7], %7 {strides = array<i32>} : memref<16x128xf32, #tpu.memory_space<vmem>>, vector<16x128xf32>,
    %c0_i32_8 = arith.constant 0 : i32
    %9 = arith.cmpi eq, %arg2, %c0_i32_8 : i32
    %10 = arith.extui %9 : i1 to i32
    %c0_i32_9 = arith.constant 0 : i32
    %11 = arith.cmpi ne, %10, %c0_i32_9 : i32
    scf.if %11 {
      %c0_10 = arith.constant 0 : index
      %c0_11 = arith.constant 0 : index
      %12 = vector.load %arg7[%c0_10, %c0_11] : memref<16x128xf32, #tpu.memory_space<vmem>>, vector<16x128xf32>
      %c0_12 = arith.constant 0 : index
      %c0_13 = arith.constant 0 : index
      %13 = vector.load %arg5[%c0_12, %c0_13] : memref<1x128xf32, #tpu.memory_space<vmem>>, vector<1x128xf32>
      %14 = vector.broadcast %13 : vector<1x128xf32> to vector<16x128xf32>
      %15 = arith.addf %12, %14 : vector<16x128xf32>
      %c0_14 = arith.constant 0 : index
      %c0_15 = arith.constant 0 : index
      %16 = vector.load %arg6[%c0_14, %c0_15] : memref<16x128xf32, #tpu.memory_space<vmem>>, vector<16x128xf32>
      tpu.vector_store %arg6[%c0_14, %c0_15], %15 {strides = array<i32>} : memref<16x128xf32, #tpu.memory_space<vmem>>, vector<16x128xf32>,
    } else {
    }
    return
  }
  func.func @transform_0(%arg0: i32, %arg1: i32, %arg2: i32) -> (i32, i32) {
    %c0_i32 = arith.constant 0 : i32
    return %arg0, %arg2 : i32, i32
  }
  func.func @transform_1(%arg0: i32, %arg1: i32, %arg2: i32) -> (i32, i32) {
    %c0_i32 = arith.constant 0 : i32
    return %arg2, %arg1 : i32, i32
  }
  func.func @transform_2(%arg0: i32, %arg1: i32, %arg2: i32) -> (i32, i32) {
    %c0_i32 = arith.constant 0 : i32
    %c0_i32_0 = arith.constant 0 : i32
    return %c0_i32, %arg1 : i32, i32
  }
  func.func @transform_3(%arg0: i32, %arg1: i32, %arg2: i32) -> (i32, i32) {
    %c0_i32 = arith.constant 0 : i32
    return %arg0, %arg1 : i32, i32
  }
}

</mosaic_0001>

<llo_original>
// kernel: transformer_forward.39
$region0: #{transformer_forward.39}
  #allocation0 [shape = 'u32[]', space=smem, size = 0x4, offset = 0x4, fixed_abs, tag = 'smem constant byte address 0x4 - core index']
  #allocation1 [shape = 'u32[144,128]{1,0:T(1,128)}', space=vmem, size = 0x12000, scoped, tag = 'internal scratch']
  #allocation2 [shape = 'f32[16,96]{1,0:T(8,128)}', space=vmem, size = 0x2000, scoped, tag = 'scratch operand']
  %s0 = inlined_call_operand.vmem [shape: bf16[16,32], index: 0, kind: input, shape index: {}]
  %s1 = inlined_call_operand.vmem [shape: bf16[32,96], index: 1, kind: input, shape index: {}]
  %s2 = inlined_call_operand.vmem [shape: f32[1,96], index: 2, kind: input, shape index: {}]
  %s3 = inlined_call_operand.vmem [shape: bf16[16,96], index: 3, kind: output, shape index: {}]
  %s4 = sld [smem:[#allocation0]]
  $region30: #{transformer_forward.39} parent=0
    _
  %s6 = ssub.s32 1, %s4
  %s7 = scalar_select 0, %s6, %s4
  // Predicated region
  $region2: #{transformer_forward.39} parent=0 // pred_check
    _
  $region3: #{transformer_forward.39} parent=0 // pred_check_branch
    %9 = sbr.rel (0) target = $region5
  $region4: #{transformer_forward.39} parent=0 // pred_region
    _
  $region5: #{transformer_forward.39} parent=0 // pred_fallthru
    _
  // Predicated region
  $region6: #{transformer_forward.39} parent=0 // pred_check
    _
  $region7: #{transformer_forward.39} parent=0 // pred_check_branch
    %11 = sbr.rel (0) target = $region9
  $region8: #{transformer_forward.39} parent=0 // pred_region
    _
  $region9: #{transformer_forward.39} parent=0 // pred_fallthru
    _
  // Predicated region
  $region10: #{transformer_forward.39} parent=0 // pred_check
    _
  $region11: #{transformer_forward.39} parent=0 // pred_check_branch
    %13 = sbr.rel (0) target = $region13
  $region12: #{transformer_forward.39} parent=0 // pred_region
    _
  $region13: #{transformer_forward.39} parent=0 // pred_fallthru
    _
  %p15 = scmp.eq.s32.totalorder 0, 0
  // Predicated region
  $region14: #{transformer_forward.39} parent=0 // pred_check
    %p16 = pneg %p15
  $region15: #{transformer_forward.39} parent=0 // pred_check_branch
    %18 = sbr.rel (%p16) target = $region17
  $region16: #{transformer_forward.39} parent=0 // pred_region
    %vm19 = vcmask 785408
    %20 = vst.msk [vmem:[#allocation2] sm:$0xff] %vm19, 0.0
    %21 = vst.msk [vmem:[#allocation2 + $0x8] sm:$0xff] %vm19, 0.0
  $region17: #{transformer_forward.39} parent=0 // pred_fallthru
    _
  %v22 = vld [vmem:[#allocation2] sm:$0xff]
  %v23 = vld [vmem:[#allocation2 + $0x8] sm:$0xff]
  %v24 = vld [vmem:[%s0] sm:$0xf]
  %v25 = vld [vmem:[%s0 + $0x4] sm:$0xf]
  %v26 = vld [vmem:[%s1] sm:$0xf]
  %v27 = vld [vmem:[%s1 + $0x4] sm:$0xf]
  %v28 = vld [vmem:[%s1 + $0x8] sm:$0xf]
  %v29 = vld [vmem:[%s1 + $0xc] sm:$0xf]
  %v32 = vunpack.c.l.b16 %v24
  %v33 = vunpack.c.l.b16 %v25
  %v34 = vpack.c.b16 %v33, %v32
  %v39 = vunpack.c.l.b16 %v26
  %v40 = vunpack.c.l.b16 %v27
  %v41 = vunpack.c.l.b16 %v28
  %v42 = vunpack.c.l.b16 %v29
  %v43 = vpack.c.b16 %v40, %v39
  %v44 = vpack.c.b16 %v42, %v41
  %vm47 = vcmask 261120
  %v49 = vsel %vm47, %v34, 0
  %51 = vmatprep.subr.bf16.mxu0 0
  %52 = vmatpush1.bf16.msra.mxu0 %v43
  %53 = vmatprep.subr.bf16.mxu0 0
  %54 = vmatpush1.bf16.msra.mxu0 %v44
  %55 = vmatprep.subr.bf16.mxu0 0
  %56 = vmatpush1.bf16.msra.mxu0 0
  %57 = vmatprep.subr.bf16.mxu0 0
  %58 = vmatpush1.bf16.msra.mxu0 0
  %59 = vmatprep.subr.bf16.mxu0 0
  %60 = vmatpush1.bf16.msra.mxu0 0
  %61 = vmatprep.subr.bf16.mxu0 0
  %62 = vmatpush1.bf16.msra.mxu0 0
  %63 = vmatprep.subr.bf16.mxu0 0
  %64 = vmatpush1.bf16.msra.mxu0 0
  %65 = vmatprep.subr.bf16.mxu0 0
  %66 = vmatpush1.bf16.msra.mxu0 0
  %67 = vmatprep.subr.bf16.mxu0 0
  %68 = vmatpush1.bf16.msra.mxu0 0
  %69 = vmatprep.subr.bf16.mxu0 0
  %70 = vmatpush1.bf16.msra.mxu0 0
  %71 = vmatprep.subr.bf16.mxu0 0
  %72 = vmatpush1.bf16.msra.mxu0 0
  %73 = vmatprep.subr.bf16.mxu0 0
  %74 = vmatpush1.bf16.msra.mxu0 0
  %75 = vmatprep.subr.bf16.mxu0 0
  %76 = vmatpush1.bf16.msra.mxu0 0
  %77 = vmatprep.subr.bf16.mxu0 0
  %78 = vmatpush1.bf16.msra.mxu0 0
  %79 = vmatprep.subr.bf16.mxu0 0
  %80 = vmatpush1.bf16.msra.mxu0 0
  %81 = vmatprep.subr.bf16.mxu0 0
  %82 = vmatpush1.bf16.msra.mxu0 0
  %83 = vmatprep.mubr.bf16.mxu0 0
  %84 = vmatmul.mubr.bf16.gmra.mrb[0].mxu0 %v49
  %v85 = vpop.f32.mrb[0].mxu0
  %v86 = vadd.f32 0.0, %v85
  %v87 = vpop.f32.mrb[0].mxu0
  %v88 = vpop.f32.mrb[0].mxu0
  %v89 = vadd.f32 0.0, %v88
  %v90 = vpop.f32.mrb[0].mxu0
  %91 = vdwg.mxu0
  %v92 = vadd.f32 %v22, %v86
  %v93 = vadd.f32 %v23, %v89
  %vm94 = vcmask 785408
  %95 = vst.msk [vmem:[#allocation2] sm:$0xff] %vm94, %v92
  %96 = vst.msk [vmem:[#allocation2 + $0x8] sm:$0xff] %vm94, %v93
  // Predicated region
  $region18: #{transformer_forward.39} parent=0 // pred_check
    %p97 = pneg %p15
  $region19: #{transformer_forward.39} parent=0 // pred_check_branch
    %99 = sbr.rel (%p97) target = $region21
  $region20: #{transformer_forward.39} parent=0 // pred_region
    %v100 = vld [vmem:[#allocation2] sm:$0xff]
    %v101 = vld [vmem:[#allocation2 + $0x8] sm:$0xff]
    %v102 = vld [vmem:[%s2] sm:$0x1]
    %v104 = vlaneseq
    %v105 = vshrl.u32 %v104, 7
    %v106 = vsub.s32 0, %v105
    %v107 = vrot.slane %v102, %v106
    %v109 = vadd.f32 %v100, %v107
    %v110 = vadd.f32 %v101, %v107
    %v111 = vpack.c.bf16 %v110, %v109
    %v113 = vunpack.c.l.b16 %v111
    %v114 = vunpack.c.h.b16 %v111
    %v115 = vpack.c.b16 %v113, %v113
    %v116 = vpack.c.b16 %v114, %v114
    %vm119 = vcmask 781312
    %120 = vst.msk [vmem:[%s3] sm:$0xf] %vm119, %v115
    %121 = vst.msk [vmem:[%s3 + $0x4] sm:$0xf] %vm119, %v116
  $region21: #{transformer_forward.39} parent=0 // pred_fallthru
    _
  // Predicated region
  $region22: #{transformer_forward.39} parent=0 // pred_check
    _
  $region23: #{transformer_forward.39} parent=0 // pred_check_branch
    %123 = sbr.rel (0) target = $region25
  $region24: #{transformer_forward.39} parent=0 // pred_region
    _
  $region25: #{transformer_forward.39} parent=0 // pred_fallthru
    _
  // Predicated region
  $region26: #{transformer_forward.39} parent=0 // pred_check
    _
  $region27: #{transformer_forward.39} parent=0 // pred_check_branch
    %125 = sbr.rel (0) target = $region29
  $region28: #{transformer_forward.39} parent=0 // pred_region
    _
  $region29: #{transformer_forward.39} parent=0 // pred_fallthru
    _

// kernel: transformer_forward.40
$region0: #{transformer_forward.40}
  #allocation0 [shape = 'u32[]', space=smem, size = 0x4, offset = 0x4, fixed_abs, tag = 'smem constant byte address 0x4 - core index']
  #allocation1 [shape = 'u32[144,128]{1,0:T(1,128)}', space=vmem, size = 0x12000, scoped, tag = 'internal scratch']
  %s0 = inlined_call_operand.vmem [shape: bf16[2,4,8,8], index: 0, kind: input, shape index: {}]
  %s1 = inlined_call_operand.vmem [shape: bf16[2,4,8,8], index: 1, kind: input, shape index: {}]
  %s2 = inlined_call_operand.vmem [shape: bf16[2,4,8,8], index: 2, kind: input, shape index: {}]
  %s3 = inlined_call_operand.vmem [shape: f32[2,1,8], index: 3, kind: input, shape index: {}]
  %s4 = inlined_call_operand.vmem [shape: bf16[2,4,8,8], index: 4, kind: output, shape index: {}]
  %s5 = sld [smem:[#allocation0]]
  $region49: #{transformer_forward.40} parent=0
    _
  %s7 = ssub.s32 1, %s5
  %s8 = scalar_select 0, %s7, %s5
  loop: start=0, step=1, limit=10
  $region2: #{transformer_forward.40} parent=0 // loop_pre_header
    _
  $region3: #{transformer_forward.40} parent=0 // loop_header
    %s10 = sphi 0, %s14
    %p11 = scmp.ge.s32.totalorder %s10, 10
    %s17 = sphi 0, %s29
    %s18 = sphi 0, %s25
    %s19 = sphi 0, %s17
    %s20 = sphi 0, %s18
    %s21 = sphi 0, %s19
    %s22 = sphi 0, %s20
    %s34 = sphi 0, %s36
    %s37 = sphi 0, %s34
    %s38 = sphi 0, %s37
    %s54 = sphi 0, %s38
    %s62 = sphi 0, %s64
    %s65 = sphi 0, %s62
    %s66 = sphi 0, %s65
    %s82 = sphi 0, %s66
    %s90 = sphi 0, %s92
    %s93 = sphi 0, %s90
    %s94 = sphi 0, %s93
    %s110 = sphi 0, %s94
    %s116 = sphi 0, %s118
    %s119 = sphi 0, %s116
    %s120 = sphi 0, %s119
    %s136 = sphi 0, %s120
    %s144 = sphi 0, %s146
    %s147 = sphi 0, %s144
    %s148 = sphi 0, %s147
    %s164 = sphi 0, %s148
  $region4: #{transformer_forward.40} parent=0 // loop_header_branch
    %13 = sbr.rel (%p11) target = $region8
  $region5: #{transformer_forward.40} parent=0 // loop_body
    %s15 = ssub.s32 %s10, 1
    %s16 = ssub.s32 %s10, 2
    %s23 = sadd.s32 1, %s18
    %p24 = scmp.ge.s32.totalorder %s23, 4
    %s25 = scalar_select %p24, 0, %s23
    %s26 = sadd.s32 1, %s17
    %s27 = scalar_select %p24, %s26, %s17
    %p28 = scmp.ge.s32.totalorder %s27, 2
    %s29 = scalar_select %p28, 0, %s27
    %s30 = ssub.s32 %s17, %s29
    %s31 = ssub.s32 %s18, %s25
    %s32 = sor.u32 %s30, %s31
    %p33 = scmp.eq.s32.totalorder %s32, 0
    %s35 = sadd.s32 %s34, 1
    %s36 = scalar_select %p33, %s34, %s35
    %p39 = pneg %p33
    %p40 = scmp.eq.s32.totalorder %s10, 7
    %p41 = por %p39, %p40
    %p42 = scmp.ne.s32.totalorder %s34, %s37
    %p43 = scmp.eq.s32.totalorder %s10, 0
    %p44 = por %p42, %p43
    %p45 = scmp.ne.s32.totalorder %s34, %s37
    %p46 = scmp.eq.s32.totalorder %s15, 7
    %p47 = por %p45, %p46
    %p48 = scmp.ne.s32.totalorder %s37, %s38
    %p49 = scmp.eq.s32.totalorder %s15, 0
    %p50 = por %p48, %p49
    %p51 = scmp.ne.s32.totalorder %s37, %s38
    %p52 = scmp.eq.s32.totalorder %s16, 7
    %p53 = por %p51, %p52
    %p55 = scmp.ne.s32.totalorder %s38, %s54
    %p56 = scmp.eq.s32.totalorder %s16, 0
    %p57 = por %p55, %p56
    %s58 = ssub.s32 %s17, %s29
    %s59 = ssub.s32 %s18, %s25
    %s60 = sor.u32 %s58, %s59
    %p61 = scmp.eq.s32.totalorder %s60, 0
    %s63 = sadd.s32 %s62, 1
    %s64 = scalar_select %p61, %s62, %s63
    %p67 = pneg %p61
    %p68 = scmp.eq.s32.totalorder %s10, 7
    %p69 = por %p67, %p68
    %p70 = scmp.ne.s32.totalorder %s62, %s65
    %p71 = scmp.eq.s32.totalorder %s10, 0
    %p72 = por %p70, %p71
    %p73 = scmp.ne.s32.totalorder %s62, %s65
    %p74 = scmp.eq.s32.totalorder %s15, 7
    %p75 = por %p73, %p74
    %p76 = scmp.ne.s32.totalorder %s65, %s66
    %p77 = scmp.eq.s32.totalorder %s15, 0
    %p78 = por %p76, %p77
    %p79 = scmp.ne.s32.totalorder %s65, %s66
    %p80 = scmp.eq.s32.totalorder %s16, 7
    %p81 = por %p79, %p80
    %p83 = scmp.ne.s32.totalorder %s66, %s82
    %p84 = scmp.eq.s32.totalorder %s16, 0
    %p85 = por %p83, %p84
    %s86 = ssub.s32 %s17, %s29
    %s87 = ssub.s32 %s18, %s25
    %s88 = sor.u32 %s86, %s87
    %p89 = scmp.eq.s32.totalorder %s88, 0
    %s91 = sadd.s32 %s90, 1
    %s92 = scalar_select %p89, %s90, %s91
    %p95 = pneg %p89
    %p96 = scmp.eq.s32.totalorder %s10, 7
    %p97 = por %p95, %p96
    %p98 = scmp.ne.s32.totalorder %s90, %s93
    %p99 = scmp.eq.s32.totalorder %s10, 0
    %p100 = por %p98, %p99
    %p101 = scmp.ne.s32.totalorder %s90, %s93
    %p102 = scmp.eq.s32.totalorder %s15, 7
    %p103 = por %p101, %p102
    %p104 = scmp.ne.s32.totalorder %s93, %s94
    %p105 = scmp.eq.s32.totalorder %s15, 0
    %p106 = por %p104, %p105
    %p107 = scmp.ne.s32.totalorder %s93, %s94
    %p108 = scmp.eq.s32.totalorder %s16, 7
    %p109 = por %p107, %p108
    %p111 = scmp.ne.s32.totalorder %s94, %s110
    %p112 = scmp.eq.s32.totalorder %s16, 0
    %p113 = por %p111, %p112
    %s114 = ssub.s32 %s17, %s29
    %p115 = scmp.eq.s32.totalorder %s114, 0
    %s117 = sadd.s32 %s116, 1
    %s118 = scalar_select %p115, %s116, %s117
    %p121 = pneg %p115
    %p122 = scmp.eq.s32.totalorder %s10, 7
    %p123 = por %p121, %p122
    %p124 = scmp.ne.s32.totalorder %s116, %s119
    %p125 = scmp.eq.s32.totalorder %s10, 0
    %p126 = por %p124, %p125
    %p127 = scmp.ne.s32.totalorder %s116, %s119
    %p128 = scmp.eq.s32.totalorder %s15, 7
    %p129 = por %p127, %p128
    %p130 = scmp.ne.s32.totalorder %s119, %s120
    %p131 = scmp.eq.s32.totalorder %s15, 0
    %p132 = por %p130, %p131
    %p133 = scmp.ne.s32.totalorder %s119, %s120
    %p134 = scmp.eq.s32.totalorder %s16, 7
    %p135 = por %p133, %p134
    %p137 = scmp.ne.s32.totalorder %s120, %s136
    %p138 = scmp.eq.s32.totalorder %s16, 0
    %p139 = por %p137, %p138
    %s140 = ssub.s32 %s17, %s29
    %s141 = ssub.s32 %s18, %s25
    %s142 = sor.u32 %s140, %s141
    %p143 = scmp.eq.s32.totalorder %s142, 0
    %s145 = sadd.s32 %s144, 1
    %s146 = scalar_select %p143, %s144, %s145
    %p149 = pneg %p143
    %p150 = scmp.eq.s32.totalorder %s10, 7
    %p151 = por %p149, %p150
    %p152 = scmp.ne.s32.totalorder %s144, %s147
    %p153 = scmp.eq.s32.totalorder %s10, 0
    %p154 = por %p152, %p153
    %p155 = scmp.ne.s32.totalorder %s144, %s147
    %p156 = scmp.eq.s32.totalorder %s15, 7
    %p157 = por %p155, %p156
    %p158 = scmp.ne.s32.totalorder %s147, %s148
    %p159 = scmp.eq.s32.totalorder %s15, 0
    %p160 = por %p158, %p159
    %p161 = scmp.ne.s32.totalorder %s147, %s148
    %p162 = scmp.eq.s32.totalorder %s16, 7
    %p163 = por %p161, %p162
    %p165 = scmp.ne.s32.totalorder %s148, %s164
    %p166 = scmp.eq.s32.totalorder %s16, 0
    %p167 = por %p165, %p166
    %p168 = scmp.le.s32.totalorder 1, %s10
    %p169 = scmp.lt.s32.totalorder %s10, 9
    %p170 = pnand %p168, %p169
    %p171 = pneg %p170
    // Predicated region
    $region9: #{transformer_forward.40} parent=5 // pred_check
      _
    $region10: #{transformer_forward.40} parent=5 // pred_check_branch
      %173 = sbr.rel (%p170) target = $region12
    $region11: #{transformer_forward.40} parent=5 // pred_region
      %s174 = ssub.s32 %s10, 1
    $region12: #{transformer_forward.40} parent=5 // pred_fallthru
      _
    %p175 = scmp.lt.s32.totalorder %s10, 8
    // Predicated region
    $region13: #{transformer_forward.40} parent=5 // pred_check
      %p176 = pneg %p175
    $region14: #{transformer_forward.40} parent=5 // pred_check_branch
      %178 = sbr.rel (%p176) target = $region16
    $region15: #{transformer_forward.40} parent=5 // pred_region
      // Predicated region
      $region17: #{transformer_forward.40} parent=15 // pred_check
        %p179 = pneg %p44
      $region18: #{transformer_forward.40} parent=15 // pred_check_branch
        %181 = sbr.rel (%p179) target = $region20
      $region19: #{transformer_forward.40} parent=15 // pred_region
        %p182 = scmp.lt.s32.totalorder %s17, 1
        %s183 = scalar_select %p182, %s17, 1
        %p184 = scmp.lt.s32.totalorder %s18, 3
        %s185 = scalar_select %p184, %s18, 3
        %s186 = smul.addr %s183, 4
        %s187 = sadd.s32 %s185, %s186
        %s188 = smul.addr %s187, 4
        %s189 = scalar_lea.vmem %s0, %s188
      $region20: #{transformer_forward.40} parent=15 // pred_fallthru
        _
      // Predicated region
      $region21: #{transformer_forward.40} parent=15 // pred_check
        %p190 = pneg %p72
      $region22: #{transformer_forward.40} parent=15 // pred_check_branch
        %192 = sbr.rel (%p190) target = $region24
      $region23: #{transformer_forward.40} parent=15 // pred_region
        %p193 = scmp.lt.s32.totalorder %s17, 1
        %s194 = scalar_select %p193, %s17, 1
        %p195 = scmp.lt.s32.totalorder %s18, 3
        %s196 = scalar_select %p195, %s18, 3
        %s197 = smul.addr %s194, 4
        %s198 = sadd.s32 %s196, %s197
        %s199 = smul.addr %s198, 4
        %s200 = scalar_lea.vmem %s1, %s199
      $region24: #{transformer_forward.40} parent=15 // pred_fallthru
        _
      // Predicated region
      $region25: #{transformer_forward.40} parent=15 // pred_check
        %p201 = pneg %p100
      $region26: #{transformer_forward.40} parent=15 // pred_check_branch
        %203 = sbr.rel (%p201) target = $region28
      $region27: #{transformer_forward.40} parent=15 // pred_region
        %p204 = scmp.lt.s32.totalorder %s17, 1
        %s205 = scalar_select %p204, %s17, 1
        %p206 = scmp.lt.s32.totalorder %s18, 3
        %s207 = scalar_select %p206, %s18, 3
        %s208 = smul.addr %s205, 4
        %s209 = sadd.s32 %s207, %s208
        %s210 = smul.addr %s209, 4
        %s211 = scalar_lea.vmem %s2, %s210
      $region28: #{transformer_forward.40} parent=15 // pred_fallthru
        _
      // Predicated region
      $region29: #{transformer_forward.40} parent=15 // pred_check
        %p212 = pneg %p126
      $region30: #{transformer_forward.40} parent=15 // pred_check_branch
        %214 = sbr.rel (%p212) target = $region32
      $region31: #{transformer_forward.40} parent=15 // pred_region
        %p215 = scmp.lt.s32.totalorder %s17, 1
        %s216 = scalar_select %p215, %s17, 1
        %s217 = scalar_lea.vmem %s3, %s216
      $region32: #{transformer_forward.40} parent=15 // pred_fallthru
        _
    $region16: #{transformer_forward.40} parent=5 // pred_fallthru
      _
    %p218 = scmp.le.s32.totalorder 1, %s10
    %p219 = scmp.lt.s32.totalorder %s10, 9
    %p220 = pnand %p218, %p219
    %p221 = pneg %p220
    // Predicated region
    $region33: #{transformer_forward.40} parent=5 // pred_check
      _
    $region34: #{transformer_forward.40} parent=5 // pred_check_branch
      %223 = sbr.rel (%p220) target = $region36
    $region35: #{transformer_forward.40} parent=5 // pred_region
      %s224 = ssub.s32 %s10, 1
      %p225 = scmp.lt.s32.totalorder %s19, 1
      %s226 = scalar_select %p225, %s19, 1
      %p227 = scmp.lt.s32.totalorder %s20, 3
      %s228 = scalar_select %p227, %s20, 3
      %s229 = smul.addr %s226, 4
      %s230 = sadd.s32 %s228, %s229
      %s231 = smul.addr %s230, 4
      %s232 = scalar_lea.vmem %s0, %s231
      %p233 = pneg %p50
      %p234 = pneg %p47
      %p235 = scmp.lt.s32.totalorder %s19, 1
      %s236 = scalar_select %p235, %s19, 1
      %p237 = scmp.lt.s32.totalorder %s20, 3
      %s238 = scalar_select %p237, %s20, 3
      %s239 = smul.addr %s236, 4
      %s240 = sadd.s32 %s238, %s239
      %s241 = smul.addr %s240, 4
      %s242 = scalar_lea.vmem %s1, %s241
      %p243 = pneg %p78
      %p244 = pneg %p75
      %p245 = scmp.lt.s32.totalorder %s19, 1
      %s246 = scalar_select %p245, %s19, 1
      %p247 = scmp.lt.s32.totalorder %s20, 3
      %s248 = scalar_select %p247, %s20, 3
      %s249 = smul.addr %s246, 4
      %s250 = sadd.s32 %s248, %s249
      %s251 = smul.addr %s250, 4
      %s252 = scalar_lea.vmem %s2, %s251
      %p253 = pneg %p106
      %p254 = pneg %p103
      %p255 = scmp.lt.s32.totalorder %s19, 1
      %s256 = scalar_select %p255, %s19, 1
      %s257 = scalar_lea.vmem %s3, %s256
      %p258 = pneg %p132
      %p259 = pneg %p129
      %p260 = pneg %p160
      %p261 = pneg %p157
      %p262 = scmp.lt.s32.totalorder %s19, 1
      %s263 = scalar_select %p262, %s19, 1
      %p264 = scmp.lt.s32.totalorder %s20, 3
      %s265 = scalar_select %p264, %s20, 3
      %s266 = smul.addr %s263, 4
      %s267 = sadd.s32 %s265, %s266
      %s268 = smul.addr %s267, 4
      %s269 = scalar_lea.vmem %s4, %s268
      %p270 = scmp.lt.s32.totalorder %s19, 1
      %s271 = scalar_select %p270, %s19, 1
      %p272 = scmp.lt.s32.totalorder %s20, 3
      %s273 = scalar_select %p272, %s20, 3
      %s274 = smul.addr %s271, 4
      %s275 = sadd.s32 %s273, %s274
      %s276 = smul.addr %s275, 4
      %s277 = scalar_lea.vmem %s0, %s276
      %p278 = scmp.lt.s32.totalorder %s19, 1
      %s279 = scalar_select %p278, %s19, 1
      %p280 = scmp.lt.s32.totalorder %s20, 3
      %s281 = scalar_select %p280, %s20, 3
      %s282 = smul.addr %s279, 4
      %s283 = sadd.s32 %s281, %s282
      %s284 = smul.addr %s283, 4
      %s285 = scalar_lea.vmem %s1, %s284
      %p286 = scmp.lt.s32.totalorder %s19, 1
      %s287 = scalar_select %p286, %s19, 1
      %p288 = scmp.lt.s32.totalorder %s20, 3
      %s289 = scalar_select %p288, %s20, 3
      %s290 = smul.addr %s287, 4
      %s291 = sadd.s32 %s289, %s290
      %s292 = smul.addr %s291, 4
      %s293 = scalar_lea.vmem %s2, %s292
      %p294 = scmp.lt.s32.totalorder %s19, 1
      %s295 = scalar_select %p294, %s19, 1
      %s296 = scalar_lea.vmem %s3, %s295
      %p297 = scmp.lt.s32.totalorder %s19, 1
      %s298 = scalar_select %p297, %s19, 1
      %p299 = scmp.lt.s32.totalorder %s20, 3
      %s300 = scalar_select %p299, %s20, 3
      %s301 = smul.addr %s298, 4
      %s302 = sadd.s32 %s300, %s301
      %s303 = smul.addr %s302, 4
      %s304 = scalar_lea.vmem %s4, %s303
      %v306 = vld [vmem:[%s277] sm:$0xf]
      %v307 = vld [vmem:[%s285] sm:$0xf]
      %v308 = vld [vmem:[%s293] sm:$0xf]
      %vm309 = vcmask 64512
      %v311 = vsel %vm309, %v306, 0
      %v314 = vsel %vm309, %v307, 0
      %316 = vmatprep.subr.bf16.mxu0 0
      %317 = vmatpush1.bf16.xpose.msra.mxu0 %v314
      %318 = vmatprep.subr.bf16.mxu0 0
      %319 = vmatpush1.bf16.xpose.msra.mxu0 0
      %320 = vmatprep.subr.bf16.mxu0 0
      %321 = vmatpush1.bf16.xpose.msra.mxu0 0
      %322 = vmatprep.subr.bf16.mxu0 0
      %323 = vmatpush1.bf16.xpose.msra.mxu0 0
      %324 = vmatprep.subr.bf16.mxu0 0
      %325 = vmatpush1.bf16.xpose.msra.mxu0 0
      %326 = vmatprep.subr.bf16.mxu0 0
      %327 = vmatpush1.bf16.xpose.msra.mxu0 0
      %328 = vmatprep.subr.bf16.mxu0 0
      %329 = vmatpush1.bf16.xpose.msra.mxu0 0
      %330 = vmatprep.subr.bf16.mxu0 0
      %331 = vmatpush1.bf16.xpose.msra.mxu0 0
      %332 = vmatprep.subr.bf16.mxu0 0
      %333 = vmatpush1.bf16.xpose.msra.mxu0 0
      %334 = vmatprep.subr.bf16.mxu0 0
      %335 = vmatpush1.bf16.xpose.msra.mxu0 0
      %336 = vmatprep.subr.bf16.mxu0 0
      %337 = vmatpush1.bf16.xpose.msra.mxu0 0
      %338 = vmatprep.subr.bf16.mxu0 0
      %339 = vmatpush1.bf16.xpose.msra.mxu0 0
      %340 = vmatprep.subr.bf16.mxu0 0
      %341 = vmatpush1.bf16.xpose.msra.mxu0 0
      %342 = vmatprep.subr.bf16.mxu0 0
      %343 = vmatpush1.bf16.xpose.msra.mxu0 0
      %344 = vmatprep.subr.bf16.mxu0 0
      %345 = vmatpush1.bf16.xpose.msra.mxu0 0
      %346 = vmatprep.subr.bf16.mxu0 0
      %347 = vmatpush1.bf16.xpose.msra.mxu0 0
      %348 = vmatprep.mubr.bf16.mxu0 0
      %349 = vmatmul.mubr.bf16.gmra.mrb[0].mxu0 %v311
      %v350 = vpop.f32.mrb[0].mxu0
      %v351 = vadd.f32 0.0, %v350
      %v352 = vpop.f32.mrb[0].mxu0
      %v353 = vpop.f32.mrb[0].mxu0
      %v354 = vpop.f32.mrb[0].mxu0
      %355 = vdwg.mxu0
      %v356 = vmul.f32 %v351, 0.35355338
      %v357 = vld [vmem:[%s296] sm:$0x1]
      %vm358 = vcmp.gt.f32.partialorder %v357, 0.0
      %v359 = vlaneseq
      %v360 = vshrl.u32 %v359, 7
      %v361 = vlaneseq
      %v362 = vand.u32 %v361, 127
      %vm363 = vcmp.le.s32.totalorder %v362, %v360
      %v364 = vsel %vm358, 1, 0
      %v365 = vlaneseq
      %v366 = vshrl.u32 %v365, 7
      %v367 = vsub.s32 0, %v366
      %v368 = vrot.slane %v364, %v367
      %vm369 = vcmp.eq.s32.totalorder %v368, 1
      %vm370 = vmand %vm369, %vm363
      %v371 = vsel %vm370, %v356, -1e+09
      %v372 = vsel %vm309, %v371, -inf
      %373 = vmax.xlane.f32.xlu0 %v372
      %v374 = vpop.xlane.xlu0 %373
      %v375 = vsub.f32 %v371, %v374
      %v376 = vmul.f32 %v375, 1.442695
      %v377 = vpow.pop %v376
      %v378 = vsel %vm309, %v377, 0.0
      %379 = vadd.xlane.f32.xlu0 %v378
      %v380 = vpop.xlane.xlu0 %379
      %v381 = vrcp.pop %v380
      %v382 = vmul.f32 %v377, %v381
      %v383 = vpack.c.bf16 %v382, %v382
      %v385 = vsel %vm309, %v383, 0
      %vm387 = vcmask 1043456
      %v389 = vsel %vm387, %v308, 0
      %391 = vmatprep.subr.bf16.mxu0 0
      %392 = vmatpush1.bf16.msra.mxu0 %v389
      %393 = vmatprep.subr.bf16.mxu0 0
      %394 = vmatpush1.bf16.msra.mxu0 0
      %395 = vmatprep.subr.bf16.mxu0 0
      %396 = vmatpush1.bf16.msra.mxu0 0
      %397 = vmatprep.subr.bf16.mxu0 0
      %398 = vmatpush1.bf16.msra.mxu0 0
      %399 = vmatprep.subr.bf16.mxu0 0
      %400 = vmatpush1.bf16.msra.mxu0 0
      %401 = vmatprep.subr.bf16.mxu0 0
      %402 = vmatpush1.bf16.msra.mxu0 0
      %403 = vmatprep.subr.bf16.mxu0 0
      %404 = vmatpush1.bf16.msra.mxu0 0
      %405 = vmatprep.subr.bf16.mxu0 0
      %406 = vmatpush1.bf16.msra.mxu0 0
      %407 = vmatprep.subr.bf16.mxu0 0
      %408 = vmatpush1.bf16.msra.mxu0 0
      %409 = vmatprep.subr.bf16.mxu0 0
      %410 = vmatpush1.bf16.msra.mxu0 0
      %411 = vmatprep.subr.bf16.mxu0 0
      %412 = vmatpush1.bf16.msra.mxu0 0
      %413 = vmatprep.subr.bf16.mxu0 0
      %414 = vmatpush1.bf16.msra.mxu0 0
      %415 = vmatprep.subr.bf16.mxu0 0
      %416 = vmatpush1.bf16.msra.mxu0 0
      %417 = vmatprep.subr.bf16.mxu0 0
      %418 = vmatpush1.bf16.msra.mxu0 0
      %419 = vmatprep.subr.bf16.mxu0 0
      %420 = vmatpush1.bf16.msra.mxu0 0
      %421 = vmatprep.subr.bf16.mxu0 0
      %422 = vmatpush1.bf16.msra.mxu0 0
      %423 = vmatprep.mubr.bf16.mxu0 0
      %424 = vmatmul.mubr.bf16.gmra.mrb[0].mxu0 %v385
      %v425 = vpop.f32.mrb[0].mxu0
      %v426 = vadd.f32 0.0, %v425
      %v427 = vpop.f32.mrb[0].mxu0
      %v428 = vpop.f32.mrb[0].mxu0
      %v429 = vpop.f32.mrb[0].mxu0
      %430 = vdwg.mxu0
      %v431 = vpack.c.bf16 %v426, %v426
      %vm432 = vcmask 60416
      %433 = vst.msk [vmem:[%s304] sm:$0xf] %vm432, %v431
      %p434 = scmp.lt.s32.totalorder %s19, 1
      %s435 = scalar_select %p434, %s19, 1
      %p436 = scmp.lt.s32.totalorder %s20, 3
      %s437 = scalar_select %p436, %s20, 3
      %s438 = smul.addr %s435, 4
      %s439 = sadd.s32 %s437, %s438
      %s440 = smul.addr %s439, 4
      %s441 = scalar_lea.vmem %s4, %s440
      // Predicated region
      $region37: #{transformer_forward.40} parent=35 // pred_check
        %p442 = pneg %p157
      $region38: #{transformer_forward.40} parent=35 // pred_check_branch
        %444 = sbr.rel (%p442) target = $region40
      $region39: #{transformer_forward.40} parent=35 // pred_region
        _
      $region40: #{transformer_forward.40} parent=35 // pred_fallthru
        _
    $region36: #{transformer_forward.40} parent=5 // pred_fallthru
      _
    %p445 = scmp.le.s32.totalorder 2, %s10
    // Predicated region
    $region41: #{transformer_forward.40} parent=5 // pred_check
      %p446 = pneg %p445
    $region42: #{transformer_forward.40} parent=5 // pred_check_branch
      %448 = sbr.rel (%p446) target = $region44
    $region43: #{transformer_forward.40} parent=5 // pred_region
      %s449 = ssub.s32 %s10, 2
      // Predicated region
      $region45: #{transformer_forward.40} parent=43 // pred_check
        %p450 = pneg %p163
      $region46: #{transformer_forward.40} parent=43 // pred_check_branch
        %452 = sbr.rel (%p450) target = $region48
      $region47: #{transformer_forward.40} parent=43 // pred_region
        %p453 = scmp.lt.s32.totalorder %s21, 1
        %s454 = scalar_select %p453, %s21, 1
        %p455 = scmp.lt.s32.totalorder %s22, 3
        %s456 = scalar_select %p455, %s22, 3
        %s457 = smul.addr %s454, 4
        %s458 = sadd.s32 %s456, %s457
        %s459 = smul.addr %s458, 4
        %s460 = scalar_lea.vmem %s4, %s459
      $region48: #{transformer_forward.40} parent=43 // pred_fallthru
        _
    $region44: #{transformer_forward.40} parent=5 // pred_fallthru
      _
  $region6: #{transformer_forward.40} parent=0 // loop_footer
    %s14 = sadd.s32 1, %s10
  $region7: #{transformer_forward.40} parent=0 // loop_footer_branch
    %9 = sbr.rel target = $region3
  $region8: #{transformer_forward.40} parent=0 // loop_exit
    _

// kernel: transformer_forward.41
$region0: #{transformer_forward.41}
  #allocation0 [shape = 'u32[]', space=smem, size = 0x4, offset = 0x4, fixed_abs, tag = 'smem constant byte address 0x4 - core index']
  #allocation1 [shape = 'u32[144,128]{1,0:T(1,128)}', space=vmem, size = 0x12000, scoped, tag = 'internal scratch']
  #allocation2 [shape = 'f32[16,32]{1,0:T(8,128)}', space=vmem, size = 0x2000, scoped, tag = 'scratch operand']
  %s0 = inlined_call_operand.vmem [shape: bf16[16,32], index: 0, kind: input, shape index: {}]
  %s1 = inlined_call_operand.vmem [shape: bf16[32,32], index: 1, kind: input, shape index: {}]
  %s2 = inlined_call_operand.vmem [shape: f32[1,32], index: 2, kind: input, shape index: {}]
  %s3 = inlined_call_operand.vmem [shape: f32[16,32], index: 3, kind: input, shape index: {}]
  %s4 = inlined_call_operand.vmem [shape: f32[1,32], index: 4, kind: input, shape index: {}]
  %s5 = inlined_call_operand.vmem [shape: f32[1,32], index: 5, kind: input, shape index: {}]
  %s6 = inlined_call_operand.vmem [shape: bf16[16,32], index: 6, kind: output, shape index: {}]
  %s7 = sld [smem:[#allocation0]]
  $region42: #{transformer_forward.41} parent=0
    _
  %s9 = ssub.s32 1, %s7
  %s10 = scalar_select 0, %s9, %s7
  // Predicated region
  $region2: #{transformer_forward.41} parent=0 // pred_check
    _
  $region3: #{transformer_forward.41} parent=0 // pred_check_branch
    %12 = sbr.rel (0) target = $region5
  $region4: #{transformer_forward.41} parent=0 // pred_region
    _
  $region5: #{transformer_forward.41} parent=0 // pred_fallthru
    _
  // Predicated region
  $region6: #{transformer_forward.41} parent=0 // pred_check
    _
  $region7: #{transformer_forward.41} parent=0 // pred_check_branch
    %14 = sbr.rel (0) target = $region9
  $region8: #{transformer_forward.41} parent=0 // pred_region
    _
  $region9: #{transformer_forward.41} parent=0 // pred_fallthru
    _
  // Predicated region
  $region10: #{transformer_forward.41} parent=0 // pred_check
    _
  $region11: #{transformer_forward.41} parent=0 // pred_check_branch
    %16 = sbr.rel (0) target = $region13
  $region12: #{transformer_forward.41} parent=0 // pred_region
    _
  $region13: #{transformer_forward.41} parent=0 // pred_fallthru
    _
  // Predicated region
  $region14: #{transformer_forward.41} parent=0 // pred_check
    _
  $region15: #{transformer_forward.41} parent=0 // pred_check_branch
    %18 = sbr.rel (0) target = $region17
  $region16: #{transformer_forward.41} parent=0 // pred_region
    _
  $region17: #{transformer_forward.41} parent=0 // pred_fallthru
    _
  // Predicated region
  $region18: #{transformer_forward.41} parent=0 // pred_check
    _
  $region19: #{transformer_forward.41} parent=0 // pred_check_branch
    %20 = sbr.rel (0) target = $region21
  $region20: #{transformer_forward.41} parent=0 // pred_region
    _
  $region21: #{transformer_forward.41} parent=0 // pred_fallthru
    _
  // Predicated region
  $region22: #{transformer_forward.41} parent=0 // pred_check
    _
  $region23: #{transformer_forward.41} parent=0 // pred_check_branch
    %22 = sbr.rel (0) target = $region25
  $region24: #{transformer_forward.41} parent=0 // pred_region
    _
  $region25: #{transformer_forward.41} parent=0 // pred_fallthru
    _
  %p24 = scmp.eq.s32.totalorder 0, 0
  // Predicated region
  $region26: #{transformer_forward.41} parent=0 // pred_check
    %p25 = pneg %p24
  $region27: #{transformer_forward.41} parent=0 // pred_check_branch
    %27 = sbr.rel (%p25) target = $region29
  $region28: #{transformer_forward.41} parent=0 // pred_region
    %vm28 = vcmask 261120
    %29 = vst.msk [vmem:[#allocation2] sm:$0xff] %vm28, 0.0
    %30 = vst.msk [vmem:[#allocation2 + $0x8] sm:$0xff] %vm28, 0.0
  $region29: #{transformer_forward.41} parent=0 // pred_fallthru
    _
  %v31 = vld [vmem:[#allocation2] sm:$0xff]
  %v32 = vld [vmem:[#allocation2 + $0x8] sm:$0xff]
  %v33 = vld [vmem:[%s0] sm:$0xf]
  %v34 = vld [vmem:[%s0 + $0x4] sm:$0xf]
  %v35 = vld [vmem:[%s1] sm:$0xf]
  %v36 = vld [vmem:[%s1 + $0x4] sm:$0xf]
  %v37 = vld [vmem:[%s1 + $0x8] sm:$0xf]
  %v38 = vld [vmem:[%s1 + $0xc] sm:$0xf]
  %v41 = vunpack.c.l.b16 %v33
  %v42 = vunpack.c.l.b16 %v34
  %v43 = vpack.c.b16 %v42, %v41
  %v48 = vunpack.c.l.b16 %v35
  %v49 = vunpack.c.l.b16 %v36
  %v50 = vunpack.c.l.b16 %v37
  %v51 = vunpack.c.l.b16 %v38
  %v52 = vpack.c.b16 %v49, %v48
  %v53 = vpack.c.b16 %v51, %v50
  %vm56 = vcmask 261120
  %v58 = vsel %vm56, %v43, 0
  %60 = vmatprep.subr.bf16.mxu0 0
  %61 = vmatpush1.bf16.msra.mxu0 %v52
  %62 = vmatprep.subr.bf16.mxu0 0
  %63 = vmatpush1.bf16.msra.mxu0 %v53
  %64 = vmatprep.subr.bf16.mxu0 0
  %65 = vmatpush1.bf16.msra.mxu0 0
  %66 = vmatprep.subr.bf16.mxu0 0
  %67 = vmatpush1.bf16.msra.mxu0 0
  %68 = vmatprep.subr.bf16.mxu0 0
  %69 = vmatpush1.bf16.msra.mxu0 0
  %70 = vmatprep.subr.bf16.mxu0 0
  %71 = vmatpush1.bf16.msra.mxu0 0
  %72 = vmatprep.subr.bf16.mxu0 0
  %73 = vmatpush1.bf16.msra.mxu0 0
  %74 = vmatprep.subr.bf16.mxu0 0
  %75 = vmatpush1.bf16.msra.mxu0 0
  %76 = vmatprep.subr.bf16.mxu0 0
  %77 = vmatpush1.bf16.msra.mxu0 0
  %78 = vmatprep.subr.bf16.mxu0 0
  %79 = vmatpush1.bf16.msra.mxu0 0
  %80 = vmatprep.subr.bf16.mxu0 0
  %81 = vmatpush1.bf16.msra.mxu0 0
  %82 = vmatprep.subr.bf16.mxu0 0
  %83 = vmatpush1.bf16.msra.mxu0 0
  %84 = vmatprep.subr.bf16.mxu0 0
  %85 = vmatpush1.bf16.msra.mxu0 0
  %86 = vmatprep.subr.bf16.mxu0 0
  %87 = vmatpush1.bf16.msra.mxu0 0
  %88 = vmatprep.subr.bf16.mxu0 0
  %89 = vmatpush1.bf16.msra.mxu0 0
  %90 = vmatprep.subr.bf16.mxu0 0
  %91 = vmatpush1.bf16.msra.mxu0 0
  %92 = vmatprep.mubr.bf16.mxu0 0
  %93 = vmatmul.mubr.bf16.gmra.mrb[0].mxu0 %v58
  %v94 = vpop.f32.mrb[0].mxu0
  %v95 = vadd.f32 0.0, %v94
  %v96 = vpop.f32.mrb[0].mxu0
  %v97 = vpop.f32.mrb[0].mxu0
  %v98 = vadd.f32 0.0, %v97
  %v99 = vpop.f32.mrb[0].mxu0
  %100 = vdwg.mxu0
  %v101 = vadd.f32 %v31, %v95
  %v102 = vadd.f32 %v32, %v98
  %103 = vst.msk [vmem:[#allocation2] sm:$0xff] %vm56, %v101
  %104 = vst.msk [vmem:[#allocation2 + $0x8] sm:$0xff] %vm56, %v102
  // Predicated region
  $region30: #{transformer_forward.41} parent=0 // pred_check
    %p105 = pneg %p24
  $region31: #{transformer_forward.41} parent=0 // pred_check_branch
    %107 = sbr.rel (%p105) target = $region33
  $region32: #{transformer_forward.41} parent=0 // pred_region
    %v108 = vld [vmem:[#allocation2] sm:$0xff]
    %v109 = vld [vmem:[#allocation2 + $0x8] sm:$0xff]
    %v110 = vld [vmem:[%s2] sm:$0x1]
    %v112 = vlaneseq
    %v113 = vshrl.u32 %v112, 7
    %v114 = vsub.s32 0, %v113
    %v115 = vrot.slane %v110, %v114
    %v117 = vadd.f32 %v108, %v115
    %v118 = vadd.f32 %v109, %v115
    %v119 = vld [vmem:[%s3] sm:$0xff]
    %v120 = vld [vmem:[%s3 + $0x8] sm:$0xff]
    %v121 = vadd.f32 %v117, %v119
    %v122 = vadd.f32 %v118, %v120
    %v123 = vsel %vm56, %v121, 0.0
    %124 = vadd.xlane.f32.xlu0 %v123
    %v125 = vpop.xlane.xlu0 %124
    %v126 = vsel %vm56, %v122, 0.0
    %127 = vadd.xlane.f32.xlu0 %v126
    %v128 = vpop.xlane.xlu0 %127
    %v129 = vrcp.pop 32.0
    %v130 = vmul.f32 %v125, %v129
    %v131 = vmul.f32 %v128, %v129
    %v132 = vsub.f32 %v121, %v130
    %v133 = vsub.f32 %v122, %v131
    %v134 = vmul.f32 %v132, %v132
    %v135 = vmul.f32 %v133, %v133
    %v136 = vsel %vm56, %v134, 0.0
    %137 = vadd.xlane.f32.xlu0 %v136
    %v138 = vpop.xlane.xlu0 %137
    %v139 = vsel %vm56, %v135, 0.0
    %140 = vadd.xlane.f32.xlu0 %v139
    %v141 = vpop.xlane.xlu0 %140
    %v142 = vmul.f32 %v138, %v129
    %v143 = vmul.f32 %v141, %v129
    %v144 = vadd.f32 %v142, 1e-05
    %v145 = vadd.f32 %v143, 1e-05
    %v146 = vrsqrt.pop %v144
    %v147 = vrsqrt.pop %v145
    %v148 = vmul.f32 %v132, %v146
    %v149 = vmul.f32 %v133, %v147
    %v150 = vld [vmem:[%s4] sm:$0x1]
    %v152 = vlaneseq
    %v153 = vshrl.u32 %v152, 7
    %v154 = vsub.s32 0, %v153
    %v155 = vrot.slane %v150, %v154
    %v157 = vmul.f32 %v148, %v155
    %v158 = vmul.f32 %v149, %v155
    %v159 = vld [vmem:[%s5] sm:$0x1]
    %v161 = vlaneseq
    %v162 = vshrl.u32 %v161, 7
    %v163 = vsub.s32 0, %v162
    %v164 = vrot.slane %v159, %v163
    %v166 = vadd.f32 %v157, %v164
    %v167 = vadd.f32 %v158, %v164
    %v168 = vpack.c.bf16 %v167, %v166
    %v170 = vunpack.c.l.b16 %v168
    %v171 = vunpack.c.h.b16 %v168
    %v172 = vpack.c.b16 %v170, %v170
    %v173 = vpack.c.b16 %v171, %v171
    %vm176 = vcmask 257024
    %177 = vst.msk [vmem:[%s6] sm:$0xf] %vm176, %v172
    %178 = vst.msk [vmem:[%s6 + $0x4] sm:$0xf] %vm176, %v173
  $region33: #{transformer_forward.41} parent=0 // pred_fallthru
    _
  // Predicated region
  $region34: #{transformer_forward.41} parent=0 // pred_check
    _
  $region35: #{transformer_forward.41} parent=0 // pred_check_branch
    %180 = sbr.rel (0) target = $region37
  $region36: #{transformer_forward.41} parent=0 // pred_region
    _
  $region37: #{transformer_forward.41} parent=0 // pred_fallthru
    _
  // Predicated region
  $region38: #{transformer_forward.41} parent=0 // pred_check
    _
  $region39: #{transformer_forward.41} parent=0 // pred_check_branch
    %182 = sbr.rel (0) target = $region41
  $region40: #{transformer_forward.41} parent=0 // pred_region
    _
  $region41: #{transformer_forward.41} parent=0 // pred_fallthru
    _

// kernel: transformer_forward.42
$region0: #{transformer_forward.42}
  #allocation0 [shape = 'u32[]', space=smem, size = 0x4, offset = 0x4, fixed_abs, tag = 'smem constant byte address 0x4 - core index']
  #allocation1 [shape = 'u32[144,128]{1,0:T(1,128)}', space=vmem, size = 0x12000, scoped, tag = 'internal scratch']
  #allocation2 [shape = 'f32[16,32]{1,0:T(8,128)}', space=vmem, size = 0x2000, scoped, tag = 'scratch operand']
  %s0 = inlined_call_operand.vmem [shape: bf16[16,32], index: 0, kind: input, shape index: {}]
  %s1 = inlined_call_operand.vmem [shape: bf16[32,32], index: 1, kind: input, shape index: {}]
  %s2 = inlined_call_operand.vmem [shape: f32[1,32], index: 2, kind: input, shape index: {}]
  %s3 = inlined_call_operand.vmem [shape: bf16[16,32], index: 3, kind: output, shape index: {}]
  %s4 = sld [smem:[#allocation0]]
  $region30: #{transformer_forward.42} parent=0
    _
  %s6 = ssub.s32 1, %s4
  %s7 = scalar_select 0, %s6, %s4
  // Predicated region
  $region2: #{transformer_forward.42} parent=0 // pred_check
    _
  $region3: #{transformer_forward.42} parent=0 // pred_check_branch
    %9 = sbr.rel (0) target = $region5
  $region4: #{transformer_forward.42} parent=0 // pred_region
    _
  $region5: #{transformer_forward.42} parent=0 // pred_fallthru
    _
  // Predicated region
  $region6: #{transformer_forward.42} parent=0 // pred_check
    _
  $region7: #{transformer_forward.42} parent=0 // pred_check_branch
    %11 = sbr.rel (0) target = $region9
  $region8: #{transformer_forward.42} parent=0 // pred_region
    _
  $region9: #{transformer_forward.42} parent=0 // pred_fallthru
    _
  // Predicated region
  $region10: #{transformer_forward.42} parent=0 // pred_check
    _
  $region11: #{transformer_forward.42} parent=0 // pred_check_branch
    %13 = sbr.rel (0) target = $region13
  $region12: #{transformer_forward.42} parent=0 // pred_region
    _
  $region13: #{transformer_forward.42} parent=0 // pred_fallthru
    _
  %p15 = scmp.eq.s32.totalorder 0, 0
  // Predicated region
  $region14: #{transformer_forward.42} parent=0 // pred_check
    %p16 = pneg %p15
  $region15: #{transformer_forward.42} parent=0 // pred_check_branch
    %18 = sbr.rel (%p16) target = $region17
  $region16: #{transformer_forward.42} parent=0 // pred_region
    %vm19 = vcmask 261120
    %20 = vst.msk [vmem:[#allocation2] sm:$0xff] %vm19, 0.0
    %21 = vst.msk [vmem:[#allocation2 + $0x8] sm:$0xff] %vm19, 0.0
  $region17: #{transformer_forward.42} parent=0 // pred_fallthru
    _
  %v22 = vld [vmem:[#allocation2] sm:$0xff]
  %v23 = vld [vmem:[#allocation2 + $0x8] sm:$0xff]
  %v24 = vld [vmem:[%s0] sm:$0xf]
  %v25 = vld [vmem:[%s0 + $0x4] sm:$0xf]
  %v26 = vld [vmem:[%s1] sm:$0xf]
  %v27 = vld [vmem:[%s1 + $0x4] sm:$0xf]
  %v28 = vld [vmem:[%s1 + $0x8] sm:$0xf]
  %v29 = vld [vmem:[%s1 + $0xc] sm:$0xf]
  %v32 = vunpack.c.l.b16 %v24
  %v33 = vunpack.c.l.b16 %v25
  %v34 = vpack.c.b16 %v33, %v32
  %v39 = vunpack.c.l.b16 %v26
  %v40 = vunpack.c.l.b16 %v27
  %v41 = vunpack.c.l.b16 %v28
  %v42 = vunpack.c.l.b16 %v29
  %v43 = vpack.c.b16 %v40, %v39
  %v44 = vpack.c.b16 %v42, %v41
  %vm47 = vcmask 261120
  %v49 = vsel %vm47, %v34, 0
  %51 = vmatprep.subr.bf16.mxu0 0
  %52 = vmatpush1.bf16.msra.mxu0 %v43
  %53 = vmatprep.subr.bf16.mxu0 0
  %54 = vmatpush1.bf16.msra.mxu0 %v44
  %55 = vmatprep.subr.bf16.mxu0 0
  %56 = vmatpush1.bf16.msra.mxu0 0
  %57 = vmatprep.subr.bf16.mxu0 0
  %58 = vmatpush1.bf16.msra.mxu0 0
  %59 = vmatprep.subr.bf16.mxu0 0
  %60 = vmatpush1.bf16.msra.mxu0 0
  %61 = vmatprep.subr.bf16.mxu0 0
  %62 = vmatpush1.bf16.msra.mxu0 0
  %63 = vmatprep.subr.bf16.mxu0 0
  %64 = vmatpush1.bf16.msra.mxu0 0
  %65 = vmatprep.subr.bf16.mxu0 0
  %66 = vmatpush1.bf16.msra.mxu0 0
  %67 = vmatprep.subr.bf16.mxu0 0
  %68 = vmatpush1.bf16.msra.mxu0 0
  %69 = vmatprep.subr.bf16.mxu0 0
  %70 = vmatpush1.bf16.msra.mxu0 0
  %71 = vmatprep.subr.bf16.mxu0 0
  %72 = vmatpush1.bf16.msra.mxu0 0
  %73 = vmatprep.subr.bf16.mxu0 0
  %74 = vmatpush1.bf16.msra.mxu0 0
  %75 = vmatprep.subr.bf16.mxu0 0
  %76 = vmatpush1.bf16.msra.mxu0 0
  %77 = vmatprep.subr.bf16.mxu0 0
  %78 = vmatpush1.bf16.msra.mxu0 0
  %79 = vmatprep.subr.bf16.mxu0 0
  %80 = vmatpush1.bf16.msra.mxu0 0
  %81 = vmatprep.subr.bf16.mxu0 0
  %82 = vmatpush1.bf16.msra.mxu0 0
  %83 = vmatprep.mubr.bf16.mxu0 0
  %84 = vmatmul.mubr.bf16.gmra.mrb[0].mxu0 %v49
  %v85 = vpop.f32.mrb[0].mxu0
  %v86 = vadd.f32 0.0, %v85
  %v87 = vpop.f32.mrb[0].mxu0
  %v88 = vpop.f32.mrb[0].mxu0
  %v89 = vadd.f32 0.0, %v88
  %v90 = vpop.f32.mrb[0].mxu0
  %91 = vdwg.mxu0
  %v92 = vadd.f32 %v22, %v86
  %v93 = vadd.f32 %v23, %v89
  %94 = vst.msk [vmem:[#allocation2] sm:$0xff] %vm47, %v92
  %95 = vst.msk [vmem:[#allocation2 + $0x8] sm:$0xff] %vm47, %v93
  // Predicated region
  $region18: #{transformer_forward.42} parent=0 // pred_check
    %p96 = pneg %p15
  $region19: #{transformer_forward.42} parent=0 // pred_check_branch
    %98 = sbr.rel (%p96) target = $region21
  $region20: #{transformer_forward.42} parent=0 // pred_region
    %v99 = vld [vmem:[#allocation2] sm:$0xff]
    %v100 = vld [vmem:[#allocation2 + $0x8] sm:$0xff]
    %v101 = vld [vmem:[%s2] sm:$0x1]
    %v103 = vlaneseq
    %v104 = vshrl.u32 %v103, 7
    %v105 = vsub.s32 0, %v104
    %v106 = vrot.slane %v101, %v105
    %v108 = vadd.f32 %v99, %v106
    %v109 = vadd.f32 %v100, %v106
    %v110 = vpack.c.bf16 %v109, %v108
    %v112 = vunpack.c.l.b16 %v110
    %v113 = vunpack.c.h.b16 %v110
    %v114 = vpack.c.b16 %v112, %v112
    %v115 = vpack.c.b16 %v113, %v113
    %vm118 = vcmask 257024
    %119 = vst.msk [vmem:[%s3] sm:$0xf] %vm118, %v114
    %120 = vst.msk [vmem:[%s3 + $0x4] sm:$0xf] %vm118, %v115
  $region21: #{transformer_forward.42} parent=0 // pred_fallthru
    _
  // Predicated region
  $region22: #{transformer_forward.42} parent=0 // pred_check
    _
  $region23: #{transformer_forward.42} parent=0 // pred_check_branch
    %122 = sbr.rel (0) target = $region25
  $region24: #{transformer_forward.42} parent=0 // pred_region
    _
  $region25: #{transformer_forward.42} parent=0 // pred_fallthru
    _
  // Predicated region
  $region26: #{transformer_forward.42} parent=0 // pred_check
    _
  $region27: #{transformer_forward.42} parent=0 // pred_check_branch
    %124 = sbr.rel (0) target = $region29
  $region28: #{transformer_forward.42} parent=0 // pred_region
    _
  $region29: #{transformer_forward.42} parent=0 // pred_fallthru
    _

// kernel: transformer_forward.32
$region0: #{transformer_forward.32}
  #allocation0 [shape = 'u32[]', space=smem, size = 0x4, offset = 0x4, fixed_abs, tag = 'smem constant byte address 0x4 - core index']
  #allocation1 [shape = 'u32[144,128]{1,0:T(1,128)}', space=vmem, size = 0x12000, scoped, tag = 'internal scratch']
  #allocation2 [shape = 'f32[16,128]{1,0:T(8,128)}', space=vmem, size = 0x2000, scoped, tag = 'scratch operand']
  %s0 = inlined_call_operand.vmem [shape: bf16[16,32], index: 0, kind: input, shape index: {}]
  %s1 = inlined_call_operand.vmem [shape: bf16[32,128], index: 1, kind: input, shape index: {}]
  %s2 = inlined_call_operand.vmem [shape: f32[1,128], index: 2, kind: input, shape index: {}]
  %s3 = inlined_call_operand.vmem [shape: bf16[16,128], index: 3, kind: output, shape index: {}]
  %s4 = sld [smem:[#allocation0]]
  $region30: #{transformer_forward.32} parent=0
    _
  %s6 = ssub.s32 1, %s4
  %s7 = scalar_select 0, %s6, %s4
  // Predicated region
  $region2: #{transformer_forward.32} parent=0 // pred_check
    _
  $region3: #{transformer_forward.32} parent=0 // pred_check_branch
    %9 = sbr.rel (0) target = $region5
  $region4: #{transformer_forward.32} parent=0 // pred_region
    _
  $region5: #{transformer_forward.32} parent=0 // pred_fallthru
    _
  // Predicated region
  $region6: #{transformer_forward.32} parent=0 // pred_check
    _
  $region7: #{transformer_forward.32} parent=0 // pred_check_branch
    %11 = sbr.rel (0) target = $region9
  $region8: #{transformer_forward.32} parent=0 // pred_region
    _
  $region9: #{transformer_forward.32} parent=0 // pred_fallthru
    _
  // Predicated region
  $region10: #{transformer_forward.32} parent=0 // pred_check
    _
  $region11: #{transformer_forward.32} parent=0 // pred_check_branch
    %13 = sbr.rel (0) target = $region13
  $region12: #{transformer_forward.32} parent=0 // pred_region
    _
  $region13: #{transformer_forward.32} parent=0 // pred_fallthru
    _
  %p15 = scmp.eq.s32.totalorder 0, 0
  // Predicated region
  $region14: #{transformer_forward.32} parent=0 // pred_check
    %p16 = pneg %p15
  $region15: #{transformer_forward.32} parent=0 // pred_check_branch
    %18 = sbr.rel (%p16) target = $region17
  $region16: #{transformer_forward.32} parent=0 // pred_region
    %19 = vst [vmem:[#allocation2] sm:$0xff] 0.0
    %20 = vst [vmem:[#allocation2 + $0x8] sm:$0xff] 0.0
  $region17: #{transformer_forward.32} parent=0 // pred_fallthru
    _
  %v21 = vld [vmem:[#allocation2] sm:$0xff]
  %v22 = vld [vmem:[#allocation2 + $0x8] sm:$0xff]
  %v23 = vld [vmem:[%s0] sm:$0xf]
  %v24 = vld [vmem:[%s0 + $0x4] sm:$0xf]
  %v25 = vld [vmem:[%s1] sm:$0xf]
  %v26 = vld [vmem:[%s1 + $0x4] sm:$0xf]
  %v27 = vld [vmem:[%s1 + $0x8] sm:$0xf]
  %v28 = vld [vmem:[%s1 + $0xc] sm:$0xf]
  %v31 = vunpack.c.l.b16 %v23
  %v32 = vunpack.c.l.b16 %v24
  %v33 = vpack.c.b16 %v32, %v31
  %v38 = vunpack.c.l.b16 %v25
  %v39 = vunpack.c.l.b16 %v26
  %v40 = vunpack.c.l.b16 %v27
  %v41 = vunpack.c.l.b16 %v28
  %v42 = vpack.c.b16 %v39, %v38
  %v43 = vpack.c.b16 %v41, %v40
  %vm46 = vcmask 261120
  %v48 = vsel %vm46, %v33, 0
  %50 = vmatprep.subr.bf16.mxu0 0
  %51 = vmatpush1.bf16.msra.mxu0 %v42
  %52 = vmatprep.subr.bf16.mxu0 0
  %53 = vmatpush1.bf16.msra.mxu0 %v43
  %54 = vmatprep.subr.bf16.mxu0 0
  %55 = vmatpush1.bf16.msra.mxu0 0
  %56 = vmatprep.subr.bf16.mxu0 0
  %57 = vmatpush1.bf16.msra.mxu0 0
  %58 = vmatprep.subr.bf16.mxu0 0
  %59 = vmatpush1.bf16.msra.mxu0 0
  %60 = vmatprep.subr.bf16.mxu0 0
  %61 = vmatpush1.bf16.msra.mxu0 0
  %62 = vmatprep.subr.bf16.mxu0 0
  %63 = vmatpush1.bf16.msra.mxu0 0
  %64 = vmatprep.subr.bf16.mxu0 0
  %65 = vmatpush1.bf16.msra.mxu0 0
  %66 = vmatprep.subr.bf16.mxu0 0
  %67 = vmatpush1.bf16.msra.mxu0 0
  %68 = vmatprep.subr.bf16.mxu0 0
  %69 = vmatpush1.bf16.msra.mxu0 0
  %70 = vmatprep.subr.bf16.mxu0 0
  %71 = vmatpush1.bf16.msra.mxu0 0
  %72 = vmatprep.subr.bf16.mxu0 0
  %73 = vmatpush1.bf16.msra.mxu0 0
  %74 = vmatprep.subr.bf16.mxu0 0
  %75 = vmatpush1.bf16.msra.mxu0 0
  %76 = vmatprep.subr.bf16.mxu0 0
  %77 = vmatpush1.bf16.msra.mxu0 0
  %78 = vmatprep.subr.bf16.mxu0 0
  %79 = vmatpush1.bf16.msra.mxu0 0
  %80 = vmatprep.subr.bf16.mxu0 0
  %81 = vmatpush1.bf16.msra.mxu0 0
  %82 = vmatprep.mubr.bf16.mxu0 0
  %83 = vmatmul.mubr.bf16.gmra.mrb[0].mxu0 %v48
  %v84 = vpop.f32.mrb[0].mxu0
  %v85 = vadd.f32 0.0, %v84
  %v86 = vpop.f32.mrb[0].mxu0
  %v87 = vpop.f32.mrb[0].mxu0
  %v88 = vadd.f32 0.0, %v87
  %v89 = vpop.f32.mrb[0].mxu0
  %90 = vdwg.mxu0
  %v91 = vadd.f32 %v21, %v85
  %v92 = vadd.f32 %v22, %v88
  %93 = vst [vmem:[#allocation2] sm:$0xff] %v91
  %94 = vst [vmem:[#allocation2 + $0x8] sm:$0xff] %v92
  // Predicated region
  $region18: #{transformer_forward.32} parent=0 // pred_check
    %p95 = pneg %p15
  $region19: #{transformer_forward.32} parent=0 // pred_check_branch
    %97 = sbr.rel (%p95) target = $region21
  $region20: #{transformer_forward.32} parent=0 // pred_region
    %v98 = vld [vmem:[#allocation2] sm:$0xff]
    %v99 = vld [vmem:[#allocation2 + $0x8] sm:$0xff]
    %v100 = vld [vmem:[%s2] sm:$0x1]
    %v102 = vlaneseq
    %v103 = vshrl.u32 %v102, 7
    %v104 = vsub.s32 0, %v103
    %v105 = vrot.slane %v100, %v104
    %v107 = vadd.f32 %v98, %v105
    %v108 = vadd.f32 %v99, %v105
    %v109 = vmax.f32 %v107, 0.0
    %v110 = vmax.f32 %v108, 0.0
    %v111 = vpack.c.bf16 %v110, %v109
    %v113 = vunpack.c.l.b16 %v111
    %v114 = vunpack.c.h.b16 %v111
    %v115 = vpack.c.b16 %v113, %v113
    %v116 = vpack.c.b16 %v114, %v114
    %119 = vst [vmem:[%s3] sm:$0xf] %v115
    %120 = vst [vmem:[%s3 + $0x4] sm:$0xf] %v116
  $region21: #{transformer_forward.32} parent=0 // pred_fallthru
    _
  // Predicated region
  $region22: #{transformer_forward.32} parent=0 // pred_check
    _
  $region23: #{transformer_forward.32} parent=0 // pred_check_branch
    %122 = sbr.rel (0) target = $region25
  $region24: #{transformer_forward.32} parent=0 // pred_region
    _
  $region25: #{transformer_forward.32} parent=0 // pred_fallthru
    _
  // Predicated region
  $region26: #{transformer_forward.32} parent=0 // pred_check
    _
  $region27: #{transformer_forward.32} parent=0 // pred_check_branch
    %124 = sbr.rel (0) target = $region29
  $region28: #{transformer_forward.32} parent=0 // pred_region
    _
  $region29: #{transformer_forward.32} parent=0 // pred_fallthru
    _

// kernel: transformer_forward.30
$region0: #{transformer_forward.30}
  #allocation0 [shape = 'u32[]', space=smem, size = 0x4, offset = 0x4, fixed_abs, tag = 'smem constant byte address 0x4 - core index']
  #allocation1 [shape = 'u32[144,128]{1,0:T(1,128)}', space=vmem, size = 0x12000, scoped, tag = 'internal scratch']
  %s0 = inlined_call_operand.vmem [shape: bf16[2,4,8,8], index: 0, kind: input, shape index: {}]
  %s1 = inlined_call_operand.vmem [shape: bf16[2,4,8,8], index: 1, kind: input, shape index: {}]
  %s2 = inlined_call_operand.vmem [shape: bf16[2,4,8,8], index: 2, kind: input, shape index: {}]
  %s3 = inlined_call_operand.vmem [shape: f32[2,1,8], index: 3, kind: input, shape index: {}]
  %s4 = inlined_call_operand.vmem [shape: bf16[2,4,8,8], index: 4, kind: output, shape index: {}]
  %s5 = sld [smem:[#allocation0]]
  $region49: #{transformer_forward.30} parent=0
    _
  %s7 = ssub.s32 1, %s5
  %s8 = scalar_select 0, %s7, %s5
  loop: start=0, step=1, limit=10
  $region2: #{transformer_forward.30} parent=0 // loop_pre_header
    _
  $region3: #{transformer_forward.30} parent=0 // loop_header
    %s10 = sphi 0, %s14
    %p11 = scmp.ge.s32.totalorder %s10, 10
    %s17 = sphi 0, %s29
    %s18 = sphi 0, %s25
    %s19 = sphi 0, %s17
    %s20 = sphi 0, %s18
    %s21 = sphi 0, %s19
    %s22 = sphi 0, %s20
    %s34 = sphi 0, %s36
    %s37 = sphi 0, %s34
    %s38 = sphi 0, %s37
    %s54 = sphi 0, %s38
    %s62 = sphi 0, %s64
    %s65 = sphi 0, %s62
    %s66 = sphi 0, %s65
    %s82 = sphi 0, %s66
    %s90 = sphi 0, %s92
    %s93 = sphi 0, %s90
    %s94 = sphi 0, %s93
    %s110 = sphi 0, %s94
    %s116 = sphi 0, %s118
    %s119 = sphi 0, %s116
    %s120 = sphi 0, %s119
    %s136 = sphi 0, %s120
    %s144 = sphi 0, %s146
    %s147 = sphi 0, %s144
    %s148 = sphi 0, %s147
    %s164 = sphi 0, %s148
  $region4: #{transformer_forward.30} parent=0 // loop_header_branch
    %13 = sbr.rel (%p11) target = $region8
  $region5: #{transformer_forward.30} parent=0 // loop_body
    %s15 = ssub.s32 %s10, 1
    %s16 = ssub.s32 %s10, 2
    %s23 = sadd.s32 1, %s18
    %p24 = scmp.ge.s32.totalorder %s23, 4
    %s25 = scalar_select %p24, 0, %s23
    %s26 = sadd.s32 1, %s17
    %s27 = scalar_select %p24, %s26, %s17
    %p28 = scmp.ge.s32.totalorder %s27, 2
    %s29 = scalar_select %p28, 0, %s27
    %s30 = ssub.s32 %s17, %s29
    %s31 = ssub.s32 %s18, %s25
    %s32 = sor.u32 %s30, %s31
    %p33 = scmp.eq.s32.totalorder %s32, 0
    %s35 = sadd.s32 %s34, 1
    %s36 = scalar_select %p33, %s34, %s35
    %p39 = pneg %p33
    %p40 = scmp.eq.s32.totalorder %s10, 7
    %p41 = por %p39, %p40
    %p42 = scmp.ne.s32.totalorder %s34, %s37
    %p43 = scmp.eq.s32.totalorder %s10, 0
    %p44 = por %p42, %p43
    %p45 = scmp.ne.s32.totalorder %s34, %s37
    %p46 = scmp.eq.s32.totalorder %s15, 7
    %p47 = por %p45, %p46
    %p48 = scmp.ne.s32.totalorder %s37, %s38
    %p49 = scmp.eq.s32.totalorder %s15, 0
    %p50 = por %p48, %p49
    %p51 = scmp.ne.s32.totalorder %s37, %s38
    %p52 = scmp.eq.s32.totalorder %s16, 7
    %p53 = por %p51, %p52
    %p55 = scmp.ne.s32.totalorder %s38, %s54
    %p56 = scmp.eq.s32.totalorder %s16, 0
    %p57 = por %p55, %p56
    %s58 = ssub.s32 %s17, %s29
    %s59 = ssub.s32 %s18, %s25
    %s60 = sor.u32 %s58, %s59
    %p61 = scmp.eq.s32.totalorder %s60, 0
    %s63 = sadd.s32 %s62, 1
    %s64 = scalar_select %p61, %s62, %s63
    %p67 = pneg %p61
    %p68 = scmp.eq.s32.totalorder %s10, 7
    %p69 = por %p67, %p68
    %p70 = scmp.ne.s32.totalorder %s62, %s65
    %p71 = scmp.eq.s32.totalorder %s10, 0
    %p72 = por %p70, %p71
    %p73 = scmp.ne.s32.totalorder %s62, %s65
    %p74 = scmp.eq.s32.totalorder %s15, 7
    %p75 = por %p73, %p74
    %p76 = scmp.ne.s32.totalorder %s65, %s66
    %p77 = scmp.eq.s32.totalorder %s15, 0
    %p78 = por %p76, %p77
    %p79 = scmp.ne.s32.totalorder %s65, %s66
    %p80 = scmp.eq.s32.totalorder %s16, 7
    %p81 = por %p79, %p80
    %p83 = scmp.ne.s32.totalorder %s66, %s82
    %p84 = scmp.eq.s32.totalorder %s16, 0
    %p85 = por %p83, %p84
    %s86 = ssub.s32 %s17, %s29
    %s87 = ssub.s32 %s18, %s25
    %s88 = sor.u32 %s86, %s87
    %p89 = scmp.eq.s32.totalorder %s88, 0
    %s91 = sadd.s32 %s90, 1
    %s92 = scalar_select %p89, %s90, %s91
    %p95 = pneg %p89
    %p96 = scmp.eq.s32.totalorder %s10, 7
    %p97 = por %p95, %p96
    %p98 = scmp.ne.s32.totalorder %s90, %s93
    %p99 = scmp.eq.s32.totalorder %s10, 0
    %p100 = por %p98, %p99
    %p101 = scmp.ne.s32.totalorder %s90, %s93
    %p102 = scmp.eq.s32.totalorder %s15, 7
    %p103 = por %p101, %p102
    %p104 = scmp.ne.s32.totalorder %s93, %s94
    %p105 = scmp.eq.s32.totalorder %s15, 0
    %p106 = por %p104, %p105
    %p107 = scmp.ne.s32.totalorder %s93, %s94
    %p108 = scmp.eq.s32.totalorder %s16, 7
    %p109 = por %p107, %p108
    %p111 = scmp.ne.s32.totalorder %s94, %s110
    %p112 = scmp.eq.s32.totalorder %s16, 0
    %p113 = por %p111, %p112
    %s114 = ssub.s32 %s17, %s29
    %p115 = scmp.eq.s32.totalorder %s114, 0
    %s117 = sadd.s32 %s116, 1
    %s118 = scalar_select %p115, %s116, %s117
    %p121 = pneg %p115
    %p122 = scmp.eq.s32.totalorder %s10, 7
    %p123 = por %p121, %p122
    %p124 = scmp.ne.s32.totalorder %s116, %s119
    %p125 = scmp.eq.s32.totalorder %s10, 0
    %p126 = por %p124, %p125
    %p127 = scmp.ne.s32.totalorder %s116, %s119
    %p128 = scmp.eq.s32.totalorder %s15, 7
    %p129 = por %p127, %p128
    %p130 = scmp.ne.s32.totalorder %s119, %s120
    %p131 = scmp.eq.s32.totalorder %s15, 0
    %p132 = por %p130, %p131
    %p133 = scmp.ne.s32.totalorder %s119, %s120
    %p134 = scmp.eq.s32.totalorder %s16, 7
    %p135 = por %p133, %p134
    %p137 = scmp.ne.s32.totalorder %s120, %s136
    %p138 = scmp.eq.s32.totalorder %s16, 0
    %p139 = por %p137, %p138
    %s140 = ssub.s32 %s17, %s29
    %s141 = ssub.s32 %s18, %s25
    %s142 = sor.u32 %s140, %s141
    %p143 = scmp.eq.s32.totalorder %s142, 0
    %s145 = sadd.s32 %s144, 1
    %s146 = scalar_select %p143, %s144, %s145
    %p149 = pneg %p143
    %p150 = scmp.eq.s32.totalorder %s10, 7
    %p151 = por %p149, %p150
    %p152 = scmp.ne.s32.totalorder %s144, %s147
    %p153 = scmp.eq.s32.totalorder %s10, 0
    %p154 = por %p152, %p153
    %p155 = scmp.ne.s32.totalorder %s144, %s147
    %p156 = scmp.eq.s32.totalorder %s15, 7
    %p157 = por %p155, %p156
    %p158 = scmp.ne.s32.totalorder %s147, %s148
    %p159 = scmp.eq.s32.totalorder %s15, 0
    %p160 = por %p158, %p159
    %p161 = scmp.ne.s32.totalorder %s147, %s148
    %p162 = scmp.eq.s32.totalorder %s16, 7
    %p163 = por %p161, %p162
    %p165 = scmp.ne.s32.totalorder %s148, %s164
    %p166 = scmp.eq.s32.totalorder %s16, 0
    %p167 = por %p165, %p166
    %p168 = scmp.le.s32.totalorder 1, %s10
    %p169 = scmp.lt.s32.totalorder %s10, 9
    %p170 = pnand %p168, %p169
    %p171 = pneg %p170
    // Predicated region
    $region9: #{transformer_forward.30} parent=5 // pred_check
      _
    $region10: #{transformer_forward.30} parent=5 // pred_check_branch
      %173 = sbr.rel (%p170) target = $region12
    $region11: #{transformer_forward.30} parent=5 // pred_region
      %s174 = ssub.s32 %s10, 1
    $region12: #{transformer_forward.30} parent=5 // pred_fallthru
      _
    %p175 = scmp.lt.s32.totalorder %s10, 8
    // Predicated region
    $region13: #{transformer_forward.30} parent=5 // pred_check
      %p176 = pneg %p175
    $region14: #{transformer_forward.30} parent=5 // pred_check_branch
      %178 = sbr.rel (%p176) target = $region16
    $region15: #{transformer_forward.30} parent=5 // pred_region
      // Predicated region
      $region17: #{transformer_forward.30} parent=15 // pred_check
        %p179 = pneg %p44
      $region18: #{transformer_forward.30} parent=15 // pred_check_branch
        %181 = sbr.rel (%p179) target = $region20
      $region19: #{transformer_forward.30} parent=15 // pred_region
        %p182 = scmp.lt.s32.totalorder %s17, 1
        %s183 = scalar_select %p182, %s17, 1
        %p184 = scmp.lt.s32.totalorder %s18, 3
        %s185 = scalar_select %p184, %s18, 3
        %s186 = smul.addr %s183, 4
        %s187 = sadd.s32 %s185, %s186
        %s188 = smul.addr %s187, 4
        %s189 = scalar_lea.vmem %s0, %s188
      $region20: #{transformer_forward.30} parent=15 // pred_fallthru
        _
      // Predicated region
      $region21: #{transformer_forward.30} parent=15 // pred_check
        %p190 = pneg %p72
      $region22: #{transformer_forward.30} parent=15 // pred_check_branch
        %192 = sbr.rel (%p190) target = $region24
      $region23: #{transformer_forward.30} parent=15 // pred_region
        %p193 = scmp.lt.s32.totalorder %s17, 1
        %s194 = scalar_select %p193, %s17, 1
        %p195 = scmp.lt.s32.totalorder %s18, 3
        %s196 = scalar_select %p195, %s18, 3
        %s197 = smul.addr %s194, 4
        %s198 = sadd.s32 %s196, %s197
        %s199 = smul.addr %s198, 4
        %s200 = scalar_lea.vmem %s1, %s199
      $region24: #{transformer_forward.30} parent=15 // pred_fallthru
        _
      // Predicated region
      $region25: #{transformer_forward.30} parent=15 // pred_check
        %p201 = pneg %p100
      $region26: #{transformer_forward.30} parent=15 // pred_check_branch
        %203 = sbr.rel (%p201) target = $region28
      $region27: #{transformer_forward.30} parent=15 // pred_region
        %p204 = scmp.lt.s32.totalorder %s17, 1
        %s205 = scalar_select %p204, %s17, 1
        %p206 = scmp.lt.s32.totalorder %s18, 3
        %s207 = scalar_select %p206, %s18, 3
        %s208 = smul.addr %s205, 4
        %s209 = sadd.s32 %s207, %s208
        %s210 = smul.addr %s209, 4
        %s211 = scalar_lea.vmem %s2, %s210
      $region28: #{transformer_forward.30} parent=15 // pred_fallthru
        _
      // Predicated region
      $region29: #{transformer_forward.30} parent=15 // pred_check
        %p212 = pneg %p126
      $region30: #{transformer_forward.30} parent=15 // pred_check_branch
        %214 = sbr.rel (%p212) target = $region32
      $region31: #{transformer_forward.30} parent=15 // pred_region
        %p215 = scmp.lt.s32.totalorder %s17, 1
        %s216 = scalar_select %p215, %s17, 1
        %s217 = scalar_lea.vmem %s3, %s216
      $region32: #{transformer_forward.30} parent=15 // pred_fallthru
        _
    $region16: #{transformer_forward.30} parent=5 // pred_fallthru
      _
    %p218 = scmp.le.s32.totalorder 1, %s10
    %p219 = scmp.lt.s32.totalorder %s10, 9
    %p220 = pnand %p218, %p219
    %p221 = pneg %p220
    // Predicated region
    $region33: #{transformer_forward.30} parent=5 // pred_check
      _
    $region34: #{transformer_forward.30} parent=5 // pred_check_branch
      %223 = sbr.rel (%p220) target = $region36
    $region35: #{transformer_forward.30} parent=5 // pred_region
      %s224 = ssub.s32 %s10, 1
      %p225 = scmp.lt.s32.totalorder %s19, 1
      %s226 = scalar_select %p225, %s19, 1
      %p227 = scmp.lt.s32.totalorder %s20, 3
      %s228 = scalar_select %p227, %s20, 3
      %s229 = smul.addr %s226, 4
      %s230 = sadd.s32 %s228, %s229
      %s231 = smul.addr %s230, 4
      %s232 = scalar_lea.vmem %s0, %s231
      %p233 = pneg %p50
      %p234 = pneg %p47
      %p235 = scmp.lt.s32.totalorder %s19, 1
      %s236 = scalar_select %p235, %s19, 1
      %p237 = scmp.lt.s32.totalorder %s20, 3
      %s238 = scalar_select %p237, %s20, 3
      %s239 = smul.addr %s236, 4
      %s240 = sadd.s32 %s238, %s239
      %s241 = smul.addr %s240, 4
      %s242 = scalar_lea.vmem %s1, %s241
      %p243 = pneg %p78
      %p244 = pneg %p75
      %p245 = scmp.lt.s32.totalorder %s19, 1
      %s246 = scalar_select %p245, %s19, 1
      %p247 = scmp.lt.s32.totalorder %s20, 3
      %s248 = scalar_select %p247, %s20, 3
      %s249 = smul.addr %s246, 4
      %s250 = sadd.s32 %s248, %s249
      %s251 = smul.addr %s250, 4
      %s252 = scalar_lea.vmem %s2, %s251
      %p253 = pneg %p106
      %p254 = pneg %p103
      %p255 = scmp.lt.s32.totalorder %s19, 1
      %s256 = scalar_select %p255, %s19, 1
      %s257 = scalar_lea.vmem %s3, %s256
      %p258 = pneg %p132
      %p259 = pneg %p129
      %p260 = pneg %p160
      %p261 = pneg %p157
      %p262 = scmp.lt.s32.totalorder %s19, 1
      %s263 = scalar_select %p262, %s19, 1
      %p264 = scmp.lt.s32.totalorder %s20, 3
      %s265 = scalar_select %p264, %s20, 3
      %s266 = smul.addr %s263, 4
      %s267 = sadd.s32 %s265, %s266
      %s268 = smul.addr %s267, 4
      %s269 = scalar_lea.vmem %s4, %s268
      %p270 = scmp.lt.s32.totalorder %s19, 1
      %s271 = scalar_select %p270, %s19, 1
      %p272 = scmp.lt.s32.totalorder %s20, 3
      %s273 = scalar_select %p272, %s20, 3
      %s274 = smul.addr %s271, 4
      %s275 = sadd.s32 %s273, %s274
      %s276 = smul.addr %s275, 4
      %s277 = scalar_lea.vmem %s0, %s276
      %p278 = scmp.lt.s32.totalorder %s19, 1
      %s279 = scalar_select %p278, %s19, 1
      %p280 = scmp.lt.s32.totalorder %s20, 3
      %s281 = scalar_select %p280, %s20, 3
      %s282 = smul.addr %s279, 4
      %s283 = sadd.s32 %s281, %s282
      %s284 = smul.addr %s283, 4
      %s285 = scalar_lea.vmem %s1, %s284
      %p286 = scmp.lt.s32.totalorder %s19, 1
      %s287 = scalar_select %p286, %s19, 1
      %p288 = scmp.lt.s32.totalorder %s20, 3
      %s289 = scalar_select %p288, %s20, 3
      %s290 = smul.addr %s287, 4
      %s291 = sadd.s32 %s289, %s290
      %s292 = smul.addr %s291, 4
      %s293 = scalar_lea.vmem %s2, %s292
      %p294 = scmp.lt.s32.totalorder %s19, 1
      %s295 = scalar_select %p294, %s19, 1
      %s296 = scalar_lea.vmem %s3, %s295
      %p297 = scmp.lt.s32.totalorder %s19, 1
      %s298 = scalar_select %p297, %s19, 1
      %p299 = scmp.lt.s32.totalorder %s20, 3
      %s300 = scalar_select %p299, %s20, 3
      %s301 = smul.addr %s298, 4
      %s302 = sadd.s32 %s300, %s301
      %s303 = smul.addr %s302, 4
      %s304 = scalar_lea.vmem %s4, %s303
      %v306 = vld [vmem:[%s277] sm:$0xf]
      %v307 = vld [vmem:[%s285] sm:$0xf]
      %v308 = vld [vmem:[%s293] sm:$0xf]
      %vm309 = vcmask 64512
      %v311 = vsel %vm309, %v306, 0
      %v314 = vsel %vm309, %v307, 0
      %316 = vmatprep.subr.bf16.mxu0 0
      %317 = vmatpush1.bf16.xpose.msra.mxu0 %v314
      %318 = vmatprep.subr.bf16.mxu0 0
      %319 = vmatpush1.bf16.xpose.msra.mxu0 0
      %320 = vmatprep.subr.bf16.mxu0 0
      %321 = vmatpush1.bf16.xpose.msra.mxu0 0
      %322 = vmatprep.subr.bf16.mxu0 0
      %323 = vmatpush1.bf16.xpose.msra.mxu0 0
      %324 = vmatprep.subr.bf16.mxu0 0
      %325 = vmatpush1.bf16.xpose.msra.mxu0 0
      %326 = vmatprep.subr.bf16.mxu0 0
      %327 = vmatpush1.bf16.xpose.msra.mxu0 0
      %328 = vmatprep.subr.bf16.mxu0 0
      %329 = vmatpush1.bf16.xpose.msra.mxu0 0
      %330 = vmatprep.subr.bf16.mxu0 0
      %331 = vmatpush1.bf16.xpose.msra.mxu0 0
      %332 = vmatprep.subr.bf16.mxu0 0
      %333 = vmatpush1.bf16.xpose.msra.mxu0 0
      %334 = vmatprep.subr.bf16.mxu0 0
      %335 = vmatpush1.bf16.xpose.msra.mxu0 0
      %336 = vmatprep.subr.bf16.mxu0 0
      %337 = vmatpush1.bf16.xpose.msra.mxu0 0
      %338 = vmatprep.subr.bf16.mxu0 0
      %339 = vmatpush1.bf16.xpose.msra.mxu0 0
      %340 = vmatprep.subr.bf16.mxu0 0
      %341 = vmatpush1.bf16.xpose.msra.mxu0 0
      %342 = vmatprep.subr.bf16.mxu0 0
      %343 = vmatpush1.bf16.xpose.msra.mxu0 0
      %344 = vmatprep.subr.bf16.mxu0 0
      %345 = vmatpush1.bf16.xpose.msra.mxu0 0
      %346 = vmatprep.subr.bf16.mxu0 0
      %347 = vmatpush1.bf16.xpose.msra.mxu0 0
      %348 = vmatprep.mubr.bf16.mxu0 0
      %349 = vmatmul.mubr.bf16.gmra.mrb[0].mxu0 %v311
      %v350 = vpop.f32.mrb[0].mxu0
      %v351 = vadd.f32 0.0, %v350
      %v352 = vpop.f32.mrb[0].mxu0
      %v353 = vpop.f32.mrb[0].mxu0
      %v354 = vpop.f32.mrb[0].mxu0
      %355 = vdwg.mxu0
      %v356 = vmul.f32 %v351, 0.35355338
      %v357 = vld [vmem:[%s296] sm:$0x1]
      %vm358 = vcmp.gt.f32.partialorder %v357, 0.0
      %v359 = vsel %vm358, 1, 0
      %v360 = vlaneseq
      %v361 = vshrl.u32 %v360, 7
      %v362 = vsub.s32 0, %v361
      %v363 = vrot.slane %v359, %v362
      %vm364 = vcmp.eq.s32.totalorder %v363, 1
      %v365 = vsel %vm364, %v356, -1e+09
      %v366 = vsel %vm309, %v365, -inf
      %367 = vmax.xlane.f32.xlu0 %v366
      %v368 = vpop.xlane.xlu0 %367
      %v369 = vsub.f32 %v365, %v368
      %v370 = vmul.f32 %v369, 1.442695
      %v371 = vpow.pop %v370
      %v372 = vsel %vm309, %v371, 0.0
      %373 = vadd.xlane.f32.xlu0 %v372
      %v374 = vpop.xlane.xlu0 %373
      %v375 = vrcp.pop %v374
      %v376 = vmul.f32 %v371, %v375
      %v377 = vpack.c.bf16 %v376, %v376
      %v379 = vsel %vm309, %v377, 0
      %vm381 = vcmask 1043456
      %v383 = vsel %vm381, %v308, 0
      %385 = vmatprep.subr.bf16.mxu0 0
      %386 = vmatpush1.bf16.msra.mxu0 %v383
      %387 = vmatprep.subr.bf16.mxu0 0
      %388 = vmatpush1.bf16.msra.mxu0 0
      %389 = vmatprep.subr.bf16.mxu0 0
      %390 = vmatpush1.bf16.msra.mxu0 0
      %391 = vmatprep.subr.bf16.mxu0 0
      %392 = vmatpush1.bf16.msra.mxu0 0
      %393 = vmatprep.subr.bf16.mxu0 0
      %394 = vmatpush1.bf16.msra.mxu0 0
      %395 = vmatprep.subr.bf16.mxu0 0
      %396 = vmatpush1.bf16.msra.mxu0 0
      %397 = vmatprep.subr.bf16.mxu0 0
      %398 = vmatpush1.bf16.msra.mxu0 0
      %399 = vmatprep.subr.bf16.mxu0 0
      %400 = vmatpush1.bf16.msra.mxu0 0
      %401 = vmatprep.subr.bf16.mxu0 0
      %402 = vmatpush1.bf16.msra.mxu0 0
      %403 = vmatprep.subr.bf16.mxu0 0
      %404 = vmatpush1.bf16.msra.mxu0 0
      %405 = vmatprep.subr.bf16.mxu0 0
      %406 = vmatpush1.bf16.msra.mxu0 0
      %407 = vmatprep.subr.bf16.mxu0 0
      %408 = vmatpush1.bf16.msra.mxu0 0
      %409 = vmatprep.subr.bf16.mxu0 0
      %410 = vmatpush1.bf16.msra.mxu0 0
      %411 = vmatprep.subr.bf16.mxu0 0
      %412 = vmatpush1.bf16.msra.mxu0 0
      %413 = vmatprep.subr.bf16.mxu0 0
      %414 = vmatpush1.bf16.msra.mxu0 0
      %415 = vmatprep.subr.bf16.mxu0 0
      %416 = vmatpush1.bf16.msra.mxu0 0
      %417 = vmatprep.mubr.bf16.mxu0 0
      %418 = vmatmul.mubr.bf16.gmra.mrb[0].mxu0 %v379
      %v419 = vpop.f32.mrb[0].mxu0
      %v420 = vadd.f32 0.0, %v419
      %v421 = vpop.f32.mrb[0].mxu0
      %v422 = vpop.f32.mrb[0].mxu0
      %v423 = vpop.f32.mrb[0].mxu0
      %424 = vdwg.mxu0
      %v425 = vpack.c.bf16 %v420, %v420
      %vm426 = vcmask 60416
      %427 = vst.msk [vmem:[%s304] sm:$0xf] %vm426, %v425
      %p428 = scmp.lt.s32.totalorder %s19, 1
      %s429 = scalar_select %p428, %s19, 1
      %p430 = scmp.lt.s32.totalorder %s20, 3
      %s431 = scalar_select %p430, %s20, 3
      %s432 = smul.addr %s429, 4
      %s433 = sadd.s32 %s431, %s432
      %s434 = smul.addr %s433, 4
      %s435 = scalar_lea.vmem %s4, %s434
      // Predicated region
      $region37: #{transformer_forward.30} parent=35 // pred_check
        %p436 = pneg %p157
      $region38: #{transformer_forward.30} parent=35 // pred_check_branch
        %438 = sbr.rel (%p436) target = $region40
      $region39: #{transformer_forward.30} parent=35 // pred_region
        _
      $region40: #{transformer_forward.30} parent=35 // pred_fallthru
        _
    $region36: #{transformer_forward.30} parent=5 // pred_fallthru
      _
    %p439 = scmp.le.s32.totalorder 2, %s10
    // Predicated region
    $region41: #{transformer_forward.30} parent=5 // pred_check
      %p440 = pneg %p439
    $region42: #{transformer_forward.30} parent=5 // pred_check_branch
      %442 = sbr.rel (%p440) target = $region44
    $region43: #{transformer_forward.30} parent=5 // pred_region
      %s443 = ssub.s32 %s10, 2
      // Predicated region
      $region45: #{transformer_forward.30} parent=43 // pred_check
        %p444 = pneg %p163
      $region46: #{transformer_forward.30} parent=43 // pred_check_branch
        %446 = sbr.rel (%p444) target = $region48
      $region47: #{transformer_forward.30} parent=43 // pred_region
        %p447 = scmp.lt.s32.totalorder %s21, 1
        %s448 = scalar_select %p447, %s21, 1
        %p449 = scmp.lt.s32.totalorder %s22, 3
        %s450 = scalar_select %p449, %s22, 3
        %s451 = smul.addr %s448, 4
        %s452 = sadd.s32 %s450, %s451
        %s453 = smul.addr %s452, 4
        %s454 = scalar_lea.vmem %s4, %s453
      $region48: #{transformer_forward.30} parent=43 // pred_fallthru
        _
    $region44: #{transformer_forward.30} parent=5 // pred_fallthru
      _
  $region6: #{transformer_forward.30} parent=0 // loop_footer
    %s14 = sadd.s32 1, %s10
  $region7: #{transformer_forward.30} parent=0 // loop_footer_branch
    %9 = sbr.rel target = $region3
  $region8: #{transformer_forward.30} parent=0 // loop_exit
    _

// kernel: transformer_forward.33
$region0: #{transformer_forward.33}
  #allocation0 [shape = 'u32[]', space=smem, size = 0x4, offset = 0x4, fixed_abs, tag = 'smem constant byte address 0x4 - core index']
  #allocation1 [shape = 'u32[144,128]{1,0:T(1,128)}', space=vmem, size = 0x12000, scoped, tag = 'internal scratch']
  #allocation2 [shape = 'f32[16,32]{1,0:T(8,128)}', space=vmem, size = 0x2000, scoped, tag = 'scratch operand']
  %s0 = inlined_call_operand.vmem [shape: bf16[16,128], index: 0, kind: input, shape index: {}]
  %s1 = inlined_call_operand.vmem [shape: bf16[128,32], index: 1, kind: input, shape index: {}]
  %s2 = inlined_call_operand.vmem [shape: f32[1,32], index: 2, kind: input, shape index: {}]
  %s3 = inlined_call_operand.vmem [shape: bf16[16,32], index: 3, kind: input, shape index: {}]
  %s4 = inlined_call_operand.vmem [shape: f32[1,32], index: 4, kind: input, shape index: {}]
  %s5 = inlined_call_operand.vmem [shape: f32[1,32], index: 5, kind: input, shape index: {}]
  %s6 = inlined_call_operand.vmem [shape: bf16[16,32], index: 6, kind: output, shape index: {}]
  %s7 = sld [smem:[#allocation0]]
  $region42: #{transformer_forward.33} parent=0
    _
  %s9 = ssub.s32 1, %s7
  %s10 = scalar_select 0, %s9, %s7
  // Predicated region
  $region2: #{transformer_forward.33} parent=0 // pred_check
    _
  $region3: #{transformer_forward.33} parent=0 // pred_check_branch
    %12 = sbr.rel (0) target = $region5
  $region4: #{transformer_forward.33} parent=0 // pred_region
    _
  $region5: #{transformer_forward.33} parent=0 // pred_fallthru
    _
  // Predicated region
  $region6: #{transformer_forward.33} parent=0 // pred_check
    _
  $region7: #{transformer_forward.33} parent=0 // pred_check_branch
    %14 = sbr.rel (0) target = $region9
  $region8: #{transformer_forward.33} parent=0 // pred_region
    _
  $region9: #{transformer_forward.33} parent=0 // pred_fallthru
    _
  // Predicated region
  $region10: #{transformer_forward.33} parent=0 // pred_check
    _
  $region11: #{transformer_forward.33} parent=0 // pred_check_branch
    %16 = sbr.rel (0) target = $region13
  $region12: #{transformer_forward.33} parent=0 // pred_region
    _
  $region13: #{transformer_forward.33} parent=0 // pred_fallthru
    _
  // Predicated region
  $region14: #{transformer_forward.33} parent=0 // pred_check
    _
  $region15: #{transformer_forward.33} parent=0 // pred_check_branch
    %18 = sbr.rel (0) target = $region17
  $region16: #{transformer_forward.33} parent=0 // pred_region
    _
  $region17: #{transformer_forward.33} parent=0 // pred_fallthru
    _
  // Predicated region
  $region18: #{transformer_forward.33} parent=0 // pred_check
    _
  $region19: #{transformer_forward.33} parent=0 // pred_check_branch
    %20 = sbr.rel (0) target = $region21
  $region20: #{transformer_forward.33} parent=0 // pred_region
    _
  $region21: #{transformer_forward.33} parent=0 // pred_fallthru
    _
  // Predicated region
  $region22: #{transformer_forward.33} parent=0 // pred_check
    _
  $region23: #{transformer_forward.33} parent=0 // pred_check_branch
    %22 = sbr.rel (0) target = $region25
  $region24: #{transformer_forward.33} parent=0 // pred_region
    _
  $region25: #{transformer_forward.33} parent=0 // pred_fallthru
    _
  %p24 = scmp.eq.s32.totalorder 0, 0
  // Predicated region
  $region26: #{transformer_forward.33} parent=0 // pred_check
    %p25 = pneg %p24
  $region27: #{transformer_forward.33} parent=0 // pred_check_branch
    %27 = sbr.rel (%p25) target = $region29
  $region28: #{transformer_forward.33} parent=0 // pred_region
    %vm28 = vcmask 261120
    %29 = vst.msk [vmem:[#allocation2] sm:$0xff] %vm28, 0.0
    %30 = vst.msk [vmem:[#allocation2 + $0x8] sm:$0xff] %vm28, 0.0
  $region29: #{transformer_forward.33} parent=0 // pred_fallthru
    _
  %v31 = vld [vmem:[#allocation2] sm:$0xff]
  %v32 = vld [vmem:[#allocation2 + $0x8] sm:$0xff]
  %v33 = vld [vmem:[%s0] sm:$0xf]
  %v34 = vld [vmem:[%s0 + $0x4] sm:$0xf]
  %v35 = vld [vmem:[%s1] sm:$0xf]
  %v36 = vld [vmem:[%s1 + $0x4] sm:$0xf]
  %v37 = vld [vmem:[%s1 + $0x8] sm:$0xf]
  %v38 = vld [vmem:[%s1 + $0xc] sm:$0xf]
  %v39 = vld [vmem:[%s1 + $0x10] sm:$0xf]
  %v40 = vld [vmem:[%s1 + $0x14] sm:$0xf]
  %v41 = vld [vmem:[%s1 + $0x18] sm:$0xf]
  %v42 = vld [vmem:[%s1 + $0x1c] sm:$0xf]
  %v43 = vld [vmem:[%s1 + $0x20] sm:$0xf]
  %v44 = vld [vmem:[%s1 + $0x24] sm:$0xf]
  %v45 = vld [vmem:[%s1 + $0x28] sm:$0xf]
  %v46 = vld [vmem:[%s1 + $0x2c] sm:$0xf]
  %v47 = vld [vmem:[%s1 + $0x30] sm:$0xf]
  %v48 = vld [vmem:[%s1 + $0x34] sm:$0xf]
  %v49 = vld [vmem:[%s1 + $0x38] sm:$0xf]
  %v50 = vld [vmem:[%s1 + $0x3c] sm:$0xf]
  %v53 = vunpack.c.l.b16 %v33
  %v54 = vunpack.c.l.b16 %v34
  %v55 = vpack.c.b16 %v54, %v53
  %v73 = vunpack.c.l.b16 %v35
  %v74 = vunpack.c.l.b16 %v36
  %v75 = vunpack.c.l.b16 %v37
  %v76 = vunpack.c.l.b16 %v38
  %v77 = vunpack.c.l.b16 %v39
  %v78 = vunpack.c.l.b16 %v40
  %v79 = vunpack.c.l.b16 %v41
  %v80 = vunpack.c.l.b16 %v42
  %v81 = vunpack.c.l.b16 %v43
  %v82 = vunpack.c.l.b16 %v44
  %v83 = vunpack.c.l.b16 %v45
  %v84 = vunpack.c.l.b16 %v46
  %v85 = vunpack.c.l.b16 %v47
  %v86 = vunpack.c.l.b16 %v48
  %v87 = vunpack.c.l.b16 %v49
  %v88 = vunpack.c.l.b16 %v50
  %v89 = vpack.c.b16 %v74, %v73
  %v90 = vpack.c.b16 %v76, %v75
  %v91 = vpack.c.b16 %v78, %v77
  %v92 = vpack.c.b16 %v80, %v79
  %v93 = vpack.c.b16 %v82, %v81
  %v94 = vpack.c.b16 %v84, %v83
  %v95 = vpack.c.b16 %v86, %v85
  %v96 = vpack.c.b16 %v88, %v87
  %105 = vmatprep.subr.bf16.mxu0 0
  %106 = vmatpush1.bf16.msra.mxu0 %v89
  %107 = vmatprep.subr.bf16.mxu0 0
  %108 = vmatpush1.bf16.msra.mxu0 %v90
  %109 = vmatprep.subr.bf16.mxu0 0
  %110 = vmatpush1.bf16.msra.mxu0 %v91
  %111 = vmatprep.subr.bf16.mxu0 0
  %112 = vmatpush1.bf16.msra.mxu0 %v92
  %113 = vmatprep.subr.bf16.mxu0 0
  %114 = vmatpush1.bf16.msra.mxu0 %v93
  %115 = vmatprep.subr.bf16.mxu0 0
  %116 = vmatpush1.bf16.msra.mxu0 %v94
  %117 = vmatprep.subr.bf16.mxu0 0
  %118 = vmatpush1.bf16.msra.mxu0 %v95
  %119 = vmatprep.subr.bf16.mxu0 0
  %120 = vmatpush1.bf16.msra.mxu0 %v96
  %121 = vmatprep.subr.bf16.mxu0 0
  %122 = vmatpush1.bf16.msra.mxu0 0
  %123 = vmatprep.subr.bf16.mxu0 0
  %124 = vmatpush1.bf16.msra.mxu0 0
  %125 = vmatprep.subr.bf16.mxu0 0
  %126 = vmatpush1.bf16.msra.mxu0 0
  %127 = vmatprep.subr.bf16.mxu0 0
  %128 = vmatpush1.bf16.msra.mxu0 0
  %129 = vmatprep.subr.bf16.mxu0 0
  %130 = vmatpush1.bf16.msra.mxu0 0
  %131 = vmatprep.subr.bf16.mxu0 0
  %132 = vmatpush1.bf16.msra.mxu0 0
  %133 = vmatprep.subr.bf16.mxu0 0
  %134 = vmatpush1.bf16.msra.mxu0 0
  %135 = vmatprep.subr.bf16.mxu0 0
  %136 = vmatpush1.bf16.msra.mxu0 0
  %137 = vmatprep.mubr.bf16.mxu0 0
  %138 = vmatmul.mubr.bf16.gmra.mrb[0].mxu0 %v55
  %v139 = vpop.f32.mrb[0].mxu0
  %v140 = vadd.f32 0.0, %v139
  %v141 = vpop.f32.mrb[0].mxu0
  %v142 = vpop.f32.mrb[0].mxu0
  %v143 = vadd.f32 0.0, %v142
  %v144 = vpop.f32.mrb[0].mxu0
  %145 = vdwg.mxu0
  %v146 = vadd.f32 %v31, %v140
  %v147 = vadd.f32 %v32, %v143
  %vm148 = vcmask 261120
  %149 = vst.msk [vmem:[#allocation2] sm:$0xff] %vm148, %v146
  %150 = vst.msk [vmem:[#allocation2 + $0x8] sm:$0xff] %vm148, %v147
  // Predicated region
  $region30: #{transformer_forward.33} parent=0 // pred_check
    %p151 = pneg %p24
  $region31: #{transformer_forward.33} parent=0 // pred_check_branch
    %153 = sbr.rel (%p151) target = $region33
  $region32: #{transformer_forward.33} parent=0 // pred_region
    %v154 = vld [vmem:[#allocation2] sm:$0xff]
    %v155 = vld [vmem:[#allocation2 + $0x8] sm:$0xff]
    %v156 = vld [vmem:[%s2] sm:$0x1]
    %v158 = vlaneseq
    %v159 = vshrl.u32 %v158, 7
    %v160 = vsub.s32 0, %v159
    %v161 = vrot.slane %v156, %v160
    %v163 = vadd.f32 %v154, %v161
    %v164 = vadd.f32 %v155, %v161
    %v165 = vld [vmem:[%s3] sm:$0xf]
    %v166 = vld [vmem:[%s3 + $0x4] sm:$0xf]
    %v167 = vunpack.c.l.bf16 %v165
    %v168 = vunpack.c.l.bf16 %v166
    %v169 = vadd.f32 %v163, %v167
    %v170 = vadd.f32 %v164, %v168
    %v171 = vsel %vm148, %v169, 0.0
    %172 = vadd.xlane.f32.xlu0 %v171
    %v173 = vpop.xlane.xlu0 %172
    %v174 = vsel %vm148, %v170, 0.0
    %175 = vadd.xlane.f32.xlu0 %v174
    %v176 = vpop.xlane.xlu0 %175
    %v177 = vrcp.pop 32.0
    %v178 = vmul.f32 %v173, %v177
    %v179 = vmul.f32 %v176, %v177
    %v180 = vsub.f32 %v169, %v178
    %v181 = vsub.f32 %v170, %v179
    %v182 = vmul.f32 %v180, %v180
    %v183 = vmul.f32 %v181, %v181
    %v184 = vsel %vm148, %v182, 0.0
    %185 = vadd.xlane.f32.xlu0 %v184
    %v186 = vpop.xlane.xlu0 %185
    %v187 = vsel %vm148, %v183, 0.0
    %188 = vadd.xlane.f32.xlu0 %v187
    %v189 = vpop.xlane.xlu0 %188
    %v190 = vmul.f32 %v186, %v177
    %v191 = vmul.f32 %v189, %v177
    %v192 = vadd.f32 %v190, 1e-05
    %v193 = vadd.f32 %v191, 1e-05
    %v194 = vrsqrt.pop %v192
    %v195 = vrsqrt.pop %v193
    %v196 = vmul.f32 %v180, %v194
    %v197 = vmul.f32 %v181, %v195
    %v198 = vld [vmem:[%s4] sm:$0x1]
    %v200 = vlaneseq
    %v201 = vshrl.u32 %v200, 7
    %v202 = vsub.s32 0, %v201
    %v203 = vrot.slane %v198, %v202
    %v205 = vmul.f32 %v196, %v203
    %v206 = vmul.f32 %v197, %v203
    %v207 = vld [vmem:[%s5] sm:$0x1]
    %v209 = vlaneseq
    %v210 = vshrl.u32 %v209, 7
    %v211 = vsub.s32 0, %v210
    %v212 = vrot.slane %v207, %v211
    %v214 = vadd.f32 %v205, %v212
    %v215 = vadd.f32 %v206, %v212
    %v216 = vpack.c.bf16 %v215, %v214
    %v218 = vunpack.c.l.b16 %v216
    %v219 = vunpack.c.h.b16 %v216
    %v220 = vpack.c.b16 %v218, %v218
    %v221 = vpack.c.b16 %v219, %v219
    %vm224 = vcmask 257024
    %225 = vst.msk [vmem:[%s6] sm:$0xf] %vm224, %v220
    %226 = vst.msk [vmem:[%s6 + $0x4] sm:$0xf] %vm224, %v221
  $region33: #{transformer_forward.33} parent=0 // pred_fallthru
    _
  // Predicated region
  $region34: #{transformer_forward.33} parent=0 // pred_check
    _
  $region35: #{transformer_forward.33} parent=0 // pred_check_branch
    %228 = sbr.rel (0) target = $region37
  $region36: #{transformer_forward.33} parent=0 // pred_region
    _
  $region37: #{transformer_forward.33} parent=0 // pred_fallthru
    _
  // Predicated region
  $region38: #{transformer_forward.33} parent=0 // pred_check
    _
  $region39: #{transformer_forward.33} parent=0 // pred_check_branch
    %230 = sbr.rel (0) target = $region41
  $region40: #{transformer_forward.33} parent=0 // pred_region
    _
  $region41: #{transformer_forward.33} parent=0 // pred_fallthru
    _

// kernel: transformer_forward.36
$region0: #{transformer_forward.36}
  #allocation0 [shape = 'u32[]', space=smem, size = 0x4, offset = 0x4, fixed_abs, tag = 'smem constant byte address 0x4 - core index']
  #allocation1 [shape = 'u32[144,128]{1,0:T(1,128)}', space=vmem, size = 0x12000, scoped, tag = 'internal scratch']
  #allocation2 [shape = 'f32[16,32]{1,0:T(8,128)}', space=vmem, size = 0x2000, scoped, tag = 'scratch operand']
  %s0 = inlined_call_operand.vmem [shape: bf16[16,32], index: 0, kind: input, shape index: {}]
  %s1 = inlined_call_operand.vmem [shape: bf16[32,32], index: 1, kind: input, shape index: {}]
  %s2 = inlined_call_operand.vmem [shape: f32[1,32], index: 2, kind: input, shape index: {}]
  %s3 = inlined_call_operand.vmem [shape: bf16[16,32], index: 3, kind: input, shape index: {}]
  %s4 = inlined_call_operand.vmem [shape: f32[1,32], index: 4, kind: input, shape index: {}]
  %s5 = inlined_call_operand.vmem [shape: f32[1,32], index: 5, kind: input, shape index: {}]
  %s6 = inlined_call_operand.vmem [shape: bf16[16,32], index: 6, kind: output, shape index: {}]
  %s7 = sld [smem:[#allocation0]]
  $region42: #{transformer_forward.36} parent=0
    _
  %s9 = ssub.s32 1, %s7
  %s10 = scalar_select 0, %s9, %s7
  // Predicated region
  $region2: #{transformer_forward.36} parent=0 // pred_check
    _
  $region3: #{transformer_forward.36} parent=0 // pred_check_branch
    %12 = sbr.rel (0) target = $region5
  $region4: #{transformer_forward.36} parent=0 // pred_region
    _
  $region5: #{transformer_forward.36} parent=0 // pred_fallthru
    _
  // Predicated region
  $region6: #{transformer_forward.36} parent=0 // pred_check
    _
  $region7: #{transformer_forward.36} parent=0 // pred_check_branch
    %14 = sbr.rel (0) target = $region9
  $region8: #{transformer_forward.36} parent=0 // pred_region
    _
  $region9: #{transformer_forward.36} parent=0 // pred_fallthru
    _
  // Predicated region
  $region10: #{transformer_forward.36} parent=0 // pred_check
    _
  $region11: #{transformer_forward.36} parent=0 // pred_check_branch
    %16 = sbr.rel (0) target = $region13
  $region12: #{transformer_forward.36} parent=0 // pred_region
    _
  $region13: #{transformer_forward.36} parent=0 // pred_fallthru
    _
  // Predicated region
  $region14: #{transformer_forward.36} parent=0 // pred_check
    _
  $region15: #{transformer_forward.36} parent=0 // pred_check_branch
    %18 = sbr.rel (0) target = $region17
  $region16: #{transformer_forward.36} parent=0 // pred_region
    _
  $region17: #{transformer_forward.36} parent=0 // pred_fallthru
    _
  // Predicated region
  $region18: #{transformer_forward.36} parent=0 // pred_check
    _
  $region19: #{transformer_forward.36} parent=0 // pred_check_branch
    %20 = sbr.rel (0) target = $region21
  $region20: #{transformer_forward.36} parent=0 // pred_region
    _
  $region21: #{transformer_forward.36} parent=0 // pred_fallthru
    _
  // Predicated region
  $region22: #{transformer_forward.36} parent=0 // pred_check
    _
  $region23: #{transformer_forward.36} parent=0 // pred_check_branch
    %22 = sbr.rel (0) target = $region25
  $region24: #{transformer_forward.36} parent=0 // pred_region
    _
  $region25: #{transformer_forward.36} parent=0 // pred_fallthru
    _
  %p24 = scmp.eq.s32.totalorder 0, 0
  // Predicated region
  $region26: #{transformer_forward.36} parent=0 // pred_check
    %p25 = pneg %p24
  $region27: #{transformer_forward.36} parent=0 // pred_check_branch
    %27 = sbr.rel (%p25) target = $region29
  $region28: #{transformer_forward.36} parent=0 // pred_region
    %vm28 = vcmask 261120
    %29 = vst.msk [vmem:[#allocation2] sm:$0xff] %vm28, 0.0
    %30 = vst.msk [vmem:[#allocation2 + $0x8] sm:$0xff] %vm28, 0.0
  $region29: #{transformer_forward.36} parent=0 // pred_fallthru
    _
  %v31 = vld [vmem:[#allocation2] sm:$0xff]
  %v32 = vld [vmem:[#allocation2 + $0x8] sm:$0xff]
  %v33 = vld [vmem:[%s0] sm:$0xf]
  %v34 = vld [vmem:[%s0 + $0x4] sm:$0xf]
  %v35 = vld [vmem:[%s1] sm:$0xf]
  %v36 = vld [vmem:[%s1 + $0x4] sm:$0xf]
  %v37 = vld [vmem:[%s1 + $0x8] sm:$0xf]
  %v38 = vld [vmem:[%s1 + $0xc] sm:$0xf]
  %v41 = vunpack.c.l.b16 %v33
  %v42 = vunpack.c.l.b16 %v34
  %v43 = vpack.c.b16 %v42, %v41
  %v48 = vunpack.c.l.b16 %v35
  %v49 = vunpack.c.l.b16 %v36
  %v50 = vunpack.c.l.b16 %v37
  %v51 = vunpack.c.l.b16 %v38
  %v52 = vpack.c.b16 %v49, %v48
  %v53 = vpack.c.b16 %v51, %v50
  %vm56 = vcmask 261120
  %v58 = vsel %vm56, %v43, 0
  %60 = vmatprep.subr.bf16.mxu0 0
  %61 = vmatpush1.bf16.msra.mxu0 %v52
  %62 = vmatprep.subr.bf16.mxu0 0
  %63 = vmatpush1.bf16.msra.mxu0 %v53
  %64 = vmatprep.subr.bf16.mxu0 0
  %65 = vmatpush1.bf16.msra.mxu0 0
  %66 = vmatprep.subr.bf16.mxu0 0
  %67 = vmatpush1.bf16.msra.mxu0 0
  %68 = vmatprep.subr.bf16.mxu0 0
  %69 = vmatpush1.bf16.msra.mxu0 0
  %70 = vmatprep.subr.bf16.mxu0 0
  %71 = vmatpush1.bf16.msra.mxu0 0
  %72 = vmatprep.subr.bf16.mxu0 0
  %73 = vmatpush1.bf16.msra.mxu0 0
  %74 = vmatprep.subr.bf16.mxu0 0
  %75 = vmatpush1.bf16.msra.mxu0 0
  %76 = vmatprep.subr.bf16.mxu0 0
  %77 = vmatpush1.bf16.msra.mxu0 0
  %78 = vmatprep.subr.bf16.mxu0 0
  %79 = vmatpush1.bf16.msra.mxu0 0
  %80 = vmatprep.subr.bf16.mxu0 0
  %81 = vmatpush1.bf16.msra.mxu0 0
  %82 = vmatprep.subr.bf16.mxu0 0
  %83 = vmatpush1.bf16.msra.mxu0 0
  %84 = vmatprep.subr.bf16.mxu0 0
  %85 = vmatpush1.bf16.msra.mxu0 0
  %86 = vmatprep.subr.bf16.mxu0 0
  %87 = vmatpush1.bf16.msra.mxu0 0
  %88 = vmatprep.subr.bf16.mxu0 0
  %89 = vmatpush1.bf16.msra.mxu0 0
  %90 = vmatprep.subr.bf16.mxu0 0
  %91 = vmatpush1.bf16.msra.mxu0 0
  %92 = vmatprep.mubr.bf16.mxu0 0
  %93 = vmatmul.mubr.bf16.gmra.mrb[0].mxu0 %v58
  %v94 = vpop.f32.mrb[0].mxu0
  %v95 = vadd.f32 0.0, %v94
  %v96 = vpop.f32.mrb[0].mxu0
  %v97 = vpop.f32.mrb[0].mxu0
  %v98 = vadd.f32 0.0, %v97
  %v99 = vpop.f32.mrb[0].mxu0
  %100 = vdwg.mxu0
  %v101 = vadd.f32 %v31, %v95
  %v102 = vadd.f32 %v32, %v98
  %103 = vst.msk [vmem:[#allocation2] sm:$0xff] %vm56, %v101
  %104 = vst.msk [vmem:[#allocation2 + $0x8] sm:$0xff] %vm56, %v102
  // Predicated region
  $region30: #{transformer_forward.36} parent=0 // pred_check
    %p105 = pneg %p24
  $region31: #{transformer_forward.36} parent=0 // pred_check_branch
    %107 = sbr.rel (%p105) target = $region33
  $region32: #{transformer_forward.36} parent=0 // pred_region
    %v108 = vld [vmem:[#allocation2] sm:$0xff]
    %v109 = vld [vmem:[#allocation2 + $0x8] sm:$0xff]
    %v110 = vld [vmem:[%s2] sm:$0x1]
    %v112 = vlaneseq
    %v113 = vshrl.u32 %v112, 7
    %v114 = vsub.s32 0, %v113
    %v115 = vrot.slane %v110, %v114
    %v117 = vadd.f32 %v108, %v115
    %v118 = vadd.f32 %v109, %v115
    %v119 = vld [vmem:[%s3] sm:$0xf]
    %v120 = vld [vmem:[%s3 + $0x4] sm:$0xf]
    %v121 = vunpack.c.l.bf16 %v119
    %v122 = vunpack.c.l.bf16 %v120
    %v123 = vadd.f32 %v117, %v121
    %v124 = vadd.f32 %v118, %v122
    %v125 = vsel %vm56, %v123, 0.0
    %126 = vadd.xlane.f32.xlu0 %v125
    %v127 = vpop.xlane.xlu0 %126
    %v128 = vsel %vm56, %v124, 0.0
    %129 = vadd.xlane.f32.xlu0 %v128
    %v130 = vpop.xlane.xlu0 %129
    %v131 = vrcp.pop 32.0
    %v132 = vmul.f32 %v127, %v131
    %v133 = vmul.f32 %v130, %v131
    %v134 = vsub.f32 %v123, %v132
    %v135 = vsub.f32 %v124, %v133
    %v136 = vmul.f32 %v134, %v134
    %v137 = vmul.f32 %v135, %v135
    %v138 = vsel %vm56, %v136, 0.0
    %139 = vadd.xlane.f32.xlu0 %v138
    %v140 = vpop.xlane.xlu0 %139
    %v141 = vsel %vm56, %v137, 0.0
    %142 = vadd.xlane.f32.xlu0 %v141
    %v143 = vpop.xlane.xlu0 %142
    %v144 = vmul.f32 %v140, %v131
    %v145 = vmul.f32 %v143, %v131
    %v146 = vadd.f32 %v144, 1e-05
    %v147 = vadd.f32 %v145, 1e-05
    %v148 = vrsqrt.pop %v146
    %v149 = vrsqrt.pop %v147
    %v150 = vmul.f32 %v134, %v148
    %v151 = vmul.f32 %v135, %v149
    %v152 = vld [vmem:[%s4] sm:$0x1]
    %v154 = vlaneseq
    %v155 = vshrl.u32 %v154, 7
    %v156 = vsub.s32 0, %v155
    %v157 = vrot.slane %v152, %v156
    %v159 = vmul.f32 %v150, %v157
    %v160 = vmul.f32 %v151, %v157
    %v161 = vld [vmem:[%s5] sm:$0x1]
    %v163 = vlaneseq
    %v164 = vshrl.u32 %v163, 7
    %v165 = vsub.s32 0, %v164
    %v166 = vrot.slane %v161, %v165
    %v168 = vadd.f32 %v159, %v166
    %v169 = vadd.f32 %v160, %v166
    %v170 = vpack.c.bf16 %v169, %v168
    %v172 = vunpack.c.l.b16 %v170
    %v173 = vunpack.c.h.b16 %v170
    %v174 = vpack.c.b16 %v172, %v172
    %v175 = vpack.c.b16 %v173, %v173
    %vm178 = vcmask 257024
    %179 = vst.msk [vmem:[%s6] sm:$0xf] %vm178, %v174
    %180 = vst.msk [vmem:[%s6 + $0x4] sm:$0xf] %vm178, %v175
  $region33: #{transformer_forward.36} parent=0 // pred_fallthru
    _
  // Predicated region
  $region34: #{transformer_forward.36} parent=0 // pred_check
    _
  $region35: #{transformer_forward.36} parent=0 // pred_check_branch
    %182 = sbr.rel (0) target = $region37
  $region36: #{transformer_forward.36} parent=0 // pred_region
    _
  $region37: #{transformer_forward.36} parent=0 // pred_fallthru
    _
  // Predicated region
  $region38: #{transformer_forward.36} parent=0 // pred_check
    _
  $region39: #{transformer_forward.36} parent=0 // pred_check_branch
    %184 = sbr.rel (0) target = $region41
  $region40: #{transformer_forward.36} parent=0 // pred_region
    _
  $region41: #{transformer_forward.36} parent=0 // pred_fallthru
    _

// kernel: transformer_forward.43
$region0: #{transformer_forward.43}
  #allocation0 [shape = 'u32[]', space=smem, size = 0x4, offset = 0x4, fixed_abs, tag = 'smem constant byte address 0x4 - core index']
  #allocation1 [shape = 'u32[144,128]{1,0:T(1,128)}', space=vmem, size = 0x12000, scoped, tag = 'internal scratch']
  #allocation2 [shape = 'f32[16,64]{1,0:T(8,128)}', space=vmem, size = 0x2000, scoped, tag = 'scratch operand']
  %s0 = inlined_call_operand.vmem [shape: bf16[16,32], index: 0, kind: input, shape index: {}]
  %s1 = inlined_call_operand.vmem [shape: bf16[32,64], index: 1, kind: input, shape index: {}]
  %s2 = inlined_call_operand.vmem [shape: f32[1,64], index: 2, kind: input, shape index: {}]
  %s3 = inlined_call_operand.vmem [shape: bf16[16,64], index: 3, kind: output, shape index: {}]
  %s4 = sld [smem:[#allocation0]]
  $region30: #{transformer_forward.43} parent=0
    _
  %s6 = ssub.s32 1, %s4
  %s7 = scalar_select 0, %s6, %s4
  // Predicated region
  $region2: #{transformer_forward.43} parent=0 // pred_check
    _
  $region3: #{transformer_forward.43} parent=0 // pred_check_branch
    %9 = sbr.rel (0) target = $region5
  $region4: #{transformer_forward.43} parent=0 // pred_region
    _
  $region5: #{transformer_forward.43} parent=0 // pred_fallthru
    _
  // Predicated region
  $region6: #{transformer_forward.43} parent=0 // pred_check
    _
  $region7: #{transformer_forward.43} parent=0 // pred_check_branch
    %11 = sbr.rel (0) target = $region9
  $region8: #{transformer_forward.43} parent=0 // pred_region
    _
  $region9: #{transformer_forward.43} parent=0 // pred_fallthru
    _
  // Predicated region
  $region10: #{transformer_forward.43} parent=0 // pred_check
    _
  $region11: #{transformer_forward.43} parent=0 // pred_check_branch
    %13 = sbr.rel (0) target = $region13
  $region12: #{transformer_forward.43} parent=0 // pred_region
    _
  $region13: #{transformer_forward.43} parent=0 // pred_fallthru
    _
  %p15 = scmp.eq.s32.totalorder 0, 0
  // Predicated region
  $region14: #{transformer_forward.43} parent=0 // pred_check
    %p16 = pneg %p15
  $region15: #{transformer_forward.43} parent=0 // pred_check_branch
    %18 = sbr.rel (%p16) target = $region17
  $region16: #{transformer_forward.43} parent=0 // pred_region
    %vm19 = vcmask 523264
    %20 = vst.msk [vmem:[#allocation2] sm:$0xff] %vm19, 0.0
    %21 = vst.msk [vmem:[#allocation2 + $0x8] sm:$0xff] %vm19, 0.0
  $region17: #{transformer_forward.43} parent=0 // pred_fallthru
    _
  %v22 = vld [vmem:[#allocation2] sm:$0xff]
  %v23 = vld [vmem:[#allocation2 + $0x8] sm:$0xff]
  %v24 = vld [vmem:[%s0] sm:$0xf]
  %v25 = vld [vmem:[%s0 + $0x4] sm:$0xf]
  %v26 = vld [vmem:[%s1] sm:$0xf]
  %v27 = vld [vmem:[%s1 + $0x4] sm:$0xf]
  %v28 = vld [vmem:[%s1 + $0x8] sm:$0xf]
  %v29 = vld [vmem:[%s1 + $0xc] sm:$0xf]
  %v32 = vunpack.c.l.b16 %v24
  %v33 = vunpack.c.l.b16 %v25
  %v34 = vpack.c.b16 %v33, %v32
  %v39 = vunpack.c.l.b16 %v26
  %v40 = vunpack.c.l.b16 %v27
  %v41 = vunpack.c.l.b16 %v28
  %v42 = vunpack.c.l.b16 %v29
  %v43 = vpack.c.b16 %v40, %v39
  %v44 = vpack.c.b16 %v42, %v41
  %vm47 = vcmask 261120
  %v49 = vsel %vm47, %v34, 0
  %51 = vmatprep.subr.bf16.mxu0 0
  %52 = vmatpush1.bf16.msra.mxu0 %v43
  %53 = vmatprep.subr.bf16.mxu0 0
  %54 = vmatpush1.bf16.msra.mxu0 %v44
  %55 = vmatprep.subr.bf16.mxu0 0
  %56 = vmatpush1.bf16.msra.mxu0 0
  %57 = vmatprep.subr.bf16.mxu0 0
  %58 = vmatpush1.bf16.msra.mxu0 0
  %59 = vmatprep.subr.bf16.mxu0 0
  %60 = vmatpush1.bf16.msra.mxu0 0
  %61 = vmatprep.subr.bf16.mxu0 0
  %62 = vmatpush1.bf16.msra.mxu0 0
  %63 = vmatprep.subr.bf16.mxu0 0
  %64 = vmatpush1.bf16.msra.mxu0 0
  %65 = vmatprep.subr.bf16.mxu0 0
  %66 = vmatpush1.bf16.msra.mxu0 0
  %67 = vmatprep.subr.bf16.mxu0 0
  %68 = vmatpush1.bf16.msra.mxu0 0
  %69 = vmatprep.subr.bf16.mxu0 0
  %70 = vmatpush1.bf16.msra.mxu0 0
  %71 = vmatprep.subr.bf16.mxu0 0
  %72 = vmatpush1.bf16.msra.mxu0 0
  %73 = vmatprep.subr.bf16.mxu0 0
  %74 = vmatpush1.bf16.msra.mxu0 0
  %75 = vmatprep.subr.bf16.mxu0 0
  %76 = vmatpush1.bf16.msra.mxu0 0
  %77 = vmatprep.subr.bf16.mxu0 0
  %78 = vmatpush1.bf16.msra.mxu0 0
  %79 = vmatprep.subr.bf16.mxu0 0
  %80 = vmatpush1.bf16.msra.mxu0 0
  %81 = vmatprep.subr.bf16.mxu0 0
  %82 = vmatpush1.bf16.msra.mxu0 0
  %83 = vmatprep.mubr.bf16.mxu0 0
  %84 = vmatmul.mubr.bf16.gmra.mrb[0].mxu0 %v49
  %v85 = vpop.f32.mrb[0].mxu0
  %v86 = vadd.f32 0.0, %v85
  %v87 = vpop.f32.mrb[0].mxu0
  %v88 = vpop.f32.mrb[0].mxu0
  %v89 = vadd.f32 0.0, %v88
  %v90 = vpop.f32.mrb[0].mxu0
  %91 = vdwg.mxu0
  %v92 = vadd.f32 %v22, %v86
  %v93 = vadd.f32 %v23, %v89
  %vm94 = vcmask 523264
  %95 = vst.msk [vmem:[#allocation2] sm:$0xff] %vm94, %v92
  %96 = vst.msk [vmem:[#allocation2 + $0x8] sm:$0xff] %vm94, %v93
  // Predicated region
  $region18: #{transformer_forward.43} parent=0 // pred_check
    %p97 = pneg %p15
  $region19: #{transformer_forward.43} parent=0 // pred_check_branch
    %99 = sbr.rel (%p97) target = $region21
  $region20: #{transformer_forward.43} parent=0 // pred_region
    %v100 = vld [vmem:[#allocation2] sm:$0xff]
    %v101 = vld [vmem:[#allocation2 + $0x8] sm:$0xff]
    %v102 = vld [vmem:[%s2] sm:$0x1]
    %v104 = vlaneseq
    %v105 = vshrl.u32 %v104, 7
    %v106 = vsub.s32 0, %v105
    %v107 = vrot.slane %v102, %v106
    %v109 = vadd.f32 %v100, %v107
    %v110 = vadd.f32 %v101, %v107
    %v111 = vpack.c.bf16 %v110, %v109
    %v113 = vunpack.c.l.b16 %v111
    %v114 = vunpack.c.h.b16 %v111
    %v115 = vpack.c.b16 %v113, %v113
    %v116 = vpack.c.b16 %v114, %v114
    %vm119 = vcmask 519168
    %120 = vst.msk [vmem:[%s3] sm:$0xf] %vm119, %v115
    %121 = vst.msk [vmem:[%s3 + $0x4] sm:$0xf] %vm119, %v116
  $region21: #{transformer_forward.43} parent=0 // pred_fallthru
    _
  // Predicated region
  $region22: #{transformer_forward.43} parent=0 // pred_check
    _
  $region23: #{transformer_forward.43} parent=0 // pred_check_branch
    %123 = sbr.rel (0) target = $region25
  $region24: #{transformer_forward.43} parent=0 // pred_region
    _
  $region25: #{transformer_forward.43} parent=0 // pred_fallthru
    _
  // Predicated region
  $region26: #{transformer_forward.43} parent=0 // pred_check
    _
  $region27: #{transformer_forward.43} parent=0 // pred_check_branch
    %125 = sbr.rel (0) target = $region29
  $region28: #{transformer_forward.43} parent=0 // pred_region
    _
  $region29: #{transformer_forward.43} parent=0 // pred_fallthru
    _

// kernel: transformer_forward.57
$region0: #{transformer_forward.57}
  #allocation0 [shape = 'u32[]', space=smem, size = 0x4, offset = 0x4, fixed_abs, tag = 'smem constant byte address 0x4 - core index']
  #allocation1 [shape = 'u32[144,128]{1,0:T(1,128)}', space=vmem, size = 0x12000, scoped, tag = 'internal scratch']
  #allocation2 [shape = 'f32[16,128]{1,0:T(8,128)}', space=vmem, size = 0x2000, scoped, tag = 'scratch operand']
  %s0 = inlined_call_operand.vmem [shape: bf16[16,32], index: 0, kind: input, shape index: {}]
  %s1 = inlined_call_operand.vmem [shape: bf16[32,128], index: 1, kind: input, shape index: {}]
  %s2 = inlined_call_operand.vmem [shape: f32[1,128], index: 2, kind: input, shape index: {}]
  %s3 = inlined_call_operand.hbm [shape: f32[16,128], index: 3, kind: output, shape index: {}]
  %s4 = sld [smem:[#allocation0]]
  $region30: #{transformer_forward.57} parent=0
    _
  %s6 = ssub.s32 1, %s4
  %s7 = scalar_select 0, %s6, %s4
  $region1: #{transformer_forward.57} parent=0
    #allocation3 [shape = 'u8[8192]{0}', space=vmem, size = 0x2000, scoped, tag = 'output window, operand 0, single buffered']
    #allocation4 [shape = 's32[1]{0}', space=sflag, size = 0x4, scoped, tag = 'scoped memory for transformer_forward.57']
    %8 = vsyncpa [#allocation4], 0
    // Predicated region
    $region2: #{transformer_forward.57} parent=1 // pred_check
      _
    $region3: #{transformer_forward.57} parent=1 // pred_check_branch
      %10 = sbr.rel (0) target = $region5
    $region4: #{transformer_forward.57} parent=1 // pred_region
      _
    $region5: #{transformer_forward.57} parent=1 // pred_fallthru
      _
    // Predicated region
    $region6: #{transformer_forward.57} parent=1 // pred_check
      _
    $region7: #{transformer_forward.57} parent=1 // pred_check_branch
      %12 = sbr.rel (0) target = $region9
    $region8: #{transformer_forward.57} parent=1 // pred_region
      _
    $region9: #{transformer_forward.57} parent=1 // pred_fallthru
      _
    // Predicated region
    $region10: #{transformer_forward.57} parent=1 // pred_check
      _
    $region11: #{transformer_forward.57} parent=1 // pred_check_branch
      %14 = sbr.rel (0) target = $region13
    $region12: #{transformer_forward.57} parent=1 // pred_region
      _
    $region13: #{transformer_forward.57} parent=1 // pred_fallthru
      _
    %p16 = scmp.eq.s32.totalorder 0, 0
    // Predicated region
    $region14: #{transformer_forward.57} parent=1 // pred_check
      %p17 = pneg %p16
    $region15: #{transformer_forward.57} parent=1 // pred_check_branch
      %19 = sbr.rel (%p17) target = $region17
    $region16: #{transformer_forward.57} parent=1 // pred_region
      %20 = vst [vmem:[#allocation2] sm:$0xff] 0.0
      %21 = vst [vmem:[#allocation2 + $0x8] sm:$0xff] 0.0
    $region17: #{transformer_forward.57} parent=1 // pred_fallthru
      _
    %v22 = vld [vmem:[#allocation2] sm:$0xff]
    %v23 = vld [vmem:[#allocation2 + $0x8] sm:$0xff]
    %v24 = vld [vmem:[%s0] sm:$0xf]
    %v25 = vld [vmem:[%s0 + $0x4] sm:$0xf]
    %v26 = vld [vmem:[%s1] sm:$0xf]
    %v27 = vld [vmem:[%s1 + $0x4] sm:$0xf]
    %v28 = vld [vmem:[%s1 + $0x8] sm:$0xf]
    %v29 = vld [vmem:[%s1 + $0xc] sm:$0xf]
    %v32 = vunpack.c.l.b16 %v24
    %v33 = vunpack.c.l.b16 %v25
    %v34 = vpack.c.b16 %v33, %v32
    %v39 = vunpack.c.l.b16 %v26
    %v40 = vunpack.c.l.b16 %v27
    %v41 = vunpack.c.l.b16 %v28
    %v42 = vunpack.c.l.b16 %v29
    %v43 = vpack.c.b16 %v40, %v39
    %v44 = vpack.c.b16 %v42, %v41
    %vm47 = vcmask 261120
    %v49 = vsel %vm47, %v34, 0
    %51 = vmatprep.subr.bf16.mxu0 0
    %52 = vmatpush1.bf16.msra.mxu0 %v43
    %53 = vmatprep.subr.bf16.mxu0 0
    %54 = vmatpush1.bf16.msra.mxu0 %v44
    %55 = vmatprep.subr.bf16.mxu0 0
    %56 = vmatpush1.bf16.msra.mxu0 0
    %57 = vmatprep.subr.bf16.mxu0 0
    %58 = vmatpush1.bf16.msra.mxu0 0
    %59 = vmatprep.subr.bf16.mxu0 0
    %60 = vmatpush1.bf16.msra.mxu0 0
    %61 = vmatprep.subr.bf16.mxu0 0
    %62 = vmatpush1.bf16.msra.mxu0 0
    %63 = vmatprep.subr.bf16.mxu0 0
    %64 = vmatpush1.bf16.msra.mxu0 0
    %65 = vmatprep.subr.bf16.mxu0 0
    %66 = vmatpush1.bf16.msra.mxu0 0
    %67 = vmatprep.subr.bf16.mxu0 0
    %68 = vmatpush1.bf16.msra.mxu0 0
    %69 = vmatprep.subr.bf16.mxu0 0
    %70 = vmatpush1.bf16.msra.mxu0 0
    %71 = vmatprep.subr.bf16.mxu0 0
    %72 = vmatpush1.bf16.msra.mxu0 0
    %73 = vmatprep.subr.bf16.mxu0 0
    %74 = vmatpush1.bf16.msra.mxu0 0
    %75 = vmatprep.subr.bf16.mxu0 0
    %76 = vmatpush1.bf16.msra.mxu0 0
    %77 = vmatprep.subr.bf16.mxu0 0
    %78 = vmatpush1.bf16.msra.mxu0 0
    %79 = vmatprep.subr.bf16.mxu0 0
    %80 = vmatpush1.bf16.msra.mxu0 0
    %81 = vmatprep.subr.bf16.mxu0 0
    %82 = vmatpush1.bf16.msra.mxu0 0
    %83 = vmatprep.mubr.bf16.mxu0 0
    %84 = vmatmul.mubr.bf16.gmra.mrb[0].mxu0 %v49
    %v85 = vpop.f32.mrb[0].mxu0
    %v86 = vadd.f32 0.0, %v85
    %v87 = vpop.f32.mrb[0].mxu0
    %v88 = vpop.f32.mrb[0].mxu0
    %v89 = vadd.f32 0.0, %v88
    %v90 = vpop.f32.mrb[0].mxu0
    %91 = vdwg.mxu0
    %v92 = vadd.f32 %v22, %v86
    %v93 = vadd.f32 %v23, %v89
    %94 = vst [vmem:[#allocation2] sm:$0xff] %v92
    %95 = vst [vmem:[#allocation2 + $0x8] sm:$0xff] %v93
    // Predicated region
    $region18: #{transformer_forward.57} parent=1 // pred_check
      %p96 = pneg %p16
    $region19: #{transformer_forward.57} parent=1 // pred_check_branch
      %98 = sbr.rel (%p96) target = $region21
    $region20: #{transformer_forward.57} parent=1 // pred_region
      %v99 = vld [vmem:[#allocation2] sm:$0xff]
      %v100 = vld [vmem:[#allocation2 + $0x8] sm:$0xff]
      %v101 = vld [vmem:[%s2] sm:$0x1]
      %v103 = vlaneseq
      %v104 = vshrl.u32 %v103, 7
      %v105 = vsub.s32 0, %v104
      %v106 = vrot.slane %v101, %v105
      %v108 = vadd.f32 %v99, %v106
      %v109 = vadd.f32 %v100, %v106
      %110 = vst [vmem:[#allocation3] sm:$0xff] %v108
      %111 = vst [vmem:[#allocation3 + $0x8] sm:$0xff] %v109
    $region21: #{transformer_forward.57} parent=1 // pred_fallthru
      _
    // Predicated region
    $region22: #{transformer_forward.57} parent=1 // pred_check
      _
    $region23: #{transformer_forward.57} parent=1 // pred_check_branch
      %113 = sbr.rel (0) target = $region25
    $region24: #{transformer_forward.57} parent=1 // pred_region
      %s115 = ssub.s32 256, 256
      %116 = vsyncadd [#allocation4], %s115
      %s117 = sshll.u32 [#allocation3], 4
      %s118 = int_to_ptr.vmem [resolvable:$true] %s117
      %123 = dma.vmem_to_hbm [thread:$0]  %s118, 256, %s3, [#allocation4], 128, 128, 8
    $region25: #{transformer_forward.57} parent=1 // pred_fallthru
      _
    // Predicated region
    $region26: #{transformer_forward.57} parent=1 // pred_check
      _
    $region27: #{transformer_forward.57} parent=1 // pred_check_branch
      %125 = sbr.rel (0) target = $region29
    $region28: #{transformer_forward.57} parent=1 // pred_region
      %126 = dma.done [#allocation4], 256
    $region29: #{transformer_forward.57} parent=1 // pred_fallthru
      _
    %127 = vsyncpa [#allocation4], 1

</llo_original>
